<compile_context>
chip_gen: v7x
topology: tpu7x:2x2x1
jax: 0.10.0
libtpu: 0.0.40
codegen_flags: <defaults>
</compile_context>

<pallas_src>
import functools
import math

import jax
import jax.numpy as jnp
from jax.experimental import pallas as pl
from jax.experimental.pallas import tpu as pltpu


# ----------------------------------------------------------------------------
# Fused Block35 kernel (one grid step per batch chunk, rows ordered (y, b, x))
# ----------------------------------------------------------------------------
def _block35_kernel(x_ref, wh_ref, bh_ref, wm_ref, bm_ref, w2b_ref, b2b_ref,
                    wf_ref, bf_ref, o_ref, ph2_ref, ph3_ref, *, scale):
    H, nb, W, C = x_ref.shape          # (8, batch chunk, 8, 320)
    M = H * nb * W                     # matmul rows, x fastest then b then y
    nbW = nb * W
    f32 = jnp.float32
    bf16 = jnp.bfloat16

    # x position of every row (x is the fastest-varying index)
    xpos = jax.lax.broadcasted_iota(jnp.int32, (M, 1), 0) % W
    at_x0 = xpos == 0
    at_xL = xpos == (W - 1)

    def shift_down(a):                 # row r <- row r-1   (row 0 <- 0)
        z = jnp.zeros((1, a.shape[1]), a.dtype)
        return jnp.concatenate([z, a[:M - 1, :]], axis=0)

    def shift_up(a):                   # row r <- row r+1   (row M-1 <- 0)
        z = jnp.zeros((1, a.shape[1]), a.dtype)
        return jnp.concatenate([a[1:, :], z], axis=0)

    def fill_im2col(ph_ref, v_bf, c):
        """Fill a ((H+2)*nbW, 3*c) bf16 im2col-along-x buffer from (M, c) rows."""
        zero = jnp.zeros((), v_bf.dtype)
        zrow = jnp.zeros((nbW, ph_ref.shape[1]), ph_ref.dtype)
        # halo rows (y = -1 and y = H); interior rows are fully rewritten below,
        # so the scratch carries no state across grid steps (megacore-safe).
        ph_ref[pl.ds(0, nbW), :] = zrow
        ph_ref[pl.ds(nbW + M, nbW), :] = zrow
        # lane blocks per row: [in(x-1) | in(x) | in(x+1)], x-edges masked to 0
        ph_ref[pl.ds(nbW, M), c:2 * c] = v_bf
        ph_ref[pl.ds(nbW, M), 0:c] = jnp.where(at_x0, zero, shift_down(v_bf))
        ph_ref[pl.ds(nbW, M), 2 * c:3 * c] = jnp.where(at_xL, zero, shift_up(v_bf))

    xb = x_ref[...].reshape(M, C).astype(bf16)

    # ---- stage 1: the three branch-head 1x1 convs merged into ONE matmul ----
    # output columns: [y1 (32) | y2 (32) | x0 (32)]
    h = jnp.dot(xb, wh_ref[...], preferred_element_type=f32)
    h = jnp.maximum(h + bh_ref[...], 0.0)                    # (M, 96) f32
    x0 = h[:, 64:96]                                         # branch0 output
    hy = h[:, 0:64].astype(bf16)                             # [y1 | y2] tap input

    # ---- stage 2: branch1 3x3 (32->32) + branch2 first 3x3 (32->48) merged --
    fill_im2col(ph2_ref, hy, 64)
    acc = (jnp.dot(ph2_ref[pl.ds(0, M), :], wm_ref[0], preferred_element_type=f32)
           + jnp.dot(ph2_ref[pl.ds(nbW, M), :], wm_ref[1], preferred_element_type=f32)
           + jnp.dot(ph2_ref[pl.ds(2 * nbW, M), :], wm_ref[2], preferred_element_type=f32))
    m = jnp.maximum(acc + bm_ref[...], 0.0)                  # (M, 80) = [x1 | z2]
    x1 = m[:, 0:32]
    z2 = m[:, 32:80].astype(bf16)

    # ---- stage 3: branch2 second 3x3 (48 -> 64) ------------------------------
    fill_im2col(ph3_ref, z2, 48)
    acc2 = (jnp.dot(ph3_ref[pl.ds(0, M), :], w2b_ref[0], preferred_element_type=f32)
            + jnp.dot(ph3_ref[pl.ds(nbW, M), :], w2b_ref[1], preferred_element_type=f32)
            + jnp.dot(ph3_ref[pl.ds(2 * nbW, M), :], w2b_ref[2], preferred_element_type=f32))
    x2 = jnp.maximum(acc2 + b2b_ref[...], 0.0)               # (M, 64)

    # ---- stage 4: concat folded into ONE compact K=128 matmul, then
    #               *scale + residual, ReLU ------------------------------------
    cat = jnp.concatenate([x0, x1, x2], axis=1).astype(bf16)  # (M, 128)
    y = jnp.dot(cat, wf_ref[...], preferred_element_type=f32) + bf_ref[...]
    out = jnp.maximum(y * scale + x_ref[...].reshape(M, C), 0.0)
    o_ref[...] = out.reshape(H, nb, W, C).astype(o_ref.dtype)


# ----------------------------------------------------------------------------
# Parameter construction (deterministic) with BatchNorm folded into the conv
# ----------------------------------------------------------------------------
def make_basic_conv_params(key, cin, cout, k):
    """BasicConv2d = Conv(no bias) + BN(eps=1e-3) + ReLU, BN folded in."""
    k1, k2, k3, k4, k5 = jax.random.split(key, 5)
    w = jax.random.normal(k1, (k, k, cin, cout), jnp.float32) * (
        1.0 / math.sqrt(cin * k * k))
    gamma = 1.0 + 0.1 * jax.random.normal(k2, (cout,), jnp.float32)
    beta = 0.1 * jax.random.normal(k3, (cout,), jnp.float32)
    mean = 0.1 * jax.random.normal(k4, (cout,), jnp.float32)
    var = 0.5 + jax.random.uniform(k5, (cout,), jnp.float32)
    eps = 1e-3
    s = gamma / jnp.sqrt(var + eps)
    return w * s[None, None, None, :], beta - mean * s


def make_block35_params(key):
    keys = jax.random.split(key, 8)
    params = {}
    params["b0"] = make_basic_conv_params(keys[0], 320, 32, 1)
    params["b1_0"] = make_basic_conv_params(keys[1], 320, 32, 1)
    params["b1_1"] = make_basic_conv_params(keys[2], 32, 32, 3)
    params["b2_0"] = make_basic_conv_params(keys[3], 320, 32, 1)
    params["b2_1"] = make_basic_conv_params(keys[4], 32, 48, 3)
    params["b2_2"] = make_basic_conv_params(keys[5], 48, 64, 3)
    wf = jax.random.normal(keys[6], (1, 1, 128, 320), jnp.float32) * (
        1.0 / math.sqrt(128))
    bf = 0.05 * jax.random.normal(keys[7], (320,), jnp.float32)
    params["final"] = (wf, bf)
    return params


# ----------------------------------------------------------------------------
# Weight preparation for the fused kernel (merges, im2col weights, bf16 cast)
# ----------------------------------------------------------------------------
def _prepare_fused_params(params):
    w0, b0 = params["b0"]        # (1,1,320,32)
    w10, b10 = params["b1_0"]    # (1,1,320,32)
    w11, b11 = params["b1_1"]    # (3,3,32,32)
    w20, b20 = params["b2_0"]    # (1,1,320,32)
    w21, b21 = params["b2_1"]    # (3,3,32,48)
    w22, b22 = params["b2_2"]    # (3,3,48,64)
    wf, bf = params["final"]     # (1,1,128,320), (320,)

    # stage 1: merged 1x1 heads -> (320, 96); columns [y1 | y2 | x0]
    wh = jnp.concatenate([w10[0, 0], w20[0, 0], w0[0, 0]], axis=1)
    bh = jnp.concatenate([b10, b20, b0])[None, :]                     # (1, 96)

    # stage 2: per-dy im2col weights (192, 80)
    #   rows: dx block (64 each) x [y1 (32) | y2 (32)]; cols: [x1 (32) | z2 (48)]
    wm = jnp.zeros((3, 192, 80), jnp.float32)
    for dx in range(3):
        wm = wm.at[:, dx * 64 + 0:dx * 64 + 32, 0:32].set(w11[:, dx])
        wm = wm.at[:, dx * 64 + 32:dx * 64 + 64, 32:80].set(w21[:, dx])
    bm = jnp.concatenate([b11, b21])[None, :]                         # (1, 80)

    # stage 3: per-dy im2col weights (144, 64); rows: dx block (48 each) of z2
    w2b = jnp.zeros((3, 144, 64), jnp.float32)
    for dx in range(3):
        w2b = w2b.at[:, dx * 48:(dx + 1) * 48, :].set(w22[:, dx])
    b2b = b22[None, :]                                                # (1, 64)

    cast = lambda a: a.astype(jnp.bfloat16)
    return dict(wh=cast(wh), bh=bh, wm=cast(wm), bm=bm, w2b=cast(w2b), b2b=b2b,
                wf=cast(wf[0, 0]), bf=bf[None, :])


def _pick_batch_block(n, hw, target_rows=1024):
    """Largest divisor of n with nb*hw <= target_rows, preferring >=2 grid steps.

    NOTE: a prime batch size falls back to nb=1 (perf cliff, not a bug).
    """
    cap = max(target_rows // hw, 1)
    best = 1
    for d in range(1, n + 1):
        if n % d == 0 and d <= cap:
            best = d
    if n // best < 2:  # keep >= 2 grid steps so ("parallel",) helps v7x megacore
        for d in range(best - 1, 0, -1):
            if n % d == 0 and n // d >= 2:
                return d
    return best


# ----------------------------------------------------------------------------
# Block35 forward — kernel-native (H, N, W, C) layout (no HBM transposes)
# ----------------------------------------------------------------------------
def block35_forward_native(x_hnwc, params, scale=0.17):
    fused = _prepare_fused_params(params)
    H, N, W, C = x_hnwc.shape
    assert C == 320, "Block35 expects 320 input channels"
    nb = _pick_batch_block(N, H * W)
    grid = (N // nb,)
    nrows = (H + 2) * nb * W

    def const_spec(arr):
        nd = arr.ndim
        return pl.BlockSpec(arr.shape, lambda i, nd=nd: (0,) * nd)

    itemsize = jnp.dtype(x_hnwc.dtype).itemsize
    flops = 2 * N * H * W * (320 * 96 + 3 * 192 * 80 + 3 * 144 * 64 + 128 * 320)
    wbytes = sum(int(a.size) * jnp.dtype(a.dtype).itemsize for a in fused.values())
    cost = pl.CostEstimate(flops=flops, transcendentals=0,
                           bytes_accessed=2 * x_hnwc.size * itemsize + wbytes)

    kernel = functools.partial(_block35_kernel, scale=scale)
    return pl.pallas_call(
        kernel,
        out_shape=jax.ShapeDtypeStruct((H, N, W, C), x_hnwc.dtype),
        grid=grid,
        in_specs=[
            pl.BlockSpec((H, nb, W, C), lambda i: (0, i, 0, 0)),
            const_spec(fused["wh"]), const_spec(fused["bh"]),
            const_spec(fused["wm"]), const_spec(fused["bm"]),
            const_spec(fused["w2b"]), const_spec(fused["b2b"]),
            const_spec(fused["wf"]), const_spec(fused["bf"]),
        ],
        out_specs=pl.BlockSpec((H, nb, W, C), lambda i: (0, i, 0, 0)),
        scratch_shapes=[
            pltpu.VMEM((nrows, 192), jnp.bfloat16),   # im2col of [y1|y2]
            pltpu.VMEM((nrows, 144), jnp.bfloat16),   # im2col of z2
        ],
        compiler_params=pltpu.CompilerParams(dimension_semantics=("parallel",)),
        cost_estimate=cost,
    )(x_hnwc, fused["wh"], fused["bh"], fused["wm"], fused["bm"],
      fused["w2b"], fused["b2b"], fused["wf"], fused["bf"])


def block35_forward(x_nchw, params, scale=0.17):
    """Spec-parity NCHW interface (one layout transpose each way at the jit level).

    When chaining many Block35s, keep activations in (H, N, W, C) and call
    block35_forward_native directly to avoid the HBM transposes entirely.
    """
    x = jnp.transpose(x_nchw, (2, 0, 3, 1))          # NCHW -> (H, N, W, C)
    out = block35_forward_native(x, params, scale)
    return jnp.transpose(out, (1, 3, 0, 2))          # (H, N, W, C) -> NCHW


# ----------------------------------------------------------------------------
# Pure-JAX f32 reference (sanity check)
# ----------------------------------------------------------------------------
def _conv_ref(x, w, b, padding, relu=True):
    y = jax.lax.conv_general_dilated(
        x, w, window_strides=(1, 1),
        padding=[(padding, padding), (padding, padding)],
        dimension_numbers=("NHWC", "HWIO", "NHWC"))
    y = y + b[None, None, None, :]
    return jnp.maximum(y, 0.0) if relu else y


def block35_ref(x_nchw, params, scale=0.17):
    x = jnp.transpose(x_nchw, (0, 2, 3, 1))
    w, b = params["b0"]; x0 = _conv_ref(x, w, b, 0)
    w, b = params["b1_0"]; x1 = _conv_ref(x, w, b, 0)
    w, b = params["b1_1"]; x1 = _conv_ref(x1, w, b, 1)
    w, b = params["b2_0"]; x2 = _conv_ref(x, w, b, 0)
    w, b = params["b2_1"]; x2 = _conv_ref(x2, w, b, 1)
    w, b = params["b2_2"]; x2 = _conv_ref(x2, w, b, 1)
    cat = jnp.concatenate([x0, x1, x2], axis=-1)
    wf, bf = params["final"]
    y = _conv_ref(cat, wf, bf, 0, relu=False)
    out = jnp.maximum(y * scale + x, 0.0)
    return jnp.transpose(out, (0, 3, 1, 2))


if __name__ == "__main__":
    key = jax.random.PRNGKey(0)
    k_x, k_p = jax.random.split(key)

    # Channel count (320) is fixed by the module; keep batch/spatial small.
    N, C, H, W = 4, 320, 8, 8
    x = jax.random.normal(k_x, (N, C, H, W), jnp.float32)
    params = make_block35_params(k_p)

    fwd = jax.jit(lambda v: block35_forward(v, params, scale=0.17))
    out = jax.block_until_ready(fwd(x))

    ref = block35_ref(x, params, scale=0.17)
    max_err = float(jnp.max(jnp.abs(out - ref)))
    assert out.shape == (N, C, H, W)
    assert max_err < 5e-2, f"mismatch vs reference: {max_err}"

    print("KERNEL_OK")
</pallas_src>

<mosaic_0001>
module attributes {stable_mosaic.version = 11 : i64} {
  func.func @_block35_kernel(%arg0: i32, %arg1: memref<8x2x8x320xf32, #tpu.memory_space<vmem>>, %arg2: memref<320x96xbf16, #tpu.memory_space<vmem>>, %arg3: memref<1x96xf32, #tpu.memory_space<vmem>>, %arg4: memref<3x192x80xbf16, #tpu.memory_space<vmem>>, %arg5: memref<1x80xf32, #tpu.memory_space<vmem>>, %arg6: memref<3x144x64xbf16, #tpu.memory_space<vmem>>, %arg7: memref<1x64xf32, #tpu.memory_space<vmem>>, %arg8: memref<128x320xbf16, #tpu.memory_space<vmem>>, %arg9: memref<1x320xf32, #tpu.memory_space<vmem>>, %arg10: memref<8x2x8x320xf32, #tpu.memory_space<vmem>>, %arg11: memref<160x192xbf16, #tpu.memory_space<vmem>>, %arg12: memref<160x144xbf16, #tpu.memory_space<vmem>>) attributes {dimension_semantics = [#tpu.dimension_semantics<parallel>], iteration_bounds = array<i64: 2>, scalar_prefetch = 0 : i64, scratch_operands = 2 : i64, tpu.core_type = #tpu.core_type<tc>, window_params = [{transform_indices = @transform_0, window_bounds = array<i64: 8, 2, 8, 320>}, {pipeline_mode = #tpu.pipeline_mode<synchronous>, transform_indices = @transform_1, window_bounds = array<i64: 320, 96>}, {pipeline_mode = #tpu.pipeline_mode<synchronous>, transform_indices = @transform_2, window_bounds = array<i64: 1, 96>}, {pipeline_mode = #tpu.pipeline_mode<synchronous>, transform_indices = @transform_3, window_bounds = array<i64: 3, 192, 80>}, {pipeline_mode = #tpu.pipeline_mode<synchronous>, transform_indices = @transform_4, window_bounds = array<i64: 1, 80>}, {pipeline_mode = #tpu.pipeline_mode<synchronous>, transform_indices = @transform_5, window_bounds = array<i64: 3, 144, 64>}, {pipeline_mode = #tpu.pipeline_mode<synchronous>, transform_indices = @transform_6, window_bounds = array<i64: 1, 64>}, {pipeline_mode = #tpu.pipeline_mode<synchronous>, transform_indices = @transform_7, window_bounds = array<i64: 128, 320>}, {pipeline_mode = #tpu.pipeline_mode<synchronous>, transform_indices = @transform_8, window_bounds = array<i64: 1, 320>}, {transform_indices = @transform_9, window_bounds = array<i64: 8, 2, 8, 320>}]} {
    %0 = tpu.iota {dimensions = array<i32: 0>} : vector<128x1xi32>
    %c8_i32 = arith.constant 8 : i32
    %c0_i32 = arith.constant 0 : i32
    %1 = arith.cmpi eq, %c8_i32, %c0_i32 : i32
    %c1_i32 = arith.constant 1 : i32
    %2 = arith.select %1, %c1_i32, %c8_i32 : i32
    %3 = vector.broadcast %2 : i32 to vector<128x1xi32>
    %4 = arith.remsi %0, %3 : vector<128x1xi32>
    %c0_i32_0 = arith.constant 0 : i32
    %5 = vector.broadcast %c0_i32_0 : i32 to vector<128x1xi32>
    %6 = arith.cmpi ne, %4, %5 : vector<128x1xi32>
    %c0_i32_1 = arith.constant 0 : i32
    %7 = vector.broadcast %c0_i32_1 : i32 to vector<128x1xi32>
    %8 = arith.cmpi slt, %4, %7 : vector<128x1xi32>
    %c0_i32_2 = arith.constant 0 : i32
    %9 = arith.cmpi slt, %2, %c0_i32_2 : i32
    %10 = vector.broadcast %9 : i1 to vector<128x1xi1>
    %11 = vector.broadcast %10 : vector<128x1xi1> to vector<128x1xi1>
    %12 = arith.xori %8, %11 : vector<128x1xi1>
    %13 = arith.andi %12, %6 : vector<128x1xi1>
    %14 = vector.broadcast %2 : i32 to vector<128x1xi32>
    %15 = arith.addi %4, %14 : vector<128x1xi32>
    %16 = arith.select %13, %15, %4 : vector<128x1xi1>, vector<128x1xi32>
    %c0_i32_3 = arith.constant 0 : i32
    %17 = vector.broadcast %c0_i32_3 : i32 to vector<128x1xi32>
    %18 = arith.cmpi eq, %16, %17 : vector<128x1xi32>
    %c7_i32 = arith.constant 7 : i32
    %19 = vector.broadcast %c7_i32 : i32 to vector<128x1xi32>
    %20 = arith.cmpi eq, %16, %19 : vector<128x1xi32>
    %c0 = arith.constant 0 : index
    %c0_4 = arith.constant 0 : index
    %c0_5 = arith.constant 0 : index
    %c0_6 = arith.constant 0 : index
    %21 = vector.load %arg1[%c0, %c0_4, %c0_5, %c0_6] : memref<8x2x8x320xf32, #tpu.memory_space<vmem>>, vector<8x2x8x320xf32>
    %22 = vector.shape_cast %21 : vector<8x2x8x320xf32> to vector<128x320xf32>
    %23 = arith.truncf %22 : vector<128x320xf32> to vector<128x320xbf16>
    %c0_7 = arith.constant 0 : index
    %c0_8 = arith.constant 0 : index
    %24 = vector.load %arg2[%c0_7, %c0_8] : memref<320x96xbf16, #tpu.memory_space<vmem>>, vector<320x96xbf16>
    %cst = arith.constant dense<0.000000e+00> : vector<128x96xf32>
    %25 = tpu.matmul %23, %24, %cst {dimension_numbers = #tpu.dot_dimension_numbers<[1], [0], [0], [1], [0, 0, 1, 1], [], []>} : vector<128x320xbf16>, vector<320x96xbf16>, vector<128x96xf32> -> vector<128x96xf32>
    %c0_9 = arith.constant 0 : index
    %c0_10 = arith.constant 0 : index
    %26 = vector.load %arg3[%c0_9, %c0_10] : memref<1x96xf32, #tpu.memory_space<vmem>>, vector<1x96xf32>
    %27 = vector.broadcast %26 : vector<1x96xf32> to vector<128x96xf32>
    %28 = arith.addf %25, %27 : vector<128x96xf32>
    %cst_11 = arith.constant 0.000000e+00 : f32
    %29 = vector.broadcast %cst_11 : f32 to vector<128x96xf32>
    %30 = arith.maximumf %28, %29 : vector<128x96xf32>
    %31 = vector.extract_strided_slice %30 {offsets = [0, 64], sizes = [128, 32], strides = [1, 1]} : vector<128x96xf32> to vector<128x32xf32>
    %32 = vector.extract_strided_slice %30 {offsets = [0, 0], sizes = [128, 64], strides = [1, 1]} : vector<128x96xf32> to vector<128x64xf32>
    %33 = arith.truncf %32 : vector<128x64xf32> to vector<128x64xbf16>
    %cst_12 = arith.constant 0.000000e+00 : bf16
    %34 = vector.broadcast %cst_12 : bf16 to vector<16x192xbf16>
    %c0_13 = arith.constant 0 : index
    %c0_14 = arith.constant 0 : index
    %35 = vector.load %arg11[%c0_13, %c0_14] : memref<160x192xbf16, #tpu.memory_space<vmem>>, vector<16x192xbf16>
    tpu.vector_store %arg11[%c0_13, %c0_14], %34 {strides = array<i32>} : memref<160x192xbf16, #tpu.memory_space<vmem>>, vector<16x192xbf16>,
    %c144 = arith.constant 144 : index
    %c0_15 = arith.constant 0 : index
    %36 = vector.load %arg11[%c144, %c0_15] : memref<160x192xbf16, #tpu.memory_space<vmem>>, vector<16x192xbf16>
    tpu.vector_store %arg11[%c144, %c0_15], %34 {strides = array<i32>} : memref<160x192xbf16, #tpu.memory_space<vmem>>, vector<16x192xbf16>,
    %c16 = arith.constant 16 : index
    %c64 = arith.constant 64 : index
    %37 = vector.load %arg11[%c16, %c64] : memref<160x192xbf16, #tpu.memory_space<vmem>>, vector<128x64xbf16>
    tpu.vector_store %arg11[%c16, %c64], %33 {strides = array<i32>} : memref<160x192xbf16, #tpu.memory_space<vmem>>, vector<128x64xbf16>,
    %cst_16 = arith.constant 0.000000e+00 : bf16
    %38 = vector.broadcast %cst_16 : bf16 to vector<1x64xbf16>
    %39 = vector.extract_strided_slice %33 {offsets = [0, 0], sizes = [127, 64], strides = [1, 1]} : vector<128x64xbf16> to vector<127x64xbf16>
    %40 = tpu.concatenate %38, %39 in 0 : vector<1x64xbf16>, vector<127x64xbf16> -> vector<128x64xbf16>
    %cst_17 = arith.constant 0.000000e+00 : bf16
    %41 = vector.shape_cast %18 : vector<128x1xi1> to vector<128x1xi1>
    %42 = vector.broadcast %41 : vector<128x1xi1> to vector<128x64xi1>
    %43 = vector.broadcast %cst_17 : bf16 to vector<128x64xbf16>
    %44 = arith.select %42, %43, %40 : vector<128x64xi1>, vector<128x64xbf16>
    %c16_18 = arith.constant 16 : index
    %c0_19 = arith.constant 0 : index
    %45 = vector.load %arg11[%c16_18, %c0_19] : memref<160x192xbf16, #tpu.memory_space<vmem>>, vector<128x64xbf16>
    tpu.vector_store %arg11[%c16_18, %c0_19], %44 {strides = array<i32>} : memref<160x192xbf16, #tpu.memory_space<vmem>>, vector<128x64xbf16>,
    %cst_20 = arith.constant 0.000000e+00 : bf16
    %46 = vector.broadcast %cst_20 : bf16 to vector<1x64xbf16>
    %47 = vector.extract_strided_slice %33 {offsets = [1, 0], sizes = [127, 64], strides = [1, 1]} : vector<128x64xbf16> to vector<127x64xbf16>
    %48 = tpu.concatenate %47, %46 in 0 : vector<127x64xbf16>, vector<1x64xbf16> -> vector<128x64xbf16>
    %cst_21 = arith.constant 0.000000e+00 : bf16
    %49 = vector.shape_cast %20 : vector<128x1xi1> to vector<128x1xi1>
    %50 = vector.broadcast %49 : vector<128x1xi1> to vector<128x64xi1>
    %51 = vector.broadcast %cst_21 : bf16 to vector<128x64xbf16>
    %52 = arith.select %50, %51, %48 : vector<128x64xi1>, vector<128x64xbf16>
    %c16_22 = arith.constant 16 : index
    %c128 = arith.constant 128 : index
    %53 = vector.load %arg11[%c16_22, %c128] : memref<160x192xbf16, #tpu.memory_space<vmem>>, vector<128x64xbf16>
    tpu.vector_store %arg11[%c16_22, %c128], %52 {strides = array<i32>} : memref<160x192xbf16, #tpu.memory_space<vmem>>, vector<128x64xbf16>,
    %c0_23 = arith.constant 0 : index
    %c0_24 = arith.constant 0 : index
    %54 = vector.load %arg11[%c0_23, %c0_24] : memref<160x192xbf16, #tpu.memory_space<vmem>>, vector<128x192xbf16>
    %c0_25 = arith.constant 0 : index
    %c0_26 = arith.constant 0 : index
    %c0_27 = arith.constant 0 : index
    %55 = vector.load %arg4[%c0_25, %c0_26, %c0_27] : memref<3x192x80xbf16, #tpu.memory_space<vmem>>, vector<1x192x80xbf16>
    %56 = vector.shape_cast %55 : vector<1x192x80xbf16> to vector<192x80xbf16>
    %cst_28 = arith.constant dense<0.000000e+00> : vector<128x80xf32>
    %57 = tpu.matmul %54, %56, %cst_28 {dimension_numbers = #tpu.dot_dimension_numbers<[1], [0], [0], [1], [0, 0, 1, 1], [], []>} : vector<128x192xbf16>, vector<192x80xbf16>, vector<128x80xf32> -> vector<128x80xf32>
    %c16_29 = arith.constant 16 : index
    %c0_30 = arith.constant 0 : index
    %58 = vector.load %arg11[%c16_29, %c0_30] : memref<160x192xbf16, #tpu.memory_space<vmem>>, vector<128x192xbf16>
    %c1 = arith.constant 1 : index
    %c0_31 = arith.constant 0 : index
    %c0_32 = arith.constant 0 : index
    %59 = vector.load %arg4[%c1, %c0_31, %c0_32] : memref<3x192x80xbf16, #tpu.memory_space<vmem>>, vector<1x192x80xbf16>
    %60 = vector.shape_cast %59 : vector<1x192x80xbf16> to vector<192x80xbf16>
    %cst_33 = arith.constant dense<0.000000e+00> : vector<128x80xf32>
    %61 = tpu.matmul %58, %60, %cst_33 {dimension_numbers = #tpu.dot_dimension_numbers<[1], [0], [0], [1], [0, 0, 1, 1], [], []>} : vector<128x192xbf16>, vector<192x80xbf16>, vector<128x80xf32> -> vector<128x80xf32>
    %62 = arith.addf %57, %61 : vector<128x80xf32>
    %c32 = arith.constant 32 : index
    %c0_34 = arith.constant 0 : index
    %63 = vector.load %arg11[%c32, %c0_34] : memref<160x192xbf16, #tpu.memory_space<vmem>>, vector<128x192xbf16>
    %c2 = arith.constant 2 : index
    %c0_35 = arith.constant 0 : index
    %c0_36 = arith.constant 0 : index
    %64 = vector.load %arg4[%c2, %c0_35, %c0_36] : memref<3x192x80xbf16, #tpu.memory_space<vmem>>, vector<1x192x80xbf16>
    %65 = vector.shape_cast %64 : vector<1x192x80xbf16> to vector<192x80xbf16>
    %cst_37 = arith.constant dense<0.000000e+00> : vector<128x80xf32>
    %66 = tpu.matmul %63, %65, %cst_37 {dimension_numbers = #tpu.dot_dimension_numbers<[1], [0], [0], [1], [0, 0, 1, 1], [], []>} : vector<128x192xbf16>, vector<192x80xbf16>, vector<128x80xf32> -> vector<128x80xf32>
    %67 = arith.addf %62, %66 : vector<128x80xf32>
    %c0_38 = arith.constant 0 : index
    %c0_39 = arith.constant 0 : index
    %68 = vector.load %arg5[%c0_38, %c0_39] : memref<1x80xf32, #tpu.memory_space<vmem>>, vector<1x80xf32>
    %69 = vector.broadcast %68 : vector<1x80xf32> to vector<128x80xf32>
    %70 = arith.addf %67, %69 : vector<128x80xf32>
    %cst_40 = arith.constant 0.000000e+00 : f32
    %71 = vector.broadcast %cst_40 : f32 to vector<128x80xf32>
    %72 = arith.maximumf %70, %71 : vector<128x80xf32>
    %73 = vector.extract_strided_slice %72 {offsets = [0, 0], sizes = [128, 32], strides = [1, 1]} : vector<128x80xf32> to vector<128x32xf32>
    %74 = vector.extract_strided_slice %72 {offsets = [0, 32], sizes = [128, 48], strides = [1, 1]} : vector<128x80xf32> to vector<128x48xf32>
    %75 = arith.truncf %74 : vector<128x48xf32> to vector<128x48xbf16>
    %cst_41 = arith.constant 0.000000e+00 : bf16
    %76 = vector.broadcast %cst_41 : bf16 to vector<16x144xbf16>
    %c0_42 = arith.constant 0 : index
    %c0_43 = arith.constant 0 : index
    %77 = vector.load %arg12[%c0_42, %c0_43] : memref<160x144xbf16, #tpu.memory_space<vmem>>, vector<16x144xbf16>
    tpu.vector_store %arg12[%c0_42, %c0_43], %76 {strides = array<i32>} : memref<160x144xbf16, #tpu.memory_space<vmem>>, vector<16x144xbf16>,
    %c144_44 = arith.constant 144 : index
    %c0_45 = arith.constant 0 : index
    %78 = vector.load %arg12[%c144_44, %c0_45] : memref<160x144xbf16, #tpu.memory_space<vmem>>, vector<16x144xbf16>
    tpu.vector_store %arg12[%c144_44, %c0_45], %76 {strides = array<i32>} : memref<160x144xbf16, #tpu.memory_space<vmem>>, vector<16x144xbf16>,
    %c16_46 = arith.constant 16 : index
    %c48 = arith.constant 48 : index
    %79 = vector.load %arg12[%c16_46, %c48] : memref<160x144xbf16, #tpu.memory_space<vmem>>, vector<128x48xbf16>
    tpu.vector_store %arg12[%c16_46, %c48], %75 {strides = array<i32>} : memref<160x144xbf16, #tpu.memory_space<vmem>>, vector<128x48xbf16>,
    %cst_47 = arith.constant 0.000000e+00 : bf16
    %80 = vector.broadcast %cst_47 : bf16 to vector<1x48xbf16>
    %81 = vector.extract_strided_slice %75 {offsets = [0, 0], sizes = [127, 48], strides = [1, 1]} : vector<128x48xbf16> to vector<127x48xbf16>
    %82 = tpu.concatenate %80, %81 in 0 : vector<1x48xbf16>, vector<127x48xbf16> -> vector<128x48xbf16>
    %cst_48 = arith.constant 0.000000e+00 : bf16
    %83 = vector.shape_cast %18 : vector<128x1xi1> to vector<128x1xi1>
    %84 = vector.broadcast %83 : vector<128x1xi1> to vector<128x48xi1>
    %85 = vector.broadcast %cst_48 : bf16 to vector<128x48xbf16>
    %86 = arith.select %84, %85, %82 : vector<128x48xi1>, vector<128x48xbf16>
    %c16_49 = arith.constant 16 : index
    %c0_50 = arith.constant 0 : index
    %87 = vector.load %arg12[%c16_49, %c0_50] : memref<160x144xbf16, #tpu.memory_space<vmem>>, vector<128x48xbf16>
    tpu.vector_store %arg12[%c16_49, %c0_50], %86 {strides = array<i32>} : memref<160x144xbf16, #tpu.memory_space<vmem>>, vector<128x48xbf16>,
    %cst_51 = arith.constant 0.000000e+00 : bf16
    %88 = vector.broadcast %cst_51 : bf16 to vector<1x48xbf16>
    %89 = vector.extract_strided_slice %75 {offsets = [1, 0], sizes = [127, 48], strides = [1, 1]} : vector<128x48xbf16> to vector<127x48xbf16>
    %90 = tpu.concatenate %89, %88 in 0 : vector<127x48xbf16>, vector<1x48xbf16> -> vector<128x48xbf16>
    %cst_52 = arith.constant 0.000000e+00 : bf16
    %91 = vector.shape_cast %20 : vector<128x1xi1> to vector<128x1xi1>
    %92 = vector.broadcast %91 : vector<128x1xi1> to vector<128x48xi1>
    %93 = vector.broadcast %cst_52 : bf16 to vector<128x48xbf16>
    %94 = arith.select %92, %93, %90 : vector<128x48xi1>, vector<128x48xbf16>
    %c16_53 = arith.constant 16 : index
    %c96 = arith.constant 96 : index
    %95 = vector.load %arg12[%c16_53, %c96] : memref<160x144xbf16, #tpu.memory_space<vmem>>, vector<128x48xbf16>
    tpu.vector_store %arg12[%c16_53, %c96], %94 {strides = array<i32>} : memref<160x144xbf16, #tpu.memory_space<vmem>>, vector<128x48xbf16>,
    %c0_54 = arith.constant 0 : index
    %c0_55 = arith.constant 0 : index
    %96 = vector.load %arg12[%c0_54, %c0_55] : memref<160x144xbf16, #tpu.memory_space<vmem>>, vector<128x144xbf16>
    %c0_56 = arith.constant 0 : index
    %c0_57 = arith.constant 0 : index
    %c0_58 = arith.constant 0 : index
    %97 = vector.load %arg6[%c0_56, %c0_57, %c0_58] : memref<3x144x64xbf16, #tpu.memory_space<vmem>>, vector<1x144x64xbf16>
    %98 = vector.shape_cast %97 : vector<1x144x64xbf16> to vector<144x64xbf16>
    %cst_59 = arith.constant dense<0.000000e+00> : vector<128x64xf32>
    %99 = tpu.matmul %96, %98, %cst_59 {dimension_numbers = #tpu.dot_dimension_numbers<[1], [0], [0], [1], [0, 0, 1, 1], [], []>} : vector<128x144xbf16>, vector<144x64xbf16>, vector<128x64xf32> -> vector<128x64xf32>
    %c16_60 = arith.constant 16 : index
    %c0_61 = arith.constant 0 : index
    %100 = vector.load %arg12[%c16_60, %c0_61] : memref<160x144xbf16, #tpu.memory_space<vmem>>, vector<128x144xbf16>
    %c1_62 = arith.constant 1 : index
    %c0_63 = arith.constant 0 : index
    %c0_64 = arith.constant 0 : index
    %101 = vector.load %arg6[%c1_62, %c0_63, %c0_64] : memref<3x144x64xbf16, #tpu.memory_space<vmem>>, vector<1x144x64xbf16>
    %102 = vector.shape_cast %101 : vector<1x144x64xbf16> to vector<144x64xbf16>
    %cst_65 = arith.constant dense<0.000000e+00> : vector<128x64xf32>
    %103 = tpu.matmul %100, %102, %cst_65 {dimension_numbers = #tpu.dot_dimension_numbers<[1], [0], [0], [1], [0, 0, 1, 1], [], []>} : vector<128x144xbf16>, vector<144x64xbf16>, vector<128x64xf32> -> vector<128x64xf32>
    %104 = arith.addf %99, %103 : vector<128x64xf32>
    %c32_66 = arith.constant 32 : index
    %c0_67 = arith.constant 0 : index
    %105 = vector.load %arg12[%c32_66, %c0_67] : memref<160x144xbf16, #tpu.memory_space<vmem>>, vector<128x144xbf16>
    %c2_68 = arith.constant 2 : index
    %c0_69 = arith.constant 0 : index
    %c0_70 = arith.constant 0 : index
    %106 = vector.load %arg6[%c2_68, %c0_69, %c0_70] : memref<3x144x64xbf16, #tpu.memory_space<vmem>>, vector<1x144x64xbf16>
    %107 = vector.shape_cast %106 : vector<1x144x64xbf16> to vector<144x64xbf16>
    %cst_71 = arith.constant dense<0.000000e+00> : vector<128x64xf32>
    %108 = tpu.matmul %105, %107, %cst_71 {dimension_numbers = #tpu.dot_dimension_numbers<[1], [0], [0], [1], [0, 0, 1, 1], [], []>} : vector<128x144xbf16>, vector<144x64xbf16>, vector<128x64xf32> -> vector<128x64xf32>
    %109 = arith.addf %104, %108 : vector<128x64xf32>
    %c0_72 = arith.constant 0 : index
    %c0_73 = arith.constant 0 : index
    %110 = vector.load %arg7[%c0_72, %c0_73] : memref<1x64xf32, #tpu.memory_space<vmem>>, vector<1x64xf32>
    %111 = vector.broadcast %110 : vector<1x64xf32> to vector<128x64xf32>
    %112 = arith.addf %109, %111 : vector<128x64xf32>
    %cst_74 = arith.constant 0.000000e+00 : f32
    %113 = vector.broadcast %cst_74 : f32 to vector<128x64xf32>
    %114 = arith.maximumf %112, %113 : vector<128x64xf32>
    %115 = tpu.concatenate %31, %73, %114 in 1 : vector<128x32xf32>, vector<128x32xf32>, vector<128x64xf32> -> vector<128x128xf32>
    %116 = arith.truncf %115 : vector<128x128xf32> to vector<128x128xbf16>
    %c0_75 = arith.constant 0 : index
    %c0_76 = arith.constant 0 : index
    %117 = vector.load %arg8[%c0_75, %c0_76] : memref<128x320xbf16, #tpu.memory_space<vmem>>, vector<128x320xbf16>
    %cst_77 = arith.constant dense<0.000000e+00> : vector<128x320xf32>
    %118 = tpu.matmul %116, %117, %cst_77 {dimension_numbers = #tpu.dot_dimension_numbers<[1], [0], [0], [1], [0, 0, 1, 1], [], []>} : vector<128x128xbf16>, vector<128x320xbf16>, vector<128x320xf32> -> vector<128x320xf32>
    %c0_78 = arith.constant 0 : index
    %c0_79 = arith.constant 0 : index
    %119 = vector.load %arg9[%c0_78, %c0_79] : memref<1x320xf32, #tpu.memory_space<vmem>>, vector<1x320xf32>
    %120 = vector.broadcast %119 : vector<1x320xf32> to vector<128x320xf32>
    %121 = arith.addf %118, %120 : vector<128x320xf32>
    %cst_80 = arith.constant 1.700000e-01 : f32
    %122 = vector.broadcast %cst_80 : f32 to vector<128x320xf32>
    %123 = arith.mulf %121, %122 : vector<128x320xf32>
    %c0_81 = arith.constant 0 : index
    %c0_82 = arith.constant 0 : index
    %c0_83 = arith.constant 0 : index
    %c0_84 = arith.constant 0 : index
    %124 = vector.load %arg1[%c0_81, %c0_82, %c0_83, %c0_84] : memref<8x2x8x320xf32, #tpu.memory_space<vmem>>, vector<8x2x8x320xf32>
    %125 = vector.shape_cast %124 : vector<8x2x8x320xf32> to vector<128x320xf32>
    %126 = arith.addf %123, %125 : vector<128x320xf32>
    %cst_85 = arith.constant 0.000000e+00 : f32
    %127 = vector.broadcast %cst_85 : f32 to vector<128x320xf32>
    %128 = arith.maximumf %126, %127 : vector<128x320xf32>
    %129 = vector.shape_cast %128 : vector<128x320xf32> to vector<8x2x8x320xf32>
    %c0_86 = arith.constant 0 : index
    %c0_87 = arith.constant 0 : index
    %c0_88 = arith.constant 0 : index
    %c0_89 = arith.constant 0 : index
    %130 = vector.load %arg10[%c0_86, %c0_87, %c0_88, %c0_89] : memref<8x2x8x320xf32, #tpu.memory_space<vmem>>, vector<8x2x8x320xf32>
    tpu.vector_store %arg10[%c0_86, %c0_87, %c0_88, %c0_89], %129 {strides = array<i32>} : memref<8x2x8x320xf32, #tpu.memory_space<vmem>>, vector<8x2x8x320xf32>,
    return
  }
  func.func @transform_0(%arg0: i32) -> (i32, i32, i32, i32) {
    %c0_i32 = arith.constant 0 : i32
    %c0_i32_0 = arith.constant 0 : i32
    %c0_i32_1 = arith.constant 0 : i32
    %c0_i32_2 = arith.constant 0 : i32
    return %c0_i32, %arg0, %c0_i32_0, %c0_i32_1 : i32, i32, i32, i32
  }
  func.func @transform_1(%arg0: i32) -> (i32, i32) {
    %c0_i32 = arith.constant 0 : i32
    %c0_i32_0 = arith.constant 0 : i32
    %c0_i32_1 = arith.constant 0 : i32
    return %c0_i32, %c0_i32_0 : i32, i32
  }
  func.func @transform_2(%arg0: i32) -> (i32, i32) {
    %c0_i32 = arith.constant 0 : i32
    %c0_i32_0 = arith.constant 0 : i32
    %c0_i32_1 = arith.constant 0 : i32
    return %c0_i32, %c0_i32_0 : i32, i32
  }
  func.func @transform_3(%arg0: i32) -> (i32, i32, i32) {
    %c0_i32 = arith.constant 0 : i32
    %c0_i32_0 = arith.constant 0 : i32
    %c0_i32_1 = arith.constant 0 : i32
    %c0_i32_2 = arith.constant 0 : i32
    return %c0_i32, %c0_i32_0, %c0_i32_1 : i32, i32, i32
  }
  func.func @transform_4(%arg0: i32) -> (i32, i32) {
    %c0_i32 = arith.constant 0 : i32
    %c0_i32_0 = arith.constant 0 : i32
    %c0_i32_1 = arith.constant 0 : i32
    return %c0_i32, %c0_i32_0 : i32, i32
  }
  func.func @transform_5(%arg0: i32) -> (i32, i32, i32) {
    %c0_i32 = arith.constant 0 : i32
    %c0_i32_0 = arith.constant 0 : i32
    %c0_i32_1 = arith.constant 0 : i32
    %c0_i32_2 = arith.constant 0 : i32
    return %c0_i32, %c0_i32_0, %c0_i32_1 : i32, i32, i32
  }
  func.func @transform_6(%arg0: i32) -> (i32, i32) {
    %c0_i32 = arith.constant 0 : i32
    %c0_i32_0 = arith.constant 0 : i32
    %c0_i32_1 = arith.constant 0 : i32
    return %c0_i32, %c0_i32_0 : i32, i32
  }
  func.func @transform_7(%arg0: i32) -> (i32, i32) {
    %c0_i32 = arith.constant 0 : i32
    %c0_i32_0 = arith.constant 0 : i32
    %c0_i32_1 = arith.constant 0 : i32
    return %c0_i32, %c0_i32_0 : i32, i32
  }
  func.func @transform_8(%arg0: i32) -> (i32, i32) {
    %c0_i32 = arith.constant 0 : i32
    %c0_i32_0 = arith.constant 0 : i32
    %c0_i32_1 = arith.constant 0 : i32
    return %c0_i32, %c0_i32_0 : i32, i32
  }
  func.func @transform_9(%arg0: i32) -> (i32, i32, i32, i32) {
    %c0_i32 = arith.constant 0 : i32
    %c0_i32_0 = arith.constant 0 : i32
    %c0_i32_1 = arith.constant 0 : i32
    %c0_i32_2 = arith.constant 0 : i32
    return %c0_i32, %arg0, %c0_i32_0, %c0_i32_1 : i32, i32, i32, i32
  }
}

</mosaic_0001>

<llo_original>
// kernel: _lambda_.1
$region0: #{_lambda_.1}
  #allocation0 [shape = 'u32[]', space=smem, size = 0x4, offset = 0x4, fixed_abs, tag = 'smem constant byte address 0x4 - core index']
  #allocation1 [shape = 'u32[144,128]{1,0:T(1,128)}', space=vmem, size = 0x12000, scoped, tag = 'internal scratch']
  #allocation2 [shape = 'bf16[160,192]{1,0:T(16,128)(2,1)}', space=vmem, size = 0x14000, scoped, tag = 'scratch operand']
  #allocation3 [shape = 'bf16[160,144]{1,0:T(16,128)(2,1)}', space=vmem, size = 0x14000, scoped, tag = 'scratch operand']
  %s0 = inlined_call_operand.vmem [shape: f32[8,4,8,320], index: 0, kind: input, shape index: {}]
  %s1 = inlined_call_operand.vmem [shape: bf16[320,96], index: 1, kind: input, shape index: {}]
  %s2 = inlined_call_operand.vmem [shape: f32[1,96], index: 2, kind: input, shape index: {}]
  %s3 = inlined_call_operand.vmem [shape: bf16[3,192,80], index: 3, kind: input, shape index: {}]
  %s4 = inlined_call_operand.vmem [shape: f32[1,80], index: 4, kind: input, shape index: {}]
  %s5 = inlined_call_operand.vmem [shape: bf16[3,144,64], index: 5, kind: input, shape index: {}]
  %s6 = inlined_call_operand.vmem [shape: f32[1,64], index: 6, kind: input, shape index: {}]
  %s7 = inlined_call_operand.vmem [shape: bf16[128,320], index: 7, kind: input, shape index: {}]
  %s8 = inlined_call_operand.vmem [shape: f32[1,320], index: 8, kind: input, shape index: {}]
  %s9 = inlined_call_operand.vmem [shape: f32[8,4,8,320], index: 9, kind: output, shape index: {}]
  %s10 = sld [smem:[#allocation0]]
  $region111: #{_lambda_.1} parent=0
    _
  %s12 = ssub.s32 1, %s10
  %s13 = scalar_select 0, %s12, %s10
  $region1: #{_lambda_.1} parent=0
    #allocation4 [shape = 'u8[393216]{0}', space=vmem, size = 0x60000, scoped, tag = 'input window, operand 0']
    #allocation5 [shape = 'u8[393216]{0}', space=vmem, size = 0x60000, scoped, tag = 'output window, operand 0']
    loop: start=0, step=1, limit=4
    $region2: #{_lambda_.1} parent=1 // loop_pre_header
      _
    $region3: #{_lambda_.1} parent=1 // loop_header
      %s15 = sphi 0, %s19
      %p16 = scmp.ge.s32.totalorder %s15, 4
      %s25 = sphi 0, %s27
      %s28 = sphi 0, %s25
      %s29 = sphi 0, %s28
      %s45 = sphi 0, %s29
      %s49 = sphi 0, %s49
      %s51 = sphi 0, %s49
      %s52 = sphi 0, %s51
      %s66 = sphi 0, %s52
      %s70 = sphi 0, %s70
      %s72 = sphi 0, %s70
      %s73 = sphi 0, %s72
      %s87 = sphi 0, %s73
      %s91 = sphi 0, %s91
      %s93 = sphi 0, %s91
      %s94 = sphi 0, %s93
      %s108 = sphi 0, %s94
      %s112 = sphi 0, %s112
      %s114 = sphi 0, %s112
      %s115 = sphi 0, %s114
      %s129 = sphi 0, %s115
      %s133 = sphi 0, %s133
      %s135 = sphi 0, %s133
      %s136 = sphi 0, %s135
      %s150 = sphi 0, %s136
      %s154 = sphi 0, %s154
      %s156 = sphi 0, %s154
      %s157 = sphi 0, %s156
      %s171 = sphi 0, %s157
      %s175 = sphi 0, %s175
      %s177 = sphi 0, %s175
      %s178 = sphi 0, %s177
      %s192 = sphi 0, %s178
      %s196 = sphi 0, %s196
      %s198 = sphi 0, %s196
      %s199 = sphi 0, %s198
      %s213 = sphi 0, %s199
      %s219 = sphi 0, %s221
      %s222 = sphi 0, %s219
      %s223 = sphi 0, %s222
      %s239 = sphi 0, %s223
    $region4: #{_lambda_.1} parent=1 // loop_header_branch
      %18 = sbr.rel (%p16) target = $region8
    $region5: #{_lambda_.1} parent=1 // loop_body
      %s20 = ssub.s32 %s15, 1
      %s21 = ssub.s32 %s15, 2
      %s22 = sadd.s32 %s15, 1
      %s23 = ssub.s32 %s15, %s22
      %p24 = scmp.eq.s32.totalorder %s23, 0
      %s26 = sadd.s32 %s25, 1
      %s27 = scalar_select %p24, %s25, %s26
      %p30 = pneg %p24
      %p31 = scmp.eq.s32.totalorder %s15, 1
      %p32 = por %p30, %p31
      %p33 = scmp.ne.s32.totalorder %s25, %s28
      %p34 = scmp.eq.s32.totalorder %s15, 0
      %p35 = por %p33, %p34
      %p36 = scmp.ne.s32.totalorder %s25, %s28
      %p37 = scmp.eq.s32.totalorder %s20, 1
      %p38 = por %p36, %p37
      %p39 = scmp.ne.s32.totalorder %s28, %s29
      %p40 = scmp.eq.s32.totalorder %s20, 0
      %p41 = por %p39, %p40
      %p42 = scmp.ne.s32.totalorder %s28, %s29
      %p43 = scmp.eq.s32.totalorder %s21, 1
      %p44 = por %p42, %p43
      %p46 = scmp.ne.s32.totalorder %s29, %s45
      %p47 = scmp.eq.s32.totalorder %s21, 0
      %p48 = por %p46, %p47
      %s50 = sadd.s32 %s49, 1
      %p53 = scmp.eq.s32.totalorder %s15, 1
      %p54 = scmp.ne.s32.totalorder %s49, %s51
      %p55 = scmp.eq.s32.totalorder %s15, 0
      %p56 = por %p54, %p55
      %p57 = scmp.ne.s32.totalorder %s49, %s51
      %p58 = scmp.eq.s32.totalorder %s20, 1
      %p59 = por %p57, %p58
      %p60 = scmp.ne.s32.totalorder %s51, %s52
      %p61 = scmp.eq.s32.totalorder %s20, 0
      %p62 = por %p60, %p61
      %p63 = scmp.ne.s32.totalorder %s51, %s52
      %p64 = scmp.eq.s32.totalorder %s21, 1
      %p65 = por %p63, %p64
      %p67 = scmp.ne.s32.totalorder %s52, %s66
      %p68 = scmp.eq.s32.totalorder %s21, 0
      %p69 = por %p67, %p68
      %s71 = sadd.s32 %s70, 1
      %p74 = scmp.eq.s32.totalorder %s15, 1
      %p75 = scmp.ne.s32.totalorder %s70, %s72
      %p76 = scmp.eq.s32.totalorder %s15, 0
      %p77 = por %p75, %p76
      %p78 = scmp.ne.s32.totalorder %s70, %s72
      %p79 = scmp.eq.s32.totalorder %s20, 1
      %p80 = por %p78, %p79
      %p81 = scmp.ne.s32.totalorder %s72, %s73
      %p82 = scmp.eq.s32.totalorder %s20, 0
      %p83 = por %p81, %p82
      %p84 = scmp.ne.s32.totalorder %s72, %s73
      %p85 = scmp.eq.s32.totalorder %s21, 1
      %p86 = por %p84, %p85
      %p88 = scmp.ne.s32.totalorder %s73, %s87
      %p89 = scmp.eq.s32.totalorder %s21, 0
      %p90 = por %p88, %p89
      %s92 = sadd.s32 %s91, 1
      %p95 = scmp.eq.s32.totalorder %s15, 1
      %p96 = scmp.ne.s32.totalorder %s91, %s93
      %p97 = scmp.eq.s32.totalorder %s15, 0
      %p98 = por %p96, %p97
      %p99 = scmp.ne.s32.totalorder %s91, %s93
      %p100 = scmp.eq.s32.totalorder %s20, 1
      %p101 = por %p99, %p100
      %p102 = scmp.ne.s32.totalorder %s93, %s94
      %p103 = scmp.eq.s32.totalorder %s20, 0
      %p104 = por %p102, %p103
      %p105 = scmp.ne.s32.totalorder %s93, %s94
      %p106 = scmp.eq.s32.totalorder %s21, 1
      %p107 = por %p105, %p106
      %p109 = scmp.ne.s32.totalorder %s94, %s108
      %p110 = scmp.eq.s32.totalorder %s21, 0
      %p111 = por %p109, %p110
      %s113 = sadd.s32 %s112, 1
      %p116 = scmp.eq.s32.totalorder %s15, 1
      %p117 = scmp.ne.s32.totalorder %s112, %s114
      %p118 = scmp.eq.s32.totalorder %s15, 0
      %p119 = por %p117, %p118
      %p120 = scmp.ne.s32.totalorder %s112, %s114
      %p121 = scmp.eq.s32.totalorder %s20, 1
      %p122 = por %p120, %p121
      %p123 = scmp.ne.s32.totalorder %s114, %s115
      %p124 = scmp.eq.s32.totalorder %s20, 0
      %p125 = por %p123, %p124
      %p126 = scmp.ne.s32.totalorder %s114, %s115
      %p127 = scmp.eq.s32.totalorder %s21, 1
      %p128 = por %p126, %p127
      %p130 = scmp.ne.s32.totalorder %s115, %s129
      %p131 = scmp.eq.s32.totalorder %s21, 0
      %p132 = por %p130, %p131
      %s134 = sadd.s32 %s133, 1
      %p137 = scmp.eq.s32.totalorder %s15, 1
      %p138 = scmp.ne.s32.totalorder %s133, %s135
      %p139 = scmp.eq.s32.totalorder %s15, 0
      %p140 = por %p138, %p139
      %p141 = scmp.ne.s32.totalorder %s133, %s135
      %p142 = scmp.eq.s32.totalorder %s20, 1
      %p143 = por %p141, %p142
      %p144 = scmp.ne.s32.totalorder %s135, %s136
      %p145 = scmp.eq.s32.totalorder %s20, 0
      %p146 = por %p144, %p145
      %p147 = scmp.ne.s32.totalorder %s135, %s136
      %p148 = scmp.eq.s32.totalorder %s21, 1
      %p149 = por %p147, %p148
      %p151 = scmp.ne.s32.totalorder %s136, %s150
      %p152 = scmp.eq.s32.totalorder %s21, 0
      %p153 = por %p151, %p152
      %s155 = sadd.s32 %s154, 1
      %p158 = scmp.eq.s32.totalorder %s15, 1
      %p159 = scmp.ne.s32.totalorder %s154, %s156
      %p160 = scmp.eq.s32.totalorder %s15, 0
      %p161 = por %p159, %p160
      %p162 = scmp.ne.s32.totalorder %s154, %s156
      %p163 = scmp.eq.s32.totalorder %s20, 1
      %p164 = por %p162, %p163
      %p165 = scmp.ne.s32.totalorder %s156, %s157
      %p166 = scmp.eq.s32.totalorder %s20, 0
      %p167 = por %p165, %p166
      %p168 = scmp.ne.s32.totalorder %s156, %s157
      %p169 = scmp.eq.s32.totalorder %s21, 1
      %p170 = por %p168, %p169
      %p172 = scmp.ne.s32.totalorder %s157, %s171
      %p173 = scmp.eq.s32.totalorder %s21, 0
      %p174 = por %p172, %p173
      %s176 = sadd.s32 %s175, 1
      %p179 = scmp.eq.s32.totalorder %s15, 1
      %p180 = scmp.ne.s32.totalorder %s175, %s177
      %p181 = scmp.eq.s32.totalorder %s15, 0
      %p182 = por %p180, %p181
      %p183 = scmp.ne.s32.totalorder %s175, %s177
      %p184 = scmp.eq.s32.totalorder %s20, 1
      %p185 = por %p183, %p184
      %p186 = scmp.ne.s32.totalorder %s177, %s178
      %p187 = scmp.eq.s32.totalorder %s20, 0
      %p188 = por %p186, %p187
      %p189 = scmp.ne.s32.totalorder %s177, %s178
      %p190 = scmp.eq.s32.totalorder %s21, 1
      %p191 = por %p189, %p190
      %p193 = scmp.ne.s32.totalorder %s178, %s192
      %p194 = scmp.eq.s32.totalorder %s21, 0
      %p195 = por %p193, %p194
      %s197 = sadd.s32 %s196, 1
      %p200 = scmp.eq.s32.totalorder %s15, 1
      %p201 = scmp.ne.s32.totalorder %s196, %s198
      %p202 = scmp.eq.s32.totalorder %s15, 0
      %p203 = por %p201, %p202
      %p204 = scmp.ne.s32.totalorder %s196, %s198
      %p205 = scmp.eq.s32.totalorder %s20, 1
      %p206 = por %p204, %p205
      %p207 = scmp.ne.s32.totalorder %s198, %s199
      %p208 = scmp.eq.s32.totalorder %s20, 0
      %p209 = por %p207, %p208
      %p210 = scmp.ne.s32.totalorder %s198, %s199
      %p211 = scmp.eq.s32.totalorder %s21, 1
      %p212 = por %p210, %p211
      %p214 = scmp.ne.s32.totalorder %s199, %s213
      %p215 = scmp.eq.s32.totalorder %s21, 0
      %p216 = por %p214, %p215
      %s217 = ssub.s32 %s15, %s22
      %p218 = scmp.eq.s32.totalorder %s217, 0
      %s220 = sadd.s32 %s219, 1
      %s221 = scalar_select %p218, %s219, %s220
      %p224 = pneg %p218
      %p225 = scmp.eq.s32.totalorder %s15, 1
      %p226 = por %p224, %p225
      %p227 = scmp.ne.s32.totalorder %s219, %s222
      %p228 = scmp.eq.s32.totalorder %s15, 0
      %p229 = por %p227, %p228
      %p230 = scmp.ne.s32.totalorder %s219, %s222
      %p231 = scmp.eq.s32.totalorder %s20, 1
      %p232 = por %p230, %p231
      %p233 = scmp.ne.s32.totalorder %s222, %s223
      %p234 = scmp.eq.s32.totalorder %s20, 0
      %p235 = por %p233, %p234
      %p236 = scmp.ne.s32.totalorder %s222, %s223
      %p237 = scmp.eq.s32.totalorder %s21, 1
      %p238 = por %p236, %p237
      %p240 = scmp.ne.s32.totalorder %s223, %s239
      %p241 = scmp.eq.s32.totalorder %s21, 0
      %p242 = por %p240, %p241
      %p243 = scmp.le.s32.totalorder 1, %s15
      %p244 = scmp.lt.s32.totalorder %s15, 3
      %p245 = pnand %p243, %p244
      %p246 = pneg %p245
      // Predicated region
      $region9: #{_lambda_.1} parent=5 // pred_check
        _
      $region10: #{_lambda_.1} parent=5 // pred_check_branch
        %248 = sbr.rel (%p245) target = $region12
      $region11: #{_lambda_.1} parent=5 // pred_region
        %s249 = ssub.s32 %s15, 1
        // Predicated region
        $region13: #{_lambda_.1} parent=11 // pred_check
          %p250 = pneg %p62
        $region14: #{_lambda_.1} parent=11 // pred_check_branch
          %252 = sbr.rel (%p250) target = $region16
        $region15: #{_lambda_.1} parent=11 // pred_region
          _
        $region16: #{_lambda_.1} parent=11 // pred_fallthru
          _
        // Predicated region
        $region17: #{_lambda_.1} parent=11 // pred_check
          %p253 = pneg %p83
        $region18: #{_lambda_.1} parent=11 // pred_check_branch
          %255 = sbr.rel (%p253) target = $region20
        $region19: #{_lambda_.1} parent=11 // pred_region
          _
        $region20: #{_lambda_.1} parent=11 // pred_fallthru
          _
        // Predicated region
        $region21: #{_lambda_.1} parent=11 // pred_check
          %p256 = pneg %p104
        $region22: #{_lambda_.1} parent=11 // pred_check_branch
          %258 = sbr.rel (%p256) target = $region24
        $region23: #{_lambda_.1} parent=11 // pred_region
          _
        $region24: #{_lambda_.1} parent=11 // pred_fallthru
          _
        // Predicated region
        $region25: #{_lambda_.1} parent=11 // pred_check
          %p259 = pneg %p125
        $region26: #{_lambda_.1} parent=11 // pred_check_branch
          %261 = sbr.rel (%p259) target = $region28
        $region27: #{_lambda_.1} parent=11 // pred_region
          _
        $region28: #{_lambda_.1} parent=11 // pred_fallthru
          _
        // Predicated region
        $region29: #{_lambda_.1} parent=11 // pred_check
          %p262 = pneg %p146
        $region30: #{_lambda_.1} parent=11 // pred_check_branch
          %264 = sbr.rel (%p262) target = $region32
        $region31: #{_lambda_.1} parent=11 // pred_region
          _
        $region32: #{_lambda_.1} parent=11 // pred_fallthru
          _
        // Predicated region
        $region33: #{_lambda_.1} parent=11 // pred_check
          %p265 = pneg %p167
        $region34: #{_lambda_.1} parent=11 // pred_check_branch
          %267 = sbr.rel (%p265) target = $region36
        $region35: #{_lambda_.1} parent=11 // pred_region
          _
        $region36: #{_lambda_.1} parent=11 // pred_fallthru
          _
        // Predicated region
        $region37: #{_lambda_.1} parent=11 // pred_check
          %p268 = pneg %p188
        $region38: #{_lambda_.1} parent=11 // pred_check_branch
          %270 = sbr.rel (%p268) target = $region40
        $region39: #{_lambda_.1} parent=11 // pred_region
          _
        $region40: #{_lambda_.1} parent=11 // pred_fallthru
          _
        // Predicated region
        $region41: #{_lambda_.1} parent=11 // pred_check
          %p271 = pneg %p209
        $region42: #{_lambda_.1} parent=11 // pred_check_branch
          %273 = sbr.rel (%p271) target = $region44
        $region43: #{_lambda_.1} parent=11 // pred_region
          _
        $region44: #{_lambda_.1} parent=11 // pred_fallthru
          _
      $region12: #{_lambda_.1} parent=5 // pred_fallthru
        _
      %p274 = scmp.lt.s32.totalorder %s15, 2
      // Predicated region
      $region45: #{_lambda_.1} parent=5 // pred_check
        %p275 = pneg %p274
      $region46: #{_lambda_.1} parent=5 // pred_check_branch
        %277 = sbr.rel (%p275) target = $region48
      $region47: #{_lambda_.1} parent=5 // pred_region
        // Predicated region
        $region49: #{_lambda_.1} parent=47 // pred_check
          %p278 = pneg %p35
        $region50: #{_lambda_.1} parent=47 // pred_check_branch
          %280 = sbr.rel (%p278) target = $region52
        $region51: #{_lambda_.1} parent=47 // pred_region
          %s281 = sand.u32 %s25, 1
          %s282 = sand.u32 %s25, 1
          %s283 = smul.addr %s282, 384
          %s284 = scalar_lea.vmem [#allocation4], %s283
          %s285 = smul.u32 2, %s15
          %s286 = smul.addr %s285, 3
          %s287 = smul.addr %s286, 8
          %s288 = scalar_lea.vmem %s0, %s287
          // Predicated region
          $region53: #{_lambda_.1} parent=51 // pred_check
            _
          $region54: #{_lambda_.1} parent=51 // pred_check_branch
            %290 = sbr.rel (0) target = $region56
          $region55: #{_lambda_.1} parent=51 // pred_region
            // Predicated region
            $region57: #{_lambda_.1} parent=55 // pred_check
              _
            $region58: #{_lambda_.1} parent=55 // pred_check_branch
              %292 = sbr.rel (0) target = $region60
            $region59: #{_lambda_.1} parent=55 // pred_region
              loop: start=0, step=1, limit=1
              $region61: #{_lambda_.1} parent=59 // loop_pre_header
                _
              $region62: #{_lambda_.1} parent=59 // loop_header
                %s294 = sphi 0, %s298
                %p295 = scmp.ge.s32.totalorder %s294, 1
                %s299 = sphi %s288, %s288
                %s300 = sphi %s284, %s284
              $region63: #{_lambda_.1} parent=59 // loop_header_branch
                %297 = sbr.rel (%p295) target = $region67
              $region64: #{_lambda_.1} parent=59 // loop_body
                %v301 = vld [vmem:[%s299] sm:$0xff]
                %302 = vst [vmem:[%s300] sm:$0xff] %v301
                %v303 = vld [vmem:[%s299 + $0x8] sm:$0xff]
                %304 = vst [vmem:[%s300 + $0x8] sm:$0xff] %v303
                %v305 = vld [vmem:[%s299 + $0x10] sm:$0xff]
                %306 = vst [vmem:[%s300 + $0x10] sm:$0xff] %v305
                %v307 = vld [vmem:[%s299 + $0x18] sm:$0xff]
                %308 = vst [vmem:[%s300 + $0x18] sm:$0xff] %v307
                %v309 = vld [vmem:[%s299 + $0x20] sm:$0xff]
                %310 = vst [vmem:[%s300 + $0x20] sm:$0xff] %v309
                %v311 = vld [vmem:[%s299 + $0x28] sm:$0xff]
                %312 = vst [vmem:[%s300 + $0x28] sm:$0xff] %v311
                %v313 = vld [vmem:[%s299 + $0x60] sm:$0xff]
                %314 = vst [vmem:[%s300 + $0x30] sm:$0xff] %v313
                %v315 = vld [vmem:[%s299 + $0x68] sm:$0xff]
                %316 = vst [vmem:[%s300 + $0x38] sm:$0xff] %v315
                %v317 = vld [vmem:[%s299 + $0x70] sm:$0xff]
                %318 = vst [vmem:[%s300 + $0x40] sm:$0xff] %v317
                %v319 = vld [vmem:[%s299 + $0x78] sm:$0xff]
                %320 = vst [vmem:[%s300 + $0x48] sm:$0xff] %v319
                %v321 = vld [vmem:[%s299 + $0x80] sm:$0xff]
                %322 = vst [vmem:[%s300 + $0x50] sm:$0xff] %v321
                %v323 = vld [vmem:[%s299 + $0x88] sm:$0xff]
                %324 = vst [vmem:[%s300 + $0x58] sm:$0xff] %v323
                %v325 = vld [vmem:[%s299 + $0xc0] sm:$0xff]
                %326 = vst [vmem:[%s300 + $0x60] sm:$0xff] %v325
                %v327 = vld [vmem:[%s299 + $0xc8] sm:$0xff]
                %328 = vst [vmem:[%s300 + $0x68] sm:$0xff] %v327
                %v329 = vld [vmem:[%s299 + $0xd0] sm:$0xff]
                %330 = vst [vmem:[%s300 + $0x70] sm:$0xff] %v329
                %v331 = vld [vmem:[%s299 + $0xd8] sm:$0xff]
                %332 = vst [vmem:[%s300 + $0x78] sm:$0xff] %v331
                %v333 = vld [vmem:[%s299 + $0xe0] sm:$0xff]
                %334 = vst [vmem:[%s300 + $0x80] sm:$0xff] %v333
                %v335 = vld [vmem:[%s299 + $0xe8] sm:$0xff]
                %336 = vst [vmem:[%s300 + $0x88] sm:$0xff] %v335
                %v337 = vld [vmem:[%s299 + $0x120] sm:$0xff]
                %338 = vst [vmem:[%s300 + $0x90] sm:$0xff] %v337
                %v339 = vld [vmem:[%s299 + $0x128] sm:$0xff]
                %340 = vst [vmem:[%s300 + $0x98] sm:$0xff] %v339
                %v341 = vld [vmem:[%s299 + $0x130] sm:$0xff]
                %342 = vst [vmem:[%s300 + $0xa0] sm:$0xff] %v341
                %v343 = vld [vmem:[%s299 + $0x138] sm:$0xff]
                %344 = vst [vmem:[%s300 + $0xa8] sm:$0xff] %v343
                %v345 = vld [vmem:[%s299 + $0x140] sm:$0xff]
                %346 = vst [vmem:[%s300 + $0xb0] sm:$0xff] %v345
                %v347 = vld [vmem:[%s299 + $0x148] sm:$0xff]
                %348 = vst [vmem:[%s300 + $0xb8] sm:$0xff] %v347
                %v349 = vld [vmem:[%s299 + $0x180] sm:$0xff]
                %350 = vst [vmem:[%s300 + $0xc0] sm:$0xff] %v349
                %v351 = vld [vmem:[%s299 + $0x188] sm:$0xff]
                %352 = vst [vmem:[%s300 + $0xc8] sm:$0xff] %v351
                %v353 = vld [vmem:[%s299 + $0x190] sm:$0xff]
                %354 = vst [vmem:[%s300 + $0xd0] sm:$0xff] %v353
                %v355 = vld [vmem:[%s299 + $0x198] sm:$0xff]
                %356 = vst [vmem:[%s300 + $0xd8] sm:$0xff] %v355
                %v357 = vld [vmem:[%s299 + $0x1a0] sm:$0xff]
                %358 = vst [vmem:[%s300 + $0xe0] sm:$0xff] %v357
                %v359 = vld [vmem:[%s299 + $0x1a8] sm:$0xff]
                %360 = vst [vmem:[%s300 + $0xe8] sm:$0xff] %v359
                %v361 = vld [vmem:[%s299 + $0x1e0] sm:$0xff]
                %362 = vst [vmem:[%s300 + $0xf0] sm:$0xff] %v361
                %v363 = vld [vmem:[%s299 + $0x1e8] sm:$0xff]
                %364 = vst [vmem:[%s300 + $0xf8] sm:$0xff] %v363
                %v365 = vld [vmem:[%s299 + $0x1f0] sm:$0xff]
                %366 = vst [vmem:[%s300 + $0x100] sm:$0xff] %v365
                %v367 = vld [vmem:[%s299 + $0x1f8] sm:$0xff]
                %368 = vst [vmem:[%s300 + $0x108] sm:$0xff] %v367
                %v369 = vld [vmem:[%s299 + $0x200] sm:$0xff]
                %370 = vst [vmem:[%s300 + $0x110] sm:$0xff] %v369
                %v371 = vld [vmem:[%s299 + $0x208] sm:$0xff]
                %372 = vst [vmem:[%s300 + $0x118] sm:$0xff] %v371
                %v373 = vld [vmem:[%s299 + $0x240] sm:$0xff]
                %374 = vst [vmem:[%s300 + $0x120] sm:$0xff] %v373
                %v375 = vld [vmem:[%s299 + $0x248] sm:$0xff]
                %376 = vst [vmem:[%s300 + $0x128] sm:$0xff] %v375
                %v377 = vld [vmem:[%s299 + $0x250] sm:$0xff]
                %378 = vst [vmem:[%s300 + $0x130] sm:$0xff] %v377
                %v379 = vld [vmem:[%s299 + $0x258] sm:$0xff]
                %380 = vst [vmem:[%s300 + $0x138] sm:$0xff] %v379
                %v381 = vld [vmem:[%s299 + $0x260] sm:$0xff]
                %382 = vst [vmem:[%s300 + $0x140] sm:$0xff] %v381
                %v383 = vld [vmem:[%s299 + $0x268] sm:$0xff]
                %384 = vst [vmem:[%s300 + $0x148] sm:$0xff] %v383
                %v385 = vld [vmem:[%s299 + $0x2a0] sm:$0xff]
                %386 = vst [vmem:[%s300 + $0x150] sm:$0xff] %v385
                %v387 = vld [vmem:[%s299 + $0x2a8] sm:$0xff]
                %388 = vst [vmem:[%s300 + $0x158] sm:$0xff] %v387
                %v389 = vld [vmem:[%s299 + $0x2b0] sm:$0xff]
                %390 = vst [vmem:[%s300 + $0x160] sm:$0xff] %v389
                %v391 = vld [vmem:[%s299 + $0x2b8] sm:$0xff]
                %392 = vst [vmem:[%s300 + $0x168] sm:$0xff] %v391
                %v393 = vld [vmem:[%s299 + $0x2c0] sm:$0xff]
                %394 = vst [vmem:[%s300 + $0x170] sm:$0xff] %v393
                %v395 = vld [vmem:[%s299 + $0x2c8] sm:$0xff]
                %396 = vst [vmem:[%s300 + $0x178] sm:$0xff] %v395
              $region65: #{_lambda_.1} parent=59 // loop_footer
                %s298 = sadd.s32 1, %s294
              $region66: #{_lambda_.1} parent=59 // loop_footer_branch
                %293 = sbr.rel target = $region62
              $region67: #{_lambda_.1} parent=59 // loop_exit
                _
            $region60: #{_lambda_.1} parent=55 // pred_fallthru
              _
            // Predicated region
            $region68: #{_lambda_.1} parent=55 // pred_check
              _
            $region69: #{_lambda_.1} parent=55 // pred_check_branch
              %398 = sbr.rel target = $region71
            $region70: #{_lambda_.1} parent=55 // pred_region
              _
            $region71: #{_lambda_.1} parent=55 // pred_fallthru
              _
          $region56: #{_lambda_.1} parent=51 // pred_fallthru
            _
          %399 = vnop
        $region52: #{_lambda_.1} parent=47 // pred_fallthru
          _
      $region48: #{_lambda_.1} parent=5 // pred_fallthru
        _
      %p400 = scmp.le.s32.totalorder 1, %s15
      %p401 = scmp.lt.s32.totalorder %s15, 3
      %p402 = pnand %p400, %p401
      %p403 = pneg %p402
      // Predicated region
      $region72: #{_lambda_.1} parent=5 // pred_check
        _
      $region73: #{_lambda_.1} parent=5 // pred_check_branch
        %405 = sbr.rel (%p402) target = $region75
      $region74: #{_lambda_.1} parent=5 // pred_region
        %s406 = ssub.s32 %s15, 1
        %s407 = sand.u32 %s28, 1
        %s408 = sand.u32 %s28, 1
        %s409 = smul.addr %s408, 384
        %s410 = scalar_lea.vmem [#allocation4], %s409
        // Predicated region
        $region76: #{_lambda_.1} parent=74 // pred_check
          %p411 = pneg %p41
        $region77: #{_lambda_.1} parent=74 // pred_check_branch
          %413 = sbr.rel (%p411) target = $region79
        $region78: #{_lambda_.1} parent=74 // pred_region
          _
        $region79: #{_lambda_.1} parent=74 // pred_fallthru
          _
        %s414 = sand.u32 %s28, 1
        %s415 = sand.u32 %s28, 1
        %s416 = smul.addr %s415, 384
        %s417 = scalar_lea.vmem [#allocation4], %s416
        %p418 = pneg %p41
        %p419 = pneg %p38
        %p420 = pneg %p62
        %p421 = pneg %p59
        %p422 = pneg %p83
        %p423 = pneg %p80
        %p424 = pneg %p104
        %p425 = pneg %p101
        %p426 = pneg %p125
        %p427 = pneg %p122
        %p428 = pneg %p146
        %p429 = pneg %p143
        %p430 = pneg %p167
        %p431 = pneg %p164
        %p432 = pneg %p188
        %p433 = pneg %p185
        %p434 = pneg %p209
        %p435 = pneg %p206
        %p436 = pneg %p235
        %p437 = pneg %p232
        %s438 = sand.u32 %s222, 1
        %s439 = sand.u32 %s222, 1
        %s440 = smul.addr %s439, 384
        %s441 = scalar_lea.vmem [#allocation5], %s440
        %s442 = smul.u32 2, %s20
        %s443 = smul.u32 2, %s20
        %v447 = vlaneseq
        %v448 = vshrl.u32 %v447, 7
        %v449 = vadd.s32 %v448, 8
        %v450 = vadd.s32 %v448, 16
        %v451 = vadd.s32 %v448, 24
        %v452 = vadd.s32 %v448, 32
        %v453 = vadd.s32 %v448, 40
        %v454 = vadd.s32 %v448, 48
        %v455 = vadd.s32 %v448, 56
        %v456 = vadd.s32 %v448, 64
        %v457 = vadd.s32 %v448, 72
        %v458 = vadd.s32 %v448, 80
        %v459 = vadd.s32 %v448, 88
        %v460 = vadd.s32 %v448, 96
        %v461 = vadd.s32 %v448, 104
        %v462 = vadd.s32 %v448, 112
        %v463 = vadd.s32 %v448, 120
        %vm464 = vcmp.lt.s32.totalorder %v448, 0
        %v465 = vsub.s32 0, %v448
        %v466 = vsel %vm464, %v465, %v448
        %v467 = vshrl.u32 %v466, 3
        %v468 = vand.u32 %v466, 7
        %v469 = vsub.s32 0, %v468
        %v470 = vsel %vm464, %v469, %v468
        %vm471 = vcmp.lt.s32.totalorder %v449, 0
        %v472 = vsub.s32 0, %v449
        %v473 = vsel %vm471, %v472, %v449
        %v474 = vshrl.u32 %v473, 3
        %v475 = vand.u32 %v473, 7
        %v476 = vsub.s32 0, %v475
        %v477 = vsel %vm471, %v476, %v475
        %vm478 = vcmp.lt.s32.totalorder %v450, 0
        %v479 = vsub.s32 0, %v450
        %v480 = vsel %vm478, %v479, %v450
        %v481 = vshrl.u32 %v480, 3
        %v482 = vand.u32 %v480, 7
        %v483 = vsub.s32 0, %v482
        %v484 = vsel %vm478, %v483, %v482
        %vm485 = vcmp.lt.s32.totalorder %v451, 0
        %v486 = vsub.s32 0, %v451
        %v487 = vsel %vm485, %v486, %v451
        %v488 = vshrl.u32 %v487, 3
        %v489 = vand.u32 %v487, 7
        %v490 = vsub.s32 0, %v489
        %v491 = vsel %vm485, %v490, %v489
        %vm492 = vcmp.lt.s32.totalorder %v452, 0
        %v493 = vsub.s32 0, %v452
        %v494 = vsel %vm492, %v493, %v452
        %v495 = vshrl.u32 %v494, 3
        %v496 = vand.u32 %v494, 7
        %v497 = vsub.s32 0, %v496
        %v498 = vsel %vm492, %v497, %v496
        %vm499 = vcmp.lt.s32.totalorder %v453, 0
        %v500 = vsub.s32 0, %v453
        %v501 = vsel %vm499, %v500, %v453
        %v502 = vshrl.u32 %v501, 3
        %v503 = vand.u32 %v501, 7
        %v504 = vsub.s32 0, %v503
        %v505 = vsel %vm499, %v504, %v503
        %vm506 = vcmp.lt.s32.totalorder %v454, 0
        %v507 = vsub.s32 0, %v454
        %v508 = vsel %vm506, %v507, %v454
        %v509 = vshrl.u32 %v508, 3
        %v510 = vand.u32 %v508, 7
        %v511 = vsub.s32 0, %v510
        %v512 = vsel %vm506, %v511, %v510
        %vm513 = vcmp.lt.s32.totalorder %v455, 0
        %v514 = vsub.s32 0, %v455
        %v515 = vsel %vm513, %v514, %v455
        %v516 = vshrl.u32 %v515, 3
        %v517 = vand.u32 %v515, 7
        %v518 = vsub.s32 0, %v517
        %v519 = vsel %vm513, %v518, %v517
        %vm520 = vcmp.lt.s32.totalorder %v456, 0
        %v521 = vsub.s32 0, %v456
        %v522 = vsel %vm520, %v521, %v456
        %v523 = vshrl.u32 %v522, 3
        %v524 = vand.u32 %v522, 7
        %v525 = vsub.s32 0, %v524
        %v526 = vsel %vm520, %v525, %v524
        %vm527 = vcmp.lt.s32.totalorder %v457, 0
        %v528 = vsub.s32 0, %v457
        %v529 = vsel %vm527, %v528, %v457
        %v530 = vshrl.u32 %v529, 3
        %v531 = vand.u32 %v529, 7
        %v532 = vsub.s32 0, %v531
        %v533 = vsel %vm527, %v532, %v531
        %vm534 = vcmp.lt.s32.totalorder %v458, 0
        %v535 = vsub.s32 0, %v458
        %v536 = vsel %vm534, %v535, %v458
        %v537 = vshrl.u32 %v536, 3
        %v538 = vand.u32 %v536, 7
        %v539 = vsub.s32 0, %v538
        %v540 = vsel %vm534, %v539, %v538
        %vm541 = vcmp.lt.s32.totalorder %v459, 0
        %v542 = vsub.s32 0, %v459
        %v543 = vsel %vm541, %v542, %v459
        %v544 = vshrl.u32 %v543, 3
        %v545 = vand.u32 %v543, 7
        %v546 = vsub.s32 0, %v545
        %v547 = vsel %vm541, %v546, %v545
        %vm548 = vcmp.lt.s32.totalorder %v460, 0
        %v549 = vsub.s32 0, %v460
        %v550 = vsel %vm548, %v549, %v460
        %v551 = vshrl.u32 %v550, 3
        %v552 = vand.u32 %v550, 7
        %v553 = vsub.s32 0, %v552
        %v554 = vsel %vm548, %v553, %v552
        %vm555 = vcmp.lt.s32.totalorder %v461, 0
        %v556 = vsub.s32 0, %v461
        %v557 = vsel %vm555, %v556, %v461
        %v558 = vshrl.u32 %v557, 3
        %v559 = vand.u32 %v557, 7
        %v560 = vsub.s32 0, %v559
        %v561 = vsel %vm555, %v560, %v559
        %vm562 = vcmp.lt.s32.totalorder %v462, 0
        %v563 = vsub.s32 0, %v462
        %v564 = vsel %vm562, %v563, %v462
        %v565 = vshrl.u32 %v564, 3
        %v566 = vand.u32 %v564, 7
        %v567 = vsub.s32 0, %v566
        %v568 = vsel %vm562, %v567, %v566
        %vm569 = vcmp.lt.s32.totalorder %v463, 0
        %v570 = vsub.s32 0, %v463
        %v571 = vsel %vm569, %v570, %v463
        %v572 = vshrl.u32 %v571, 3
        %v573 = vand.u32 %v571, 7
        %v574 = vsub.s32 0, %v573
        %v575 = vsel %vm569, %v574, %v573
        %vm576 = vcmp.ne.s32.totalorder %v470, 0
        %vm577 = vcmp.ne.s32.totalorder %v477, 0
        %vm578 = vcmp.ne.s32.totalorder %v484, 0
        %vm579 = vcmp.ne.s32.totalorder %v491, 0
        %vm580 = vcmp.ne.s32.totalorder %v498, 0
        %vm581 = vcmp.ne.s32.totalorder %v505, 0
        %vm582 = vcmp.ne.s32.totalorder %v512, 0
        %vm583 = vcmp.ne.s32.totalorder %v519, 0
        %vm584 = vcmp.ne.s32.totalorder %v526, 0
        %vm585 = vcmp.ne.s32.totalorder %v533, 0
        %vm586 = vcmp.ne.s32.totalorder %v540, 0
        %vm587 = vcmp.ne.s32.totalorder %v547, 0
        %vm588 = vcmp.ne.s32.totalorder %v554, 0
        %vm589 = vcmp.ne.s32.totalorder %v561, 0
        %vm590 = vcmp.ne.s32.totalorder %v568, 0
        %vm591 = vcmp.ne.s32.totalorder %v575, 0
        %vm592 = vcmp.lt.s32.totalorder %v470, 0
        %vm593 = vcmp.lt.s32.totalorder %v477, 0
        %vm594 = vcmp.lt.s32.totalorder %v484, 0
        %vm595 = vcmp.lt.s32.totalorder %v491, 0
        %vm596 = vcmp.lt.s32.totalorder %v498, 0
        %vm597 = vcmp.lt.s32.totalorder %v505, 0
        %vm598 = vcmp.lt.s32.totalorder %v512, 0
        %vm599 = vcmp.lt.s32.totalorder %v519, 0
        %vm600 = vcmp.lt.s32.totalorder %v526, 0
        %vm601 = vcmp.lt.s32.totalorder %v533, 0
        %vm602 = vcmp.lt.s32.totalorder %v540, 0
        %vm603 = vcmp.lt.s32.totalorder %v547, 0
        %vm604 = vcmp.lt.s32.totalorder %v554, 0
        %vm605 = vcmp.lt.s32.totalorder %v561, 0
        %vm606 = vcmp.lt.s32.totalorder %v568, 0
        %vm607 = vcmp.lt.s32.totalorder %v575, 0
        %vm608 = vmand %vm592, %vm576
        %vm609 = vmand %vm593, %vm577
        %vm610 = vmand %vm594, %vm578
        %vm611 = vmand %vm595, %vm579
        %vm612 = vmand %vm596, %vm580
        %vm613 = vmand %vm597, %vm581
        %vm614 = vmand %vm598, %vm582
        %vm615 = vmand %vm599, %vm583
        %vm616 = vmand %vm600, %vm584
        %vm617 = vmand %vm601, %vm585
        %vm618 = vmand %vm602, %vm586
        %vm619 = vmand %vm603, %vm587
        %vm620 = vmand %vm604, %vm588
        %vm621 = vmand %vm605, %vm589
        %vm622 = vmand %vm606, %vm590
        %vm623 = vmand %vm607, %vm591
        %v624 = vadd.s32 %v470, 8
        %v625 = vadd.s32 %v477, 8
        %v626 = vadd.s32 %v484, 8
        %v627 = vadd.s32 %v491, 8
        %v628 = vadd.s32 %v498, 8
        %v629 = vadd.s32 %v505, 8
        %v630 = vadd.s32 %v512, 8
        %v631 = vadd.s32 %v519, 8
        %v632 = vadd.s32 %v526, 8
        %v633 = vadd.s32 %v533, 8
        %v634 = vadd.s32 %v540, 8
        %v635 = vadd.s32 %v547, 8
        %v636 = vadd.s32 %v554, 8
        %v637 = vadd.s32 %v561, 8
        %v638 = vadd.s32 %v568, 8
        %v639 = vadd.s32 %v575, 8
        %v640 = vsel %vm608, %v624, %v470
        %v641 = vsel %vm609, %v625, %v477
        %v642 = vsel %vm610, %v626, %v484
        %v643 = vsel %vm611, %v627, %v491
        %v644 = vsel %vm612, %v628, %v498
        %v645 = vsel %vm613, %v629, %v505
        %v646 = vsel %vm614, %v630, %v512
        %v647 = vsel %vm615, %v631, %v519
        %v648 = vsel %vm616, %v632, %v526
        %v649 = vsel %vm617, %v633, %v533
        %v650 = vsel %vm618, %v634, %v540
        %v651 = vsel %vm619, %v635, %v547
        %v652 = vsel %vm620, %v636, %v554
        %v653 = vsel %vm621, %v637, %v561
        %v654 = vsel %vm622, %v638, %v568
        %v655 = vsel %vm623, %v639, %v575
        %vm656 = vcmp.eq.s32.totalorder %v640, 0
        %vm657 = vcmp.eq.s32.totalorder %v641, 0
        %vm658 = vcmp.eq.s32.totalorder %v642, 0
        %vm659 = vcmp.eq.s32.totalorder %v643, 0
        %vm660 = vcmp.eq.s32.totalorder %v644, 0
        %vm661 = vcmp.eq.s32.totalorder %v645, 0
        %vm662 = vcmp.eq.s32.totalorder %v646, 0
        %vm663 = vcmp.eq.s32.totalorder %v647, 0
        %vm664 = vcmp.eq.s32.totalorder %v648, 0
        %vm665 = vcmp.eq.s32.totalorder %v649, 0
        %vm666 = vcmp.eq.s32.totalorder %v650, 0
        %vm667 = vcmp.eq.s32.totalorder %v651, 0
        %vm668 = vcmp.eq.s32.totalorder %v652, 0
        %vm669 = vcmp.eq.s32.totalorder %v653, 0
        %vm670 = vcmp.eq.s32.totalorder %v654, 0
        %vm671 = vcmp.eq.s32.totalorder %v655, 0
        %vm672 = vcmp.eq.s32.totalorder %v640, 7
        %vm673 = vcmp.eq.s32.totalorder %v641, 7
        %vm674 = vcmp.eq.s32.totalorder %v642, 7
        %vm675 = vcmp.eq.s32.totalorder %v643, 7
        %vm676 = vcmp.eq.s32.totalorder %v644, 7
        %vm677 = vcmp.eq.s32.totalorder %v645, 7
        %vm678 = vcmp.eq.s32.totalorder %v646, 7
        %vm679 = vcmp.eq.s32.totalorder %v647, 7
        %vm680 = vcmp.eq.s32.totalorder %v648, 7
        %vm681 = vcmp.eq.s32.totalorder %v649, 7
        %vm682 = vcmp.eq.s32.totalorder %v650, 7
        %vm683 = vcmp.eq.s32.totalorder %v651, 7
        %vm684 = vcmp.eq.s32.totalorder %v652, 7
        %vm685 = vcmp.eq.s32.totalorder %v653, 7
        %vm686 = vcmp.eq.s32.totalorder %v654, 7
        %vm687 = vcmp.eq.s32.totalorder %v655, 7
        %v688 = vld [vmem:[%s410] sm:$0xff]
        %v689 = vld [vmem:[%s410 + $0x8] sm:$0xff]
        %v690 = vld [vmem:[%s410 + $0x10] sm:$0xff]
        %v691 = vld [vmem:[%s410 + $0x18] sm:$0xff]
        %v692 = vld [vmem:[%s410 + $0x20] sm:$0xff]
        %v693 = vld [vmem:[%s410 + $0x28] sm:$0xff]
        %v694 = vld [vmem:[%s410 + $0x30] sm:$0xff]
        %v695 = vld [vmem:[%s410 + $0x38] sm:$0xff]
        %v696 = vld [vmem:[%s410 + $0x40] sm:$0xff]
        %v697 = vld [vmem:[%s410 + $0x48] sm:$0xff]
        %v698 = vld [vmem:[%s410 + $0x50] sm:$0xff]
        %v699 = vld [vmem:[%s410 + $0x58] sm:$0xff]
        %v700 = vld [vmem:[%s410 + $0x60] sm:$0xff]
        %v701 = vld [vmem:[%s410 + $0x68] sm:$0xff]
        %v702 = vld [vmem:[%s410 + $0x70] sm:$0xff]
        %v703 = vld [vmem:[%s410 + $0x78] sm:$0xff]
        %v704 = vld [vmem:[%s410 + $0x80] sm:$0xff]
        %v705 = vld [vmem:[%s410 + $0x88] sm:$0xff]
        %v706 = vld [vmem:[%s410 + $0x90] sm:$0xff]
        %v707 = vld [vmem:[%s410 + $0x98] sm:$0xff]
        %v708 = vld [vmem:[%s410 + $0xa0] sm:$0xff]
        %v709 = vld [vmem:[%s410 + $0xa8] sm:$0xff]
        %v710 = vld [vmem:[%s410 + $0xb0] sm:$0xff]
        %v711 = vld [vmem:[%s410 + $0xb8] sm:$0xff]
        %v712 = vld [vmem:[%s410 + $0xc0] sm:$0xff]
        %v713 = vld [vmem:[%s410 + $0xc8] sm:$0xff]
        %v714 = vld [vmem:[%s410 + $0xd0] sm:$0xff]
        %v715 = vld [vmem:[%s410 + $0xd8] sm:$0xff]
        %v716 = vld [vmem:[%s410 + $0xe0] sm:$0xff]
        %v717 = vld [vmem:[%s410 + $0xe8] sm:$0xff]
        %v718 = vld [vmem:[%s410 + $0xf0] sm:$0xff]
        %v719 = vld [vmem:[%s410 + $0xf8] sm:$0xff]
        %v720 = vld [vmem:[%s410 + $0x100] sm:$0xff]
        %v721 = vld [vmem:[%s410 + $0x108] sm:$0xff]
        %v722 = vld [vmem:[%s410 + $0x110] sm:$0xff]
        %v723 = vld [vmem:[%s410 + $0x118] sm:$0xff]
        %v724 = vld [vmem:[%s410 + $0x120] sm:$0xff]
        %v725 = vld [vmem:[%s410 + $0x128] sm:$0xff]
        %v726 = vld [vmem:[%s410 + $0x130] sm:$0xff]
        %v727 = vld [vmem:[%s410 + $0x138] sm:$0xff]
        %v728 = vld [vmem:[%s410 + $0x140] sm:$0xff]
        %v729 = vld [vmem:[%s410 + $0x148] sm:$0xff]
        %v730 = vld [vmem:[%s410 + $0x150] sm:$0xff]
        %v731 = vld [vmem:[%s410 + $0x158] sm:$0xff]
        %v732 = vld [vmem:[%s410 + $0x160] sm:$0xff]
        %v733 = vld [vmem:[%s410 + $0x168] sm:$0xff]
        %v734 = vld [vmem:[%s410 + $0x170] sm:$0xff]
        %v735 = vld [vmem:[%s410 + $0x178] sm:$0xff]
        %v736 = vpack.c.bf16 %v691, %v688
        %v737 = vpack.c.bf16 %v692, %v689
        %v738 = vpack.c.bf16 %v693, %v690
        %v739 = vpack.c.bf16 %v697, %v694
        %v740 = vpack.c.bf16 %v698, %v695
        %v741 = vpack.c.bf16 %v699, %v696
        %v742 = vpack.c.bf16 %v703, %v700
        %v743 = vpack.c.bf16 %v704, %v701
        %v744 = vpack.c.bf16 %v705, %v702
        %v745 = vpack.c.bf16 %v709, %v706
        %v746 = vpack.c.bf16 %v710, %v707
        %v747 = vpack.c.bf16 %v711, %v708
        %v748 = vpack.c.bf16 %v715, %v712
        %v749 = vpack.c.bf16 %v716, %v713
        %v750 = vpack.c.bf16 %v717, %v714
        %v751 = vpack.c.bf16 %v721, %v718
        %v752 = vpack.c.bf16 %v722, %v719
        %v753 = vpack.c.bf16 %v723, %v720
        %v754 = vpack.c.bf16 %v727, %v724
        %v755 = vpack.c.bf16 %v728, %v725
        %v756 = vpack.c.bf16 %v729, %v726
        %v757 = vpack.c.bf16 %v733, %v730
        %v758 = vpack.c.bf16 %v734, %v731
        %v759 = vpack.c.bf16 %v735, %v732
        %v760 = vld [vmem:[%s1] sm:$0xf]
        %v761 = vld [vmem:[%s1 + $0x4] sm:$0xf]
        %v762 = vld [vmem:[%s1 + $0x8] sm:$0xf]
        %v763 = vld [vmem:[%s1 + $0xc] sm:$0xf]
        %v764 = vld [vmem:[%s1 + $0x10] sm:$0xf]
        %v765 = vld [vmem:[%s1 + $0x14] sm:$0xf]
        %v766 = vld [vmem:[%s1 + $0x18] sm:$0xf]
        %v767 = vld [vmem:[%s1 + $0x1c] sm:$0xf]
        %v768 = vld [vmem:[%s1 + $0x20] sm:$0xf]
        %v769 = vld [vmem:[%s1 + $0x24] sm:$0xf]
        %v770 = vld [vmem:[%s1 + $0x28] sm:$0xf]
        %v771 = vld [vmem:[%s1 + $0x2c] sm:$0xf]
        %v772 = vld [vmem:[%s1 + $0x30] sm:$0xf]
        %v773 = vld [vmem:[%s1 + $0x34] sm:$0xf]
        %v774 = vld [vmem:[%s1 + $0x38] sm:$0xf]
        %v775 = vld [vmem:[%s1 + $0x3c] sm:$0xf]
        %v776 = vld [vmem:[%s1 + $0x40] sm:$0xf]
        %v777 = vld [vmem:[%s1 + $0x44] sm:$0xf]
        %v778 = vld [vmem:[%s1 + $0x48] sm:$0xf]
        %v779 = vld [vmem:[%s1 + $0x4c] sm:$0xf]
        %v780 = vld [vmem:[%s1 + $0x50] sm:$0xf]
        %v781 = vld [vmem:[%s1 + $0x54] sm:$0xf]
        %v782 = vld [vmem:[%s1 + $0x58] sm:$0xf]
        %v783 = vld [vmem:[%s1 + $0x5c] sm:$0xf]
        %v784 = vld [vmem:[%s1 + $0x60] sm:$0xf]
        %v785 = vld [vmem:[%s1 + $0x64] sm:$0xf]
        %v786 = vld [vmem:[%s1 + $0x68] sm:$0xf]
        %v787 = vld [vmem:[%s1 + $0x6c] sm:$0xf]
        %v788 = vld [vmem:[%s1 + $0x70] sm:$0xf]
        %v789 = vld [vmem:[%s1 + $0x74] sm:$0xf]
        %v790 = vld [vmem:[%s1 + $0x78] sm:$0xf]
        %v791 = vld [vmem:[%s1 + $0x7c] sm:$0xf]
        %v792 = vld [vmem:[%s1 + $0x80] sm:$0xf]
        %v793 = vld [vmem:[%s1 + $0x84] sm:$0xf]
        %v794 = vld [vmem:[%s1 + $0x88] sm:$0xf]
        %v795 = vld [vmem:[%s1 + $0x8c] sm:$0xf]
        %v796 = vld [vmem:[%s1 + $0x90] sm:$0xf]
        %v797 = vld [vmem:[%s1 + $0x94] sm:$0xf]
        %v798 = vld [vmem:[%s1 + $0x98] sm:$0xf]
        %v799 = vld [vmem:[%s1 + $0x9c] sm:$0xf]
        %v800 = vld [vmem:[%s2] sm:$0x1]
        %v802 = vlaneseq
        %v803 = vshrl.u32 %v802, 7
        %v804 = vsub.s32 0, %v803
        %v805 = vrot.slane %v800, %v804
        %v847 = vunpack.c.l.b16 %v760
        %v848 = vunpack.c.l.b16 %v761
        %v849 = vunpack.c.l.b16 %v762
        %v850 = vunpack.c.l.b16 %v763
        %v851 = vunpack.c.l.b16 %v764
        %v852 = vunpack.c.l.b16 %v765
        %v853 = vunpack.c.l.b16 %v766
        %v854 = vunpack.c.l.b16 %v767
        %v855 = vunpack.c.l.b16 %v768
        %v856 = vunpack.c.l.b16 %v769
        %v857 = vunpack.c.l.b16 %v770
        %v858 = vunpack.c.l.b16 %v771
        %v859 = vunpack.c.l.b16 %v772
        %v860 = vunpack.c.l.b16 %v773
        %v861 = vunpack.c.l.b16 %v774
        %v862 = vunpack.c.l.b16 %v775
        %v863 = vunpack.c.l.b16 %v776
        %v864 = vunpack.c.l.b16 %v777
        %v865 = vunpack.c.l.b16 %v778
        %v866 = vunpack.c.l.b16 %v779
        %v867 = vunpack.c.l.b16 %v780
        %v868 = vunpack.c.l.b16 %v781
        %v869 = vunpack.c.l.b16 %v782
        %v870 = vunpack.c.l.b16 %v783
        %v871 = vunpack.c.l.b16 %v784
        %v872 = vunpack.c.l.b16 %v785
        %v873 = vunpack.c.l.b16 %v786
        %v874 = vunpack.c.l.b16 %v787
        %v875 = vunpack.c.l.b16 %v788
        %v876 = vunpack.c.l.b16 %v789
        %v877 = vunpack.c.l.b16 %v790
        %v878 = vunpack.c.l.b16 %v791
        %v879 = vunpack.c.l.b16 %v792
        %v880 = vunpack.c.l.b16 %v793
        %v881 = vunpack.c.l.b16 %v794
        %v882 = vunpack.c.l.b16 %v795
        %v883 = vunpack.c.l.b16 %v796
        %v884 = vunpack.c.l.b16 %v797
        %v885 = vunpack.c.l.b16 %v798
        %v886 = vunpack.c.l.b16 %v799
        %v887 = vpack.c.b16 %v848, %v847
        %v888 = vpack.c.b16 %v850, %v849
        %v889 = vpack.c.b16 %v852, %v851
        %v890 = vpack.c.b16 %v854, %v853
        %v891 = vpack.c.b16 %v856, %v855
        %v892 = vpack.c.b16 %v858, %v857
        %v893 = vpack.c.b16 %v860, %v859
        %v894 = vpack.c.b16 %v862, %v861
        %v895 = vpack.c.b16 %v864, %v863
        %v896 = vpack.c.b16 %v866, %v865
        %v897 = vpack.c.b16 %v868, %v867
        %v898 = vpack.c.b16 %v870, %v869
        %v899 = vpack.c.b16 %v872, %v871
        %v900 = vpack.c.b16 %v874, %v873
        %v901 = vpack.c.b16 %v876, %v875
        %v902 = vpack.c.b16 %v878, %v877
        %v903 = vpack.c.b16 %v880, %v879
        %v904 = vpack.c.b16 %v882, %v881
        %v905 = vpack.c.b16 %v884, %v883
        %v906 = vpack.c.b16 %v886, %v885
        %vm927 = vcmask 523264
        %v929 = vsel %vm927, %v738, 0
        %v932 = vsel %vm927, %v741, 0
        %v935 = vsel %vm927, %v744, 0
        %v938 = vsel %vm927, %v747, 0
        %v941 = vsel %vm927, %v750, 0
        %v944 = vsel %vm927, %v753, 0
        %v947 = vsel %vm927, %v756, 0
        %v950 = vsel %vm927, %v759, 0
        %952 = vmatprep.subr.bf16.mxu0 0
        %953 = vmatpush1.bf16.msra.mxu0 %v887
        %954 = vmatprep.subr.bf16.mxu0 0
        %955 = vmatpush1.bf16.msra.mxu0 %v888
        %956 = vmatprep.subr.bf16.mxu0 0
        %957 = vmatpush1.bf16.msra.mxu0 %v889
        %958 = vmatprep.subr.bf16.mxu0 0
        %959 = vmatpush1.bf16.msra.mxu0 %v890
        %960 = vmatprep.subr.bf16.mxu0 0
        %961 = vmatpush1.bf16.msra.mxu0 %v891
        %962 = vmatprep.subr.bf16.mxu0 0
        %963 = vmatpush1.bf16.msra.mxu0 %v892
        %964 = vmatprep.subr.bf16.mxu0 0
        %965 = vmatpush1.bf16.msra.mxu0 %v893
        %966 = vmatprep.subr.bf16.mxu0 0
        %967 = vmatpush1.bf16.msra.mxu0 %v894
        %968 = vmatprep.subr.bf16.mxu0 0
        %969 = vmatpush1.bf16.msra.mxu0 %v895
        %970 = vmatprep.subr.bf16.mxu0 0
        %971 = vmatpush1.bf16.msra.mxu0 %v896
        %972 = vmatprep.subr.bf16.mxu0 0
        %973 = vmatpush1.bf16.msra.mxu0 %v897
        %974 = vmatprep.subr.bf16.mxu0 0
        %975 = vmatpush1.bf16.msra.mxu0 %v898
        %976 = vmatprep.subr.bf16.mxu0 0
        %977 = vmatpush1.bf16.msra.mxu0 %v899
        %978 = vmatprep.subr.bf16.mxu0 0
        %979 = vmatpush1.bf16.msra.mxu0 %v900
        %980 = vmatprep.subr.bf16.mxu0 0
        %981 = vmatpush1.bf16.msra.mxu0 %v901
        %982 = vmatprep.subr.bf16.mxu0 0
        %983 = vmatpush1.bf16.msra.mxu0 %v902
        %984 = vmatprep.mubr.bf16.mxu0 %v737
        %985 = vmatmul.mubr.bf16.gmra.mrb[0].mxu0 %v736
        %v986 = vpop.f32.mrb[0].mxu0
        %v987 = vadd.f32 %v805, %v986
        %v988 = vpop.f32.mrb[0].mxu0
        %v989 = vpop.f32.mrb[0].mxu0
        %v990 = vadd.f32 %v805, %v989
        %v991 = vpop.f32.mrb[0].mxu0
        %992 = vmatprep.mubr.bf16.mxu0 %v740
        %993 = vmatmul.mubr.bf16.gmra.mrb[0].mxu0 %v739
        %v994 = vpop.f32.mrb[0].mxu0
        %v995 = vadd.f32 %v805, %v994
        %v996 = vpop.f32.mrb[0].mxu0
        %v997 = vpop.f32.mrb[0].mxu0
        %v998 = vadd.f32 %v805, %v997
        %v999 = vpop.f32.mrb[0].mxu0
        %1000 = vmatprep.mubr.bf16.mxu0 %v743
        %1001 = vmatmul.mubr.bf16.gmra.mrb[0].mxu0 %v742
        %v1002 = vpop.f32.mrb[0].mxu0
        %v1003 = vadd.f32 %v805, %v1002
        %v1004 = vpop.f32.mrb[0].mxu0
        %v1005 = vpop.f32.mrb[0].mxu0
        %v1006 = vadd.f32 %v805, %v1005
        %v1007 = vpop.f32.mrb[0].mxu0
        %1008 = vmatprep.mubr.bf16.mxu0 %v746
        %1009 = vmatmul.mubr.bf16.gmra.mrb[0].mxu0 %v745
        %v1010 = vpop.f32.mrb[0].mxu0
        %v1011 = vadd.f32 %v805, %v1010
        %v1012 = vpop.f32.mrb[0].mxu0
        %v1013 = vpop.f32.mrb[0].mxu0
        %v1014 = vadd.f32 %v805, %v1013
        %v1015 = vpop.f32.mrb[0].mxu0
        %1016 = vmatprep.mubr.bf16.mxu0 %v749
        %1017 = vmatmul.mubr.bf16.gmra.mrb[0].mxu0 %v748
        %v1018 = vpop.f32.mrb[0].mxu0
        %v1019 = vadd.f32 %v805, %v1018
        %v1020 = vpop.f32.mrb[0].mxu0
        %v1021 = vpop.f32.mrb[0].mxu0
        %v1022 = vadd.f32 %v805, %v1021
        %v1023 = vpop.f32.mrb[0].mxu0
        %1024 = vmatprep.mubr.bf16.mxu0 %v752
        %1025 = vmatmul.mubr.bf16.gmra.mrb[0].mxu0 %v751
        %v1026 = vpop.f32.mrb[0].mxu0
        %v1027 = vadd.f32 %v805, %v1026
        %v1028 = vpop.f32.mrb[0].mxu0
        %v1029 = vpop.f32.mrb[0].mxu0
        %v1030 = vadd.f32 %v805, %v1029
        %v1031 = vpop.f32.mrb[0].mxu0
        %1032 = vmatprep.mubr.bf16.mxu0 %v755
        %1033 = vmatmul.mubr.bf16.gmra.mrb[0].mxu0 %v754
        %v1034 = vpop.f32.mrb[0].mxu0
        %v1035 = vadd.f32 %v805, %v1034
        %v1036 = vpop.f32.mrb[0].mxu0
        %v1037 = vpop.f32.mrb[0].mxu0
        %v1038 = vadd.f32 %v805, %v1037
        %v1039 = vpop.f32.mrb[0].mxu0
        %1040 = vmatprep.mubr.bf16.mxu0 %v758
        %1041 = vmatmul.mubr.bf16.gmra.mrb[0].mxu0 %v757
        %v1042 = vpop.f32.mrb[0].mxu0
        %v1043 = vadd.f32 %v805, %v1042
        %v1044 = vpop.f32.mrb[0].mxu0
        %v1045 = vpop.f32.mrb[0].mxu0
        %v1046 = vadd.f32 %v805, %v1045
        %v1047 = vpop.f32.mrb[0].mxu0
        %1048 = vdwg.mxu0
        %1049 = vmatprep.subr.bf16.mxu0 0
        %1050 = vmatpush1.bf16.msra.mxu0 %v903
        %1051 = vmatprep.subr.bf16.mxu0 0
        %1052 = vmatpush1.bf16.msra.mxu0 %v904
        %1053 = vmatprep.subr.bf16.mxu0 0
        %1054 = vmatpush1.bf16.msra.mxu0 %v905
        %1055 = vmatprep.subr.bf16.mxu0 0
        %1056 = vmatpush1.bf16.msra.mxu0 %v906
        %1057 = vmatprep.subr.bf16.mxu0 0
        %1058 = vmatpush1.bf16.msra.mxu0 0
        %1059 = vmatprep.subr.bf16.mxu0 0
        %1060 = vmatpush1.bf16.msra.mxu0 0
        %1061 = vmatprep.subr.bf16.mxu0 0
        %1062 = vmatpush1.bf16.msra.mxu0 0
        %1063 = vmatprep.subr.bf16.mxu0 0
        %1064 = vmatpush1.bf16.msra.mxu0 0
        %1065 = vmatprep.subr.bf16.mxu0 0
        %1066 = vmatpush1.bf16.msra.mxu0 0
        %1067 = vmatprep.subr.bf16.mxu0 0
        %1068 = vmatpush1.bf16.msra.mxu0 0
        %1069 = vmatprep.subr.bf16.mxu0 0
        %1070 = vmatpush1.bf16.msra.mxu0 0
        %1071 = vmatprep.subr.bf16.mxu0 0
        %1072 = vmatpush1.bf16.msra.mxu0 0
        %1073 = vmatprep.subr.bf16.mxu0 0
        %1074 = vmatpush1.bf16.msra.mxu0 0
        %1075 = vmatprep.subr.bf16.mxu0 0
        %1076 = vmatpush1.bf16.msra.mxu0 0
        %1077 = vmatprep.subr.bf16.mxu0 0
        %1078 = vmatpush1.bf16.msra.mxu0 0
        %1079 = vmatprep.subr.bf16.mxu0 0
        %1080 = vmatpush1.bf16.msra.mxu0 0
        %1081 = vmatprep.mubr.bf16.mxu0 0
        %1082 = vmatmul.mubr.bf16.gmra.mrb[0].mxu0 %v929
        %v1083 = vpop.f32.mrb[0].mxu0
        %v1084 = vadd.f32 %v987, %v1083
        %v1085 = vpop.f32.mrb[0].mxu0
        %v1086 = vpop.f32.mrb[0].mxu0
        %v1087 = vadd.f32 %v990, %v1086
        %v1088 = vpop.f32.mrb[0].mxu0
        %1089 = vmatprep.mubr.bf16.mxu0 0
        %1090 = vmatmul.mubr.bf16.gmra.mrb[0].mxu0 %v932
        %v1091 = vpop.f32.mrb[0].mxu0
        %v1092 = vadd.f32 %v995, %v1091
        %v1093 = vpop.f32.mrb[0].mxu0
        %v1094 = vpop.f32.mrb[0].mxu0
        %v1095 = vadd.f32 %v998, %v1094
        %v1096 = vpop.f32.mrb[0].mxu0
        %1097 = vmatprep.mubr.bf16.mxu0 0
        %1098 = vmatmul.mubr.bf16.gmra.mrb[0].mxu0 %v935
        %v1099 = vpop.f32.mrb[0].mxu0
        %v1100 = vadd.f32 %v1003, %v1099
        %v1101 = vpop.f32.mrb[0].mxu0
        %v1102 = vpop.f32.mrb[0].mxu0
        %v1103 = vadd.f32 %v1006, %v1102
        %v1104 = vpop.f32.mrb[0].mxu0
        %1105 = vmatprep.mubr.bf16.mxu0 0
        %1106 = vmatmul.mubr.bf16.gmra.mrb[0].mxu0 %v938
        %v1107 = vpop.f32.mrb[0].mxu0
        %v1108 = vadd.f32 %v1011, %v1107
        %v1109 = vpop.f32.mrb[0].mxu0
        %v1110 = vpop.f32.mrb[0].mxu0
        %v1111 = vadd.f32 %v1014, %v1110
        %v1112 = vpop.f32.mrb[0].mxu0
        %1113 = vmatprep.mubr.bf16.mxu0 0
        %1114 = vmatmul.mubr.bf16.gmra.mrb[0].mxu0 %v941
        %v1115 = vpop.f32.mrb[0].mxu0
        %v1116 = vadd.f32 %v1019, %v1115
        %v1117 = vpop.f32.mrb[0].mxu0
        %v1118 = vpop.f32.mrb[0].mxu0
        %v1119 = vadd.f32 %v1022, %v1118
        %v1120 = vpop.f32.mrb[0].mxu0
        %1121 = vmatprep.mubr.bf16.mxu0 0
        %1122 = vmatmul.mubr.bf16.gmra.mrb[0].mxu0 %v944
        %v1123 = vpop.f32.mrb[0].mxu0
        %v1124 = vadd.f32 %v1027, %v1123
        %v1125 = vpop.f32.mrb[0].mxu0
        %v1126 = vpop.f32.mrb[0].mxu0
        %v1127 = vadd.f32 %v1030, %v1126
        %v1128 = vpop.f32.mrb[0].mxu0
        %1129 = vmatprep.mubr.bf16.mxu0 0
        %1130 = vmatmul.mubr.bf16.gmra.mrb[0].mxu0 %v947
        %v1131 = vpop.f32.mrb[0].mxu0
        %v1132 = vadd.f32 %v1035, %v1131
        %v1133 = vpop.f32.mrb[0].mxu0
        %v1134 = vpop.f32.mrb[0].mxu0
        %v1135 = vadd.f32 %v1038, %v1134
        %v1136 = vpop.f32.mrb[0].mxu0
        %1137 = vmatprep.mubr.bf16.mxu0 0
        %1138 = vmatmul.mubr.bf16.gmra.mrb[0].mxu0 %v950
        %v1139 = vpop.f32.mrb[0].mxu0
        %v1140 = vadd.f32 %v1043, %v1139
        %v1141 = vpop.f32.mrb[0].mxu0
        %v1142 = vpop.f32.mrb[0].mxu0
        %v1143 = vadd.f32 %v1046, %v1142
        %v1144 = vpop.f32.mrb[0].mxu0
        %1145 = vdwg.mxu0
        %v1146 = vmax.f32 %v1084, 0.0
        %v1147 = vmax.f32 %v1087, 0.0
        %v1148 = vmax.f32 %v1092, 0.0
        %v1149 = vmax.f32 %v1095, 0.0
        %v1150 = vmax.f32 %v1100, 0.0
        %v1151 = vmax.f32 %v1103, 0.0
        %v1152 = vmax.f32 %v1108, 0.0
        %v1153 = vmax.f32 %v1111, 0.0
        %v1154 = vmax.f32 %v1116, 0.0
        %v1155 = vmax.f32 %v1119, 0.0
        %v1156 = vmax.f32 %v1124, 0.0
        %v1157 = vmax.f32 %v1127, 0.0
        %v1158 = vmax.f32 %v1132, 0.0
        %v1159 = vmax.f32 %v1135, 0.0
        %v1160 = vmax.f32 %v1140, 0.0
        %v1161 = vmax.f32 %v1143, 0.0
        %v1162 = vpack.c.bf16 %v1147, %v1146
        %v1163 = vpack.c.bf16 %v1149, %v1148
        %v1164 = vpack.c.bf16 %v1151, %v1150
        %v1165 = vpack.c.bf16 %v1153, %v1152
        %v1166 = vpack.c.bf16 %v1155, %v1154
        %v1167 = vpack.c.bf16 %v1157, %v1156
        %v1168 = vpack.c.bf16 %v1159, %v1158
        %v1169 = vpack.c.bf16 %v1161, %v1160
        %1170 = vst [vmem:[#allocation2] sm:$0xff] 0
        %1171 = vst.msk [vmem:[#allocation2 + $0x8] sm:$0xff] %vm927, 0
        %1172 = vst [vmem:[#allocation2 + $0x90] sm:$0xff] 0
        %1173 = vst.msk [vmem:[#allocation2 + $0x98] sm:$0xff] %vm927, 0
        %1182 = vrot.lane.b32.xlu0 %v1162, 64
        %v1183 = vpop.permute.xlu0 %1182
        %1184 = vrot.lane.b32.xlu0 %v1163, 64
        %v1185 = vpop.permute.xlu0 %1184
        %1186 = vrot.lane.b32.xlu0 %v1164, 64
        %v1187 = vpop.permute.xlu0 %1186
        %1188 = vrot.lane.b32.xlu0 %v1165, 64
        %v1189 = vpop.permute.xlu0 %1188
        %1190 = vrot.lane.b32.xlu0 %v1166, 64
        %v1191 = vpop.permute.xlu0 %1190
        %1192 = vrot.lane.b32.xlu0 %v1167, 64
        %v1193 = vpop.permute.xlu0 %1192
        %1194 = vrot.lane.b32.xlu0 %v1168, 64
        %v1195 = vpop.permute.xlu0 %1194
        %1196 = vrot.lane.b32.xlu0 %v1169, 64
        %v1197 = vpop.permute.xlu0 %1196
        %vm1206 = vcmask 1048064
        %1207 = vst.msk [vmem:[#allocation2 + $0x10] sm:$0xff] %vm1206, %v1183
        %1208 = vst.msk [vmem:[#allocation2 + $0x20] sm:$0xff] %vm1206, %v1185
        %1209 = vst.msk [vmem:[#allocation2 + $0x30] sm:$0xff] %vm1206, %v1187
        %1210 = vst.msk [vmem:[#allocation2 + $0x40] sm:$0xff] %vm1206, %v1189
        %1211 = vst.msk [vmem:[#allocation2 + $0x50] sm:$0xff] %vm1206, %v1191
        %1212 = vst.msk [vmem:[#allocation2 + $0x60] sm:$0xff] %vm1206, %v1193
        %1213 = vst.msk [vmem:[#allocation2 + $0x70] sm:$0xff] %vm1206, %v1195
        %1214 = vst.msk [vmem:[#allocation2 + $0x80] sm:$0xff] %vm1206, %v1197
        %vm1215 = vsmask.f32 256
        %v1217 = vshrl.u32 %v1162, 16
        %v1219 = vrot.slane %v1217, 7
        %v1220 = vshll.u32 %v1162, 16
        %v1222 = vor.u32 %v1219, %v1220
        %v1224 = vshrl.u32 %v1163, 16
        %v1226 = vrot.slane %v1224, 7
        %v1227 = vshll.u32 %v1163, 16
        %v1229 = vor.u32 %v1226, %v1227
        %v1230 = vsel %vm1215, %v1219, %v1229
        %v1232 = vshrl.u32 %v1164, 16
        %v1234 = vrot.slane %v1232, 7
        %v1235 = vshll.u32 %v1164, 16
        %v1237 = vor.u32 %v1234, %v1235
        %v1238 = vsel %vm1215, %v1226, %v1237
        %v1240 = vshrl.u32 %v1165, 16
        %v1242 = vrot.slane %v1240, 7
        %v1243 = vshll.u32 %v1165, 16
        %v1245 = vor.u32 %v1242, %v1243
        %v1246 = vsel %vm1215, %v1234, %v1245
        %v1248 = vshrl.u32 %v1166, 16
        %v1250 = vrot.slane %v1248, 7
        %v1251 = vshll.u32 %v1166, 16
        %v1253 = vor.u32 %v1250, %v1251
        %v1254 = vsel %vm1215, %v1242, %v1253
        %v1256 = vshrl.u32 %v1167, 16
        %v1258 = vrot.slane %v1256, 7
        %v1259 = vshll.u32 %v1167, 16
        %v1261 = vor.u32 %v1258, %v1259
        %v1262 = vsel %vm1215, %v1250, %v1261
        %v1264 = vshrl.u32 %v1168, 16
        %v1266 = vrot.slane %v1264, 7
        %v1267 = vshll.u32 %v1168, 16
        %v1269 = vor.u32 %v1266, %v1267
        %v1270 = vsel %vm1215, %v1258, %v1269
        %v1272 = vshrl.u32 %v1169, 16
        %v1274 = vrot.slane %v1272, 7
        %v1275 = vshll.u32 %v1169, 16
        %v1277 = vor.u32 %v1274, %v1275
        %v1278 = vsel %vm1215, %v1266, %v1277
        %vm1287 = vcmask 1040384
        %vm1288 = vmand %vm1287, %vm1215
        %v1289 = vsel %vm1288, 0, %v1222
        %v1290 = vsel %vm656, 1, 0
        %v1291 = vsel %vm657, 1, 0
        %v1292 = vsel %vm658, 1, 0
        %v1293 = vsel %vm659, 1, 0
        %v1294 = vsel %vm660, 1, 0
        %v1295 = vsel %vm661, 1, 0
        %v1296 = vsel %vm662, 1, 0
        %v1297 = vsel %vm663, 1, 0
        %v1298 = vsel %vm664, 1, 0
        %v1299 = vsel %vm665, 1, 0
        %v1300 = vsel %vm666, 1, 0
        %v1301 = vsel %vm667, 1, 0
        %v1302 = vsel %vm668, 1, 0
        %v1303 = vsel %vm669, 1, 0
        %v1304 = vsel %vm670, 1, 0
        %v1305 = vsel %vm671, 1, 0
        %vm1306 = vcmp.eq.s32.totalorder %v1290, 1
        %vm1307 = vcmp.eq.s32.totalorder %v1291, 1
        %vm1308 = vcmp.eq.s32.totalorder %v1292, 1
        %vm1309 = vcmp.eq.s32.totalorder %v1293, 1
        %vm1310 = vcmp.eq.s32.totalorder %v1294, 1
        %vm1311 = vcmp.eq.s32.totalorder %v1295, 1
        %vm1312 = vcmp.eq.s32.totalorder %v1296, 1
        %vm1313 = vcmp.eq.s32.totalorder %v1297, 1
        %vm1314 = vcmp.eq.s32.totalorder %v1298, 1
        %vm1315 = vcmp.eq.s32.totalorder %v1299, 1
        %vm1316 = vcmp.eq.s32.totalorder %v1300, 1
        %vm1317 = vcmp.eq.s32.totalorder %v1301, 1
        %vm1318 = vcmp.eq.s32.totalorder %v1302, 1
        %vm1319 = vcmp.eq.s32.totalorder %v1303, 1
        %vm1320 = vcmp.eq.s32.totalorder %v1304, 1
        %vm1321 = vcmp.eq.s32.totalorder %v1305, 1
        %vm1322 = vmpackc.low %vm1306, %vm1306
        %vm1323 = vmpackc.low %vm1307, %vm1307
        %vm1324 = vmpackc.low %vm1308, %vm1308
        %vm1325 = vmpackc.low %vm1309, %vm1309
        %vm1326 = vmpackc.low %vm1310, %vm1310
        %vm1327 = vmpackc.low %vm1311, %vm1311
        %vm1328 = vmpackc.low %vm1312, %vm1312
        %vm1329 = vmpackc.low %vm1313, %vm1313
        %vm1330 = vmpackc.low %vm1314, %vm1314
        %vm1331 = vmpackc.low %vm1315, %vm1315
        %vm1332 = vmpackc.low %vm1316, %vm1316
        %vm1333 = vmpackc.low %vm1317, %vm1317
        %vm1334 = vmpackc.low %vm1318, %vm1318
        %vm1335 = vmpackc.low %vm1319, %vm1319
        %vm1336 = vmpackc.low %vm1320, %vm1320
        %vm1337 = vmpackc.low %vm1321, %vm1321
        %v1338 = vsel %vm1322, 65537, 0
        %v1339 = vsel %vm1323, 65537, 0
        %v1340 = vsel %vm1324, 65537, 0
        %v1341 = vsel %vm1325, 65537, 0
        %v1342 = vsel %vm1326, 65537, 0
        %v1343 = vsel %vm1327, 65537, 0
        %v1344 = vsel %vm1328, 65537, 0
        %v1345 = vsel %vm1329, 65537, 0
        %v1346 = vsel %vm1330, 65537, 0
        %v1347 = vsel %vm1331, 65537, 0
        %v1348 = vsel %vm1332, 65537, 0
        %v1349 = vsel %vm1333, 65537, 0
        %v1350 = vsel %vm1334, 65537, 0
        %v1351 = vsel %vm1335, 65537, 0
        %v1352 = vsel %vm1336, 65537, 0
        %v1353 = vsel %vm1337, 65537, 0
        %v1354 = vunpack.c.l.b16 %v1338
        %v1355 = vunpack.c.l.b16 %v1339
        %v1356 = vunpack.c.l.b16 %v1340
        %v1357 = vunpack.c.l.b16 %v1341
        %v1358 = vunpack.c.l.b16 %v1342
        %v1359 = vunpack.c.l.b16 %v1343
        %v1360 = vunpack.c.l.b16 %v1344
        %v1361 = vunpack.c.l.b16 %v1345
        %v1362 = vunpack.c.l.b16 %v1346
        %v1363 = vunpack.c.l.b16 %v1347
        %v1364 = vunpack.c.l.b16 %v1348
        %v1365 = vunpack.c.l.b16 %v1349
        %v1366 = vunpack.c.l.b16 %v1350
        %v1367 = vunpack.c.l.b16 %v1351
        %v1368 = vunpack.c.l.b16 %v1352
        %v1369 = vunpack.c.l.b16 %v1353
        %v1370 = vpack.c.b16 %v1355, %v1354
        %v1371 = vpack.c.b16 %v1357, %v1356
        %v1372 = vpack.c.b16 %v1359, %v1358
        %v1373 = vpack.c.b16 %v1361, %v1360
        %v1374 = vpack.c.b16 %v1363, %v1362
        %v1375 = vpack.c.b16 %v1365, %v1364
        %v1376 = vpack.c.b16 %v1367, %v1366
        %v1377 = vpack.c.b16 %v1369, %v1368
        %vm1378 = vcmp.ne.s16.totalorder %v1370, 0
        %vm1379 = vcmp.ne.s16.totalorder %v1371, 0
        %vm1380 = vcmp.ne.s16.totalorder %v1372, 0
        %vm1381 = vcmp.ne.s16.totalorder %v1373, 0
        %vm1382 = vcmp.ne.s16.totalorder %v1374, 0
        %vm1383 = vcmp.ne.s16.totalorder %v1375, 0
        %vm1384 = vcmp.ne.s16.totalorder %v1376, 0
        %vm1385 = vcmp.ne.s16.totalorder %v1377, 0
        %v1386 = vsel %vm1378, 0, %v1289
        %v1387 = vsel %vm1379, 0, %v1230
        %v1388 = vsel %vm1380, 0, %v1238
        %v1389 = vsel %vm1381, 0, %v1246
        %v1390 = vsel %vm1382, 0, %v1254
        %v1391 = vsel %vm1383, 0, %v1262
        %v1392 = vsel %vm1384, 0, %v1270
        %v1393 = vsel %vm1385, 0, %v1278
        %1394 = vst.msk [vmem:[#allocation2 + $0x10] sm:$0xff] %vm927, %v1386
        %1395 = vst.msk [vmem:[#allocation2 + $0x20] sm:$0xff] %vm927, %v1387
        %1396 = vst.msk [vmem:[#allocation2 + $0x30] sm:$0xff] %vm927, %v1388
        %1397 = vst.msk [vmem:[#allocation2 + $0x40] sm:$0xff] %vm927, %v1389
        %1398 = vst.msk [vmem:[#allocation2 + $0x50] sm:$0xff] %vm927, %v1390
        %1399 = vst.msk [vmem:[#allocation2 + $0x60] sm:$0xff] %vm927, %v1391
        %1400 = vst.msk [vmem:[#allocation2 + $0x70] sm:$0xff] %vm927, %v1392
        %1401 = vst.msk [vmem:[#allocation2 + $0x80] sm:$0xff] %vm927, %v1393
        %vm1402 = vsmask.f32 7424
        %v1403 = vrot.slane %v1220, 1
        %v1404 = vor.u32 %v1217, %v1403
        %v1405 = vrot.slane %v1227, 1
        %v1406 = vsel %vm1402, %v1404, %v1405
        %v1407 = vor.u32 %v1224, %v1405
        %v1408 = vrot.slane %v1235, 1
        %v1409 = vsel %vm1402, %v1407, %v1408
        %v1410 = vor.u32 %v1232, %v1408
        %v1411 = vrot.slane %v1243, 1
        %v1412 = vsel %vm1402, %v1410, %v1411
        %v1413 = vor.u32 %v1240, %v1411
        %v1414 = vrot.slane %v1251, 1
        %v1415 = vsel %vm1402, %v1413, %v1414
        %v1416 = vor.u32 %v1248, %v1414
        %v1417 = vrot.slane %v1259, 1
        %v1418 = vsel %vm1402, %v1416, %v1417
        %v1419 = vor.u32 %v1256, %v1417
        %v1420 = vrot.slane %v1267, 1
        %v1421 = vsel %vm1402, %v1419, %v1420
        %v1422 = vor.u32 %v1264, %v1420
        %v1423 = vrot.slane %v1275, 1
        %v1424 = vsel %vm1402, %v1422, %v1423
        %v1425 = vor.u32 %v1272, %v1423
        %vm1434 = vcmask 1047552
        %vm1435 = vmand %vm1434, %vm1402
        %v1436 = vsel %vm1435, %v1425, 0
        %v1437 = vsel %vm672, 1, 0
        %v1438 = vsel %vm673, 1, 0
        %v1439 = vsel %vm674, 1, 0
        %v1440 = vsel %vm675, 1, 0
        %v1441 = vsel %vm676, 1, 0
        %v1442 = vsel %vm677, 1, 0
        %v1443 = vsel %vm678, 1, 0
        %v1444 = vsel %vm679, 1, 0
        %v1445 = vsel %vm680, 1, 0
        %v1446 = vsel %vm681, 1, 0
        %v1447 = vsel %vm682, 1, 0
        %v1448 = vsel %vm683, 1, 0
        %v1449 = vsel %vm684, 1, 0
        %v1450 = vsel %vm685, 1, 0
        %v1451 = vsel %vm686, 1, 0
        %v1452 = vsel %vm687, 1, 0
        %vm1453 = vcmp.eq.s32.totalorder %v1437, 1
        %vm1454 = vcmp.eq.s32.totalorder %v1438, 1
        %vm1455 = vcmp.eq.s32.totalorder %v1439, 1
        %vm1456 = vcmp.eq.s32.totalorder %v1440, 1
        %vm1457 = vcmp.eq.s32.totalorder %v1441, 1
        %vm1458 = vcmp.eq.s32.totalorder %v1442, 1
        %vm1459 = vcmp.eq.s32.totalorder %v1443, 1
        %vm1460 = vcmp.eq.s32.totalorder %v1444, 1
        %vm1461 = vcmp.eq.s32.totalorder %v1445, 1
        %vm1462 = vcmp.eq.s32.totalorder %v1446, 1
        %vm1463 = vcmp.eq.s32.totalorder %v1447, 1
        %vm1464 = vcmp.eq.s32.totalorder %v1448, 1
        %vm1465 = vcmp.eq.s32.totalorder %v1449, 1
        %vm1466 = vcmp.eq.s32.totalorder %v1450, 1
        %vm1467 = vcmp.eq.s32.totalorder %v1451, 1
        %vm1468 = vcmp.eq.s32.totalorder %v1452, 1
        %vm1469 = vmpackc.low %vm1453, %vm1453
        %vm1470 = vmpackc.low %vm1454, %vm1454
        %vm1471 = vmpackc.low %vm1455, %vm1455
        %vm1472 = vmpackc.low %vm1456, %vm1456
        %vm1473 = vmpackc.low %vm1457, %vm1457
        %vm1474 = vmpackc.low %vm1458, %vm1458
        %vm1475 = vmpackc.low %vm1459, %vm1459
        %vm1476 = vmpackc.low %vm1460, %vm1460
        %vm1477 = vmpackc.low %vm1461, %vm1461
        %vm1478 = vmpackc.low %vm1462, %vm1462
        %vm1479 = vmpackc.low %vm1463, %vm1463
        %vm1480 = vmpackc.low %vm1464, %vm1464
        %vm1481 = vmpackc.low %vm1465, %vm1465
        %vm1482 = vmpackc.low %vm1466, %vm1466
        %vm1483 = vmpackc.low %vm1467, %vm1467
        %vm1484 = vmpackc.low %vm1468, %vm1468
        %v1485 = vsel %vm1469, 65537, 0
        %v1486 = vsel %vm1470, 65537, 0
        %v1487 = vsel %vm1471, 65537, 0
        %v1488 = vsel %vm1472, 65537, 0
        %v1489 = vsel %vm1473, 65537, 0
        %v1490 = vsel %vm1474, 65537, 0
        %v1491 = vsel %vm1475, 65537, 0
        %v1492 = vsel %vm1476, 65537, 0
        %v1493 = vsel %vm1477, 65537, 0
        %v1494 = vsel %vm1478, 65537, 0
        %v1495 = vsel %vm1479, 65537, 0
        %v1496 = vsel %vm1480, 65537, 0
        %v1497 = vsel %vm1481, 65537, 0
        %v1498 = vsel %vm1482, 65537, 0
        %v1499 = vsel %vm1483, 65537, 0
        %v1500 = vsel %vm1484, 65537, 0
        %v1501 = vunpack.c.l.b16 %v1485
        %v1502 = vunpack.c.l.b16 %v1486
        %v1503 = vunpack.c.l.b16 %v1487
        %v1504 = vunpack.c.l.b16 %v1488
        %v1505 = vunpack.c.l.b16 %v1489
        %v1506 = vunpack.c.l.b16 %v1490
        %v1507 = vunpack.c.l.b16 %v1491
        %v1508 = vunpack.c.l.b16 %v1492
        %v1509 = vunpack.c.l.b16 %v1493
        %v1510 = vunpack.c.l.b16 %v1494
        %v1511 = vunpack.c.l.b16 %v1495
        %v1512 = vunpack.c.l.b16 %v1496
        %v1513 = vunpack.c.l.b16 %v1497
        %v1514 = vunpack.c.l.b16 %v1498
        %v1515 = vunpack.c.l.b16 %v1499
        %v1516 = vunpack.c.l.b16 %v1500
        %v1517 = vpack.c.b16 %v1502, %v1501
        %v1518 = vpack.c.b16 %v1504, %v1503
        %v1519 = vpack.c.b16 %v1506, %v1505
        %v1520 = vpack.c.b16 %v1508, %v1507
        %v1521 = vpack.c.b16 %v1510, %v1509
        %v1522 = vpack.c.b16 %v1512, %v1511
        %v1523 = vpack.c.b16 %v1514, %v1513
        %v1524 = vpack.c.b16 %v1516, %v1515
        %vm1525 = vcmp.ne.s16.totalorder %v1517, 0
        %vm1526 = vcmp.ne.s16.totalorder %v1518, 0
        %vm1527 = vcmp.ne.s16.totalorder %v1519, 0
        %vm1528 = vcmp.ne.s16.totalorder %v1520, 0
        %vm1529 = vcmp.ne.s16.totalorder %v1521, 0
        %vm1530 = vcmp.ne.s16.totalorder %v1522, 0
        %vm1531 = vcmp.ne.s16.totalorder %v1523, 0
        %vm1532 = vcmp.ne.s16.totalorder %v1524, 0
        %v1533 = vsel %vm1525, 0, %v1406
        %v1534 = vsel %vm1526, 0, %v1409
        %v1535 = vsel %vm1527, 0, %v1412
        %v1536 = vsel %vm1528, 0, %v1415
        %v1537 = vsel %vm1529, 0, %v1418
        %v1538 = vsel %vm1530, 0, %v1421
        %v1539 = vsel %vm1531, 0, %v1424
        %v1540 = vsel %vm1532, 0, %v1436
        %1541 = vst.msk [vmem:[#allocation2 + $0x18] sm:$0xff] %vm927, %v1533
        %1542 = vst.msk [vmem:[#allocation2 + $0x28] sm:$0xff] %vm927, %v1534
        %1543 = vst.msk [vmem:[#allocation2 + $0x38] sm:$0xff] %vm927, %v1535
        %1544 = vst.msk [vmem:[#allocation2 + $0x48] sm:$0xff] %vm927, %v1536
        %1545 = vst.msk [vmem:[#allocation2 + $0x58] sm:$0xff] %vm927, %v1537
        %1546 = vst.msk [vmem:[#allocation2 + $0x68] sm:$0xff] %vm927, %v1538
        %1547 = vst.msk [vmem:[#allocation2 + $0x78] sm:$0xff] %vm927, %v1539
        %1548 = vst.msk [vmem:[#allocation2 + $0x88] sm:$0xff] %vm927, %v1540
        %v1549 = vld [vmem:[#allocation2] sm:$0xff]
        %v1550 = vld [vmem:[#allocation2 + $0x8] sm:$0xff]
        %v1551 = vld [vmem:[#allocation2 + $0x10] sm:$0xff]
        %v1552 = vld [vmem:[#allocation2 + $0x18] sm:$0xff]
        %v1553 = vld [vmem:[#allocation2 + $0x20] sm:$0xff]
        %v1554 = vld [vmem:[#allocation2 + $0x28] sm:$0xff]
        %v1555 = vld [vmem:[#allocation2 + $0x30] sm:$0xff]
        %v1556 = vld [vmem:[#allocation2 + $0x38] sm:$0xff]
        %v1557 = vld [vmem:[#allocation2 + $0x40] sm:$0xff]
        %v1558 = vld [vmem:[#allocation2 + $0x48] sm:$0xff]
        %v1559 = vld [vmem:[#allocation2 + $0x50] sm:$0xff]
        %v1560 = vld [vmem:[#allocation2 + $0x58] sm:$0xff]
        %v1561 = vld [vmem:[#allocation2 + $0x60] sm:$0xff]
        %v1562 = vld [vmem:[#allocation2 + $0x68] sm:$0xff]
        %v1563 = vld [vmem:[#allocation2 + $0x70] sm:$0xff]
        %v1564 = vld [vmem:[#allocation2 + $0x78] sm:$0xff]
        %v1565 = vld [vmem:[%s3] sm:$0xf]
        %v1566 = vld [vmem:[%s3 + $0x4] sm:$0xf]
        %v1567 = vld [vmem:[%s3 + $0x8] sm:$0xf]
        %v1568 = vld [vmem:[%s3 + $0xc] sm:$0xf]
        %v1569 = vld [vmem:[%s3 + $0x10] sm:$0xf]
        %v1570 = vld [vmem:[%s3 + $0x14] sm:$0xf]
        %v1571 = vld [vmem:[%s3 + $0x18] sm:$0xf]
        %v1572 = vld [vmem:[%s3 + $0x1c] sm:$0xf]
        %v1573 = vld [vmem:[%s3 + $0x20] sm:$0xf]
        %v1574 = vld [vmem:[%s3 + $0x24] sm:$0xf]
        %v1575 = vld [vmem:[%s3 + $0x28] sm:$0xf]
        %v1576 = vld [vmem:[%s3 + $0x2c] sm:$0xf]
        %v1577 = vld [vmem:[%s3 + $0x30] sm:$0xf]
        %v1578 = vld [vmem:[%s3 + $0x34] sm:$0xf]
        %v1579 = vld [vmem:[%s3 + $0x38] sm:$0xf]
        %v1580 = vld [vmem:[%s3 + $0x3c] sm:$0xf]
        %v1581 = vld [vmem:[%s3 + $0x40] sm:$0xf]
        %v1582 = vld [vmem:[%s3 + $0x44] sm:$0xf]
        %v1583 = vld [vmem:[%s3 + $0x48] sm:$0xf]
        %v1584 = vld [vmem:[%s3 + $0x4c] sm:$0xf]
        %v1585 = vld [vmem:[%s3 + $0x50] sm:$0xf]
        %v1586 = vld [vmem:[%s3 + $0x54] sm:$0xf]
        %v1587 = vld [vmem:[%s3 + $0x58] sm:$0xf]
        %v1588 = vld [vmem:[%s3 + $0x5c] sm:$0xf]
        %v1589 = vld [vmem:[#allocation2 + $0x80] sm:$0xff]
        %v1590 = vld [vmem:[#allocation2 + $0x88] sm:$0xff]
        %s1591 = scalar_lea.vmem %s3, 96
        %v1592 = vld [vmem:[%s1591] sm:$0xf]
        %v1593 = vld [vmem:[%s1591 + $0x4] sm:$0xf]
        %v1594 = vld [vmem:[%s1591 + $0x8] sm:$0xf]
        %v1595 = vld [vmem:[%s1591 + $0xc] sm:$0xf]
        %v1596 = vld [vmem:[%s1591 + $0x10] sm:$0xf]
        %v1597 = vld [vmem:[%s1591 + $0x14] sm:$0xf]
        %v1598 = vld [vmem:[%s1591 + $0x18] sm:$0xf]
        %v1599 = vld [vmem:[%s1591 + $0x1c] sm:$0xf]
        %v1600 = vld [vmem:[%s1591 + $0x20] sm:$0xf]
        %v1601 = vld [vmem:[%s1591 + $0x24] sm:$0xf]
        %v1602 = vld [vmem:[%s1591 + $0x28] sm:$0xf]
        %v1603 = vld [vmem:[%s1591 + $0x2c] sm:$0xf]
        %v1604 = vld [vmem:[%s1591 + $0x30] sm:$0xf]
        %v1605 = vld [vmem:[%s1591 + $0x34] sm:$0xf]
        %v1606 = vld [vmem:[%s1591 + $0x38] sm:$0xf]
        %v1607 = vld [vmem:[%s1591 + $0x3c] sm:$0xf]
        %v1608 = vld [vmem:[%s1591 + $0x40] sm:$0xf]
        %v1609 = vld [vmem:[%s1591 + $0x44] sm:$0xf]
        %v1610 = vld [vmem:[%s1591 + $0x48] sm:$0xf]
        %v1611 = vld [vmem:[%s1591 + $0x4c] sm:$0xf]
        %v1612 = vld [vmem:[%s1591 + $0x50] sm:$0xf]
        %v1613 = vld [vmem:[%s1591 + $0x54] sm:$0xf]
        %v1614 = vld [vmem:[%s1591 + $0x58] sm:$0xf]
        %v1615 = vld [vmem:[%s1591 + $0x5c] sm:$0xf]
        %v1640 = vunpack.c.l.b16 %v1592
        %v1641 = vunpack.c.l.b16 %v1593
        %v1642 = vunpack.c.l.b16 %v1594
        %v1643 = vunpack.c.l.b16 %v1595
        %v1644 = vunpack.c.l.b16 %v1596
        %v1645 = vunpack.c.l.b16 %v1597
        %v1646 = vunpack.c.l.b16 %v1598
        %v1647 = vunpack.c.l.b16 %v1599
        %v1648 = vunpack.c.l.b16 %v1600
        %v1649 = vunpack.c.l.b16 %v1601
        %v1650 = vunpack.c.l.b16 %v1602
        %v1651 = vunpack.c.l.b16 %v1603
        %v1652 = vunpack.c.l.b16 %v1604
        %v1653 = vunpack.c.l.b16 %v1605
        %v1654 = vunpack.c.l.b16 %v1606
        %v1655 = vunpack.c.l.b16 %v1607
        %v1656 = vunpack.c.l.b16 %v1608
        %v1657 = vunpack.c.l.b16 %v1609
        %v1658 = vunpack.c.l.b16 %v1610
        %v1659 = vunpack.c.l.b16 %v1611
        %v1660 = vunpack.c.l.b16 %v1612
        %v1661 = vunpack.c.l.b16 %v1613
        %v1662 = vunpack.c.l.b16 %v1614
        %v1663 = vunpack.c.l.b16 %v1615
        %v1664 = vpack.c.b16 %v1641, %v1640
        %v1665 = vpack.c.b16 %v1643, %v1642
        %v1666 = vpack.c.b16 %v1645, %v1644
        %v1667 = vpack.c.b16 %v1647, %v1646
        %v1668 = vpack.c.b16 %v1649, %v1648
        %v1669 = vpack.c.b16 %v1651, %v1650
        %v1670 = vpack.c.b16 %v1653, %v1652
        %v1671 = vpack.c.b16 %v1655, %v1654
        %v1672 = vpack.c.b16 %v1657, %v1656
        %v1673 = vpack.c.b16 %v1659, %v1658
        %v1674 = vpack.c.b16 %v1661, %v1660
        %v1675 = vpack.c.b16 %v1663, %v1662
        %v1689 = vsel %vm927, %v1552, 0
        %v1692 = vsel %vm927, %v1554, 0
        %v1695 = vsel %vm927, %v1556, 0
        %v1698 = vsel %vm927, %v1558, 0
        %v1701 = vsel %vm927, %v1560, 0
        %v1704 = vsel %vm927, %v1562, 0
        %v1707 = vsel %vm927, %v1564, 0
        %v1710 = vsel %vm927, %v1590, 0
        %1712 = vmatprep.subr.bf16.mxu0 0
        %1713 = vmatpush1.bf16.msra.mxu0 %v1664
        %1714 = vmatprep.subr.bf16.mxu0 0
        %1715 = vmatpush1.bf16.msra.mxu0 %v1665
        %1716 = vmatprep.subr.bf16.mxu0 0
        %1717 = vmatpush1.bf16.msra.mxu0 %v1666
        %1718 = vmatprep.subr.bf16.mxu0 0
        %1719 = vmatpush1.bf16.msra.mxu0 %v1667
        %1720 = vmatprep.subr.bf16.mxu0 0
        %1721 = vmatpush1.bf16.msra.mxu0 %v1668
        %1722 = vmatprep.subr.bf16.mxu0 0
        %1723 = vmatpush1.bf16.msra.mxu0 %v1669
        %1724 = vmatprep.subr.bf16.mxu0 0
        %1725 = vmatpush1.bf16.msra.mxu0 %v1670
        %1726 = vmatprep.subr.bf16.mxu0 0
        %1727 = vmatpush1.bf16.msra.mxu0 %v1671
        %1728 = vmatprep.subr.bf16.mxu0 0
        %1729 = vmatpush1.bf16.msra.mxu0 %v1672
        %1730 = vmatprep.subr.bf16.mxu0 0
        %1731 = vmatpush1.bf16.msra.mxu0 %v1673
        %1732 = vmatprep.subr.bf16.mxu0 0
        %1733 = vmatpush1.bf16.msra.mxu0 %v1674
        %1734 = vmatprep.subr.bf16.mxu0 0
        %1735 = vmatpush1.bf16.msra.mxu0 %v1675
        %1736 = vmatprep.subr.bf16.mxu0 0
        %1737 = vmatpush1.bf16.msra.mxu0 0
        %1738 = vmatprep.subr.bf16.mxu0 0
        %1739 = vmatpush1.bf16.msra.mxu0 0
        %1740 = vmatprep.subr.bf16.mxu0 0
        %1741 = vmatpush1.bf16.msra.mxu0 0
        %1742 = vmatprep.subr.bf16.mxu0 0
        %1743 = vmatpush1.bf16.msra.mxu0 0
        %1744 = vmatprep.mubr.bf16.mxu0 %v1689
        %1745 = vmatmul.mubr.bf16.gmra.mrb[0].mxu0 %v1551
        %v1746 = vpop.f32.mrb[0].mxu0
        %v1747 = vadd.f32 0.0, %v1746
        %v1748 = vpop.f32.mrb[0].mxu0
        %v1749 = vpop.f32.mrb[0].mxu0
        %v1750 = vadd.f32 0.0, %v1749
        %v1751 = vpop.f32.mrb[0].mxu0
        %1752 = vmatprep.mubr.bf16.mxu0 %v1692
        %1753 = vmatmul.mubr.bf16.gmra.mrb[0].mxu0 %v1553
        %v1754 = vpop.f32.mrb[0].mxu0
        %v1755 = vadd.f32 0.0, %v1754
        %v1756 = vpop.f32.mrb[0].mxu0
        %v1757 = vpop.f32.mrb[0].mxu0
        %v1758 = vadd.f32 0.0, %v1757
        %v1759 = vpop.f32.mrb[0].mxu0
        %1760 = vmatprep.mubr.bf16.mxu0 %v1695
        %1761 = vmatmul.mubr.bf16.gmra.mrb[0].mxu0 %v1555
        %v1762 = vpop.f32.mrb[0].mxu0
        %v1763 = vadd.f32 0.0, %v1762
        %v1764 = vpop.f32.mrb[0].mxu0
        %v1765 = vpop.f32.mrb[0].mxu0
        %v1766 = vadd.f32 0.0, %v1765
        %v1767 = vpop.f32.mrb[0].mxu0
        %1768 = vmatprep.mubr.bf16.mxu0 %v1698
        %1769 = vmatmul.mubr.bf16.gmra.mrb[0].mxu0 %v1557
        %v1770 = vpop.f32.mrb[0].mxu0
        %v1771 = vadd.f32 0.0, %v1770
        %v1772 = vpop.f32.mrb[0].mxu0
        %v1773 = vpop.f32.mrb[0].mxu0
        %v1774 = vadd.f32 0.0, %v1773
        %v1775 = vpop.f32.mrb[0].mxu0
        %1776 = vmatprep.mubr.bf16.mxu0 %v1701
        %1777 = vmatmul.mubr.bf16.gmra.mrb[0].mxu0 %v1559
        %v1778 = vpop.f32.mrb[0].mxu0
        %v1779 = vadd.f32 0.0, %v1778
        %v1780 = vpop.f32.mrb[0].mxu0
        %v1781 = vpop.f32.mrb[0].mxu0
        %v1782 = vadd.f32 0.0, %v1781
        %v1783 = vpop.f32.mrb[0].mxu0
        %1784 = vmatprep.mubr.bf16.mxu0 %v1704
        %1785 = vmatmul.mubr.bf16.gmra.mrb[0].mxu0 %v1561
        %v1786 = vpop.f32.mrb[0].mxu0
        %v1787 = vadd.f32 0.0, %v1786
        %v1788 = vpop.f32.mrb[0].mxu0
        %v1789 = vpop.f32.mrb[0].mxu0
        %v1790 = vadd.f32 0.0, %v1789
        %v1791 = vpop.f32.mrb[0].mxu0
        %1792 = vmatprep.mubr.bf16.mxu0 %v1707
        %1793 = vmatmul.mubr.bf16.gmra.mrb[0].mxu0 %v1563
        %v1794 = vpop.f32.mrb[0].mxu0
        %v1795 = vadd.f32 0.0, %v1794
        %v1796 = vpop.f32.mrb[0].mxu0
        %v1797 = vpop.f32.mrb[0].mxu0
        %v1798 = vadd.f32 0.0, %v1797
        %v1799 = vpop.f32.mrb[0].mxu0
        %1800 = vmatprep.mubr.bf16.mxu0 %v1710
        %1801 = vmatmul.mubr.bf16.gmra.mrb[0].mxu0 %v1589
        %v1802 = vpop.f32.mrb[0].mxu0
        %v1803 = vadd.f32 0.0, %v1802
        %v1804 = vpop.f32.mrb[0].mxu0
        %v1805 = vpop.f32.mrb[0].mxu0
        %v1806 = vadd.f32 0.0, %v1805
        %v1807 = vpop.f32.mrb[0].mxu0
        %1808 = vdwg.mxu0
        %v1833 = vunpack.c.l.b16 %v1565
        %v1834 = vunpack.c.l.b16 %v1566
        %v1835 = vunpack.c.l.b16 %v1567
        %v1836 = vunpack.c.l.b16 %v1568
        %v1837 = vunpack.c.l.b16 %v1569
        %v1838 = vunpack.c.l.b16 %v1570
        %v1839 = vunpack.c.l.b16 %v1571
        %v1840 = vunpack.c.l.b16 %v1572
        %v1841 = vunpack.c.l.b16 %v1573
        %v1842 = vunpack.c.l.b16 %v1574
        %v1843 = vunpack.c.l.b16 %v1575
        %v1844 = vunpack.c.l.b16 %v1576
        %v1845 = vunpack.c.l.b16 %v1577
        %v1846 = vunpack.c.l.b16 %v1578
        %v1847 = vunpack.c.l.b16 %v1579
        %v1848 = vunpack.c.l.b16 %v1580
        %v1849 = vunpack.c.l.b16 %v1581
        %v1850 = vunpack.c.l.b16 %v1582
        %v1851 = vunpack.c.l.b16 %v1583
        %v1852 = vunpack.c.l.b16 %v1584
        %v1853 = vunpack.c.l.b16 %v1585
        %v1854 = vunpack.c.l.b16 %v1586
        %v1855 = vunpack.c.l.b16 %v1587
        %v1856 = vunpack.c.l.b16 %v1588
        %v1857 = vpack.c.b16 %v1834, %v1833
        %v1858 = vpack.c.b16 %v1836, %v1835
        %v1859 = vpack.c.b16 %v1838, %v1837
        %v1860 = vpack.c.b16 %v1840, %v1839
        %v1861 = vpack.c.b16 %v1842, %v1841
        %v1862 = vpack.c.b16 %v1844, %v1843
        %v1863 = vpack.c.b16 %v1846, %v1845
        %v1864 = vpack.c.b16 %v1848, %v1847
        %v1865 = vpack.c.b16 %v1850, %v1849
        %v1866 = vpack.c.b16 %v1852, %v1851
        %v1867 = vpack.c.b16 %v1854, %v1853
        %v1868 = vpack.c.b16 %v1856, %v1855
        %v1882 = vsel %vm927, %v1550, 0
        %1884 = vmatprep.subr.bf16.mxu0 0
        %1885 = vmatpush1.bf16.msra.mxu0 %v1857
        %1886 = vmatprep.subr.bf16.mxu0 0
        %1887 = vmatpush1.bf16.msra.mxu0 %v1858
        %1888 = vmatprep.subr.bf16.mxu0 0
        %1889 = vmatpush1.bf16.msra.mxu0 %v1859
        %1890 = vmatprep.subr.bf16.mxu0 0
        %1891 = vmatpush1.bf16.msra.mxu0 %v1860
        %1892 = vmatprep.subr.bf16.mxu0 0
        %1893 = vmatpush1.bf16.msra.mxu0 %v1861
        %1894 = vmatprep.subr.bf16.mxu0 0
        %1895 = vmatpush1.bf16.msra.mxu0 %v1862
        %1896 = vmatprep.subr.bf16.mxu0 0
        %1897 = vmatpush1.bf16.msra.mxu0 %v1863
        %1898 = vmatprep.subr.bf16.mxu0 0
        %1899 = vmatpush1.bf16.msra.mxu0 %v1864
        %1900 = vmatprep.subr.bf16.mxu0 0
        %1901 = vmatpush1.bf16.msra.mxu0 %v1865
        %1902 = vmatprep.subr.bf16.mxu0 0
        %1903 = vmatpush1.bf16.msra.mxu0 %v1866
        %1904 = vmatprep.subr.bf16.mxu0 0
        %1905 = vmatpush1.bf16.msra.mxu0 %v1867
        %1906 = vmatprep.subr.bf16.mxu0 0
        %1907 = vmatpush1.bf16.msra.mxu0 %v1868
        %1908 = vmatprep.subr.bf16.mxu0 0
        %1909 = vmatpush1.bf16.msra.mxu0 0
        %1910 = vmatprep.subr.bf16.mxu0 0
        %1911 = vmatpush1.bf16.msra.mxu0 0
        %1912 = vmatprep.subr.bf16.mxu0 0
        %1913 = vmatpush1.bf16.msra.mxu0 0
        %1914 = vmatprep.subr.bf16.mxu0 0
        %1915 = vmatpush1.bf16.msra.mxu0 0
        %1916 = vmatprep.mubr.bf16.mxu0 %v1882
        %1917 = vmatmul.mubr.bf16.gmra.mrb[0].mxu0 %v1549
        %v1918 = vpop.f32.mrb[0].mxu0
        %v1919 = vadd.f32 %v1747, %v1918
        %v1920 = vpop.f32.mrb[0].mxu0
        %v1921 = vpop.f32.mrb[0].mxu0
        %v1922 = vadd.f32 %v1750, %v1921
        %v1923 = vpop.f32.mrb[0].mxu0
        %1924 = vmatprep.mubr.bf16.mxu0 %v1689
        %1925 = vmatmul.mubr.bf16.gmra.mrb[0].mxu0 %v1551
        %v1926 = vpop.f32.mrb[0].mxu0
        %v1927 = vadd.f32 %v1755, %v1926
        %v1928 = vpop.f32.mrb[0].mxu0
        %v1929 = vpop.f32.mrb[0].mxu0
        %v1930 = vadd.f32 %v1758, %v1929
        %v1931 = vpop.f32.mrb[0].mxu0
        %1932 = vmatprep.mubr.bf16.mxu0 %v1692
        %1933 = vmatmul.mubr.bf16.gmra.mrb[0].mxu0 %v1553
        %v1934 = vpop.f32.mrb[0].mxu0
        %v1935 = vadd.f32 %v1763, %v1934
        %v1936 = vpop.f32.mrb[0].mxu0
        %v1937 = vpop.f32.mrb[0].mxu0
        %v1938 = vadd.f32 %v1766, %v1937
        %v1939 = vpop.f32.mrb[0].mxu0
        %1940 = vmatprep.mubr.bf16.mxu0 %v1695
        %1941 = vmatmul.mubr.bf16.gmra.mrb[0].mxu0 %v1555
        %v1942 = vpop.f32.mrb[0].mxu0
        %v1943 = vadd.f32 %v1771, %v1942
        %v1944 = vpop.f32.mrb[0].mxu0
        %v1945 = vpop.f32.mrb[0].mxu0
        %v1946 = vadd.f32 %v1774, %v1945
        %v1947 = vpop.f32.mrb[0].mxu0
        %1948 = vmatprep.mubr.bf16.mxu0 %v1698
        %1949 = vmatmul.mubr.bf16.gmra.mrb[0].mxu0 %v1557
        %v1950 = vpop.f32.mrb[0].mxu0
        %v1951 = vadd.f32 %v1779, %v1950
        %v1952 = vpop.f32.mrb[0].mxu0
        %v1953 = vpop.f32.mrb[0].mxu0
        %v1954 = vadd.f32 %v1782, %v1953
        %v1955 = vpop.f32.mrb[0].mxu0
        %1956 = vmatprep.mubr.bf16.mxu0 %v1701
        %1957 = vmatmul.mubr.bf16.gmra.mrb[0].mxu0 %v1559
        %v1958 = vpop.f32.mrb[0].mxu0
        %v1959 = vadd.f32 %v1787, %v1958
        %v1960 = vpop.f32.mrb[0].mxu0
        %v1961 = vpop.f32.mrb[0].mxu0
        %v1962 = vadd.f32 %v1790, %v1961
        %v1963 = vpop.f32.mrb[0].mxu0
        %1964 = vmatprep.mubr.bf16.mxu0 %v1704
        %1965 = vmatmul.mubr.bf16.gmra.mrb[0].mxu0 %v1561
        %v1966 = vpop.f32.mrb[0].mxu0
        %v1967 = vadd.f32 %v1795, %v1966
        %v1968 = vpop.f32.mrb[0].mxu0
        %v1969 = vpop.f32.mrb[0].mxu0
        %v1970 = vadd.f32 %v1798, %v1969
        %v1971 = vpop.f32.mrb[0].mxu0
        %1972 = vmatprep.mubr.bf16.mxu0 %v1707
        %1973 = vmatmul.mubr.bf16.gmra.mrb[0].mxu0 %v1563
        %v1974 = vpop.f32.mrb[0].mxu0
        %v1975 = vadd.f32 %v1803, %v1974
        %v1976 = vpop.f32.mrb[0].mxu0
        %v1977 = vpop.f32.mrb[0].mxu0
        %v1978 = vadd.f32 %v1806, %v1977
        %v1979 = vpop.f32.mrb[0].mxu0
        %1980 = vdwg.mxu0
        %v1981 = vld [vmem:[#allocation2 + $0x20] sm:$0xff]
        %v1982 = vld [vmem:[#allocation2 + $0x28] sm:$0xff]
        %v1983 = vld [vmem:[#allocation2 + $0x30] sm:$0xff]
        %v1984 = vld [vmem:[#allocation2 + $0x38] sm:$0xff]
        %v1985 = vld [vmem:[#allocation2 + $0x40] sm:$0xff]
        %v1986 = vld [vmem:[#allocation2 + $0x48] sm:$0xff]
        %v1987 = vld [vmem:[#allocation2 + $0x50] sm:$0xff]
        %v1988 = vld [vmem:[#allocation2 + $0x58] sm:$0xff]
        %v1989 = vld [vmem:[#allocation2 + $0x60] sm:$0xff]
        %v1990 = vld [vmem:[#allocation2 + $0x68] sm:$0xff]
        %v1991 = vld [vmem:[#allocation2 + $0x70] sm:$0xff]
        %v1992 = vld [vmem:[#allocation2 + $0x78] sm:$0xff]
        %v1993 = vld [vmem:[#allocation2 + $0x80] sm:$0xff]
        %v1994 = vld [vmem:[#allocation2 + $0x88] sm:$0xff]
        %v1995 = vld [vmem:[#allocation2 + $0x90] sm:$0xff]
        %v1996 = vld [vmem:[#allocation2 + $0x98] sm:$0xff]
        %s1997 = scalar_lea.vmem %s3, 192
        %v1998 = vld [vmem:[%s1997] sm:$0xf]
        %v1999 = vld [vmem:[%s1997 + $0x4] sm:$0xf]
        %v2000 = vld [vmem:[%s1997 + $0x8] sm:$0xf]
        %v2001 = vld [vmem:[%s1997 + $0xc] sm:$0xf]
        %v2002 = vld [vmem:[%s1997 + $0x10] sm:$0xf]
        %v2003 = vld [vmem:[%s1997 + $0x14] sm:$0xf]
        %v2004 = vld [vmem:[%s1997 + $0x18] sm:$0xf]
        %v2005 = vld [vmem:[%s1997 + $0x1c] sm:$0xf]
        %v2006 = vld [vmem:[%s1997 + $0x20] sm:$0xf]
        %v2007 = vld [vmem:[%s1997 + $0x24] sm:$0xf]
        %v2008 = vld [vmem:[%s1997 + $0x28] sm:$0xf]
        %v2009 = vld [vmem:[%s1997 + $0x2c] sm:$0xf]
        %v2010 = vld [vmem:[%s1997 + $0x30] sm:$0xf]
        %v2011 = vld [vmem:[%s1997 + $0x34] sm:$0xf]
        %v2012 = vld [vmem:[%s1997 + $0x38] sm:$0xf]
        %v2013 = vld [vmem:[%s1997 + $0x3c] sm:$0xf]
        %v2014 = vld [vmem:[%s1997 + $0x40] sm:$0xf]
        %v2015 = vld [vmem:[%s1997 + $0x44] sm:$0xf]
        %v2016 = vld [vmem:[%s1997 + $0x48] sm:$0xf]
        %v2017 = vld [vmem:[%s1997 + $0x4c] sm:$0xf]
        %v2018 = vld [vmem:[%s1997 + $0x50] sm:$0xf]
        %v2019 = vld [vmem:[%s1997 + $0x54] sm:$0xf]
        %v2020 = vld [vmem:[%s1997 + $0x58] sm:$0xf]
        %v2021 = vld [vmem:[%s1997 + $0x5c] sm:$0xf]
        %v2046 = vunpack.c.l.b16 %v1998
        %v2047 = vunpack.c.l.b16 %v1999
        %v2048 = vunpack.c.l.b16 %v2000
        %v2049 = vunpack.c.l.b16 %v2001
        %v2050 = vunpack.c.l.b16 %v2002
        %v2051 = vunpack.c.l.b16 %v2003
        %v2052 = vunpack.c.l.b16 %v2004
        %v2053 = vunpack.c.l.b16 %v2005
        %v2054 = vunpack.c.l.b16 %v2006
        %v2055 = vunpack.c.l.b16 %v2007
        %v2056 = vunpack.c.l.b16 %v2008
        %v2057 = vunpack.c.l.b16 %v2009
        %v2058 = vunpack.c.l.b16 %v2010
        %v2059 = vunpack.c.l.b16 %v2011
        %v2060 = vunpack.c.l.b16 %v2012
        %v2061 = vunpack.c.l.b16 %v2013
        %v2062 = vunpack.c.l.b16 %v2014
        %v2063 = vunpack.c.l.b16 %v2015
        %v2064 = vunpack.c.l.b16 %v2016
        %v2065 = vunpack.c.l.b16 %v2017
        %v2066 = vunpack.c.l.b16 %v2018
        %v2067 = vunpack.c.l.b16 %v2019
        %v2068 = vunpack.c.l.b16 %v2020
        %v2069 = vunpack.c.l.b16 %v2021
        %v2070 = vpack.c.b16 %v2047, %v2046
        %v2071 = vpack.c.b16 %v2049, %v2048
        %v2072 = vpack.c.b16 %v2051, %v2050
        %v2073 = vpack.c.b16 %v2053, %v2052
        %v2074 = vpack.c.b16 %v2055, %v2054
        %v2075 = vpack.c.b16 %v2057, %v2056
        %v2076 = vpack.c.b16 %v2059, %v2058
        %v2077 = vpack.c.b16 %v2061, %v2060
        %v2078 = vpack.c.b16 %v2063, %v2062
        %v2079 = vpack.c.b16 %v2065, %v2064
        %v2080 = vpack.c.b16 %v2067, %v2066
        %v2081 = vpack.c.b16 %v2069, %v2068
        %v2095 = vsel %vm927, %v1982, 0
        %v2098 = vsel %vm927, %v1984, 0
        %v2101 = vsel %vm927, %v1986, 0
        %v2104 = vsel %vm927, %v1988, 0
        %v2107 = vsel %vm927, %v1990, 0
        %v2110 = vsel %vm927, %v1992, 0
        %v2113 = vsel %vm927, %v1994, 0
        %v2116 = vsel %vm927, %v1996, 0
        %2118 = vmatprep.subr.bf16.mxu0 0
        %2119 = vmatpush1.bf16.msra.mxu0 %v2070
        %2120 = vmatprep.subr.bf16.mxu0 0
        %2121 = vmatpush1.bf16.msra.mxu0 %v2071
        %2122 = vmatprep.subr.bf16.mxu0 0
        %2123 = vmatpush1.bf16.msra.mxu0 %v2072
        %2124 = vmatprep.subr.bf16.mxu0 0
        %2125 = vmatpush1.bf16.msra.mxu0 %v2073
        %2126 = vmatprep.subr.bf16.mxu0 0
        %2127 = vmatpush1.bf16.msra.mxu0 %v2074
        %2128 = vmatprep.subr.bf16.mxu0 0
        %2129 = vmatpush1.bf16.msra.mxu0 %v2075
        %2130 = vmatprep.subr.bf16.mxu0 0
        %2131 = vmatpush1.bf16.msra.mxu0 %v2076
        %2132 = vmatprep.subr.bf16.mxu0 0
        %2133 = vmatpush1.bf16.msra.mxu0 %v2077
        %2134 = vmatprep.subr.bf16.mxu0 0
        %2135 = vmatpush1.bf16.msra.mxu0 %v2078
        %2136 = vmatprep.subr.bf16.mxu0 0
        %2137 = vmatpush1.bf16.msra.mxu0 %v2079
        %2138 = vmatprep.subr.bf16.mxu0 0
        %2139 = vmatpush1.bf16.msra.mxu0 %v2080
        %2140 = vmatprep.subr.bf16.mxu0 0
        %2141 = vmatpush1.bf16.msra.mxu0 %v2081
        %2142 = vmatprep.subr.bf16.mxu0 0
        %2143 = vmatpush1.bf16.msra.mxu0 0
        %2144 = vmatprep.subr.bf16.mxu0 0
        %2145 = vmatpush1.bf16.msra.mxu0 0
        %2146 = vmatprep.subr.bf16.mxu0 0
        %2147 = vmatpush1.bf16.msra.mxu0 0
        %2148 = vmatprep.subr.bf16.mxu0 0
        %2149 = vmatpush1.bf16.msra.mxu0 0
        %2150 = vmatprep.mubr.bf16.mxu0 %v2095
        %2151 = vmatmul.mubr.bf16.gmra.mrb[0].mxu0 %v1981
        %v2152 = vpop.f32.mrb[0].mxu0
        %v2153 = vadd.f32 0.0, %v2152
        %v2154 = vpop.f32.mrb[0].mxu0
        %v2155 = vpop.f32.mrb[0].mxu0
        %v2156 = vadd.f32 0.0, %v2155
        %v2157 = vpop.f32.mrb[0].mxu0
        %2158 = vmatprep.mubr.bf16.mxu0 %v2098
        %2159 = vmatmul.mubr.bf16.gmra.mrb[0].mxu0 %v1983
        %v2160 = vpop.f32.mrb[0].mxu0
        %v2161 = vadd.f32 0.0, %v2160
        %v2162 = vpop.f32.mrb[0].mxu0
        %v2163 = vpop.f32.mrb[0].mxu0
        %v2164 = vadd.f32 0.0, %v2163
        %v2165 = vpop.f32.mrb[0].mxu0
        %2166 = vmatprep.mubr.bf16.mxu0 %v2101
        %2167 = vmatmul.mubr.bf16.gmra.mrb[0].mxu0 %v1985
        %v2168 = vpop.f32.mrb[0].mxu0
        %v2169 = vadd.f32 0.0, %v2168
        %v2170 = vpop.f32.mrb[0].mxu0
        %v2171 = vpop.f32.mrb[0].mxu0
        %v2172 = vadd.f32 0.0, %v2171
        %v2173 = vpop.f32.mrb[0].mxu0
        %2174 = vmatprep.mubr.bf16.mxu0 %v2104
        %2175 = vmatmul.mubr.bf16.gmra.mrb[0].mxu0 %v1987
        %v2176 = vpop.f32.mrb[0].mxu0
        %v2177 = vadd.f32 0.0, %v2176
        %v2178 = vpop.f32.mrb[0].mxu0
        %v2179 = vpop.f32.mrb[0].mxu0
        %v2180 = vadd.f32 0.0, %v2179
        %v2181 = vpop.f32.mrb[0].mxu0
        %2182 = vmatprep.mubr.bf16.mxu0 %v2107
        %2183 = vmatmul.mubr.bf16.gmra.mrb[0].mxu0 %v1989
        %v2184 = vpop.f32.mrb[0].mxu0
        %v2185 = vadd.f32 0.0, %v2184
        %v2186 = vpop.f32.mrb[0].mxu0
        %v2187 = vpop.f32.mrb[0].mxu0
        %v2188 = vadd.f32 0.0, %v2187
        %v2189 = vpop.f32.mrb[0].mxu0
        %2190 = vmatprep.mubr.bf16.mxu0 %v2110
        %2191 = vmatmul.mubr.bf16.gmra.mrb[0].mxu0 %v1991
        %v2192 = vpop.f32.mrb[0].mxu0
        %v2193 = vadd.f32 0.0, %v2192
        %v2194 = vpop.f32.mrb[0].mxu0
        %v2195 = vpop.f32.mrb[0].mxu0
        %v2196 = vadd.f32 0.0, %v2195
        %v2197 = vpop.f32.mrb[0].mxu0
        %2198 = vmatprep.mubr.bf16.mxu0 %v2113
        %2199 = vmatmul.mubr.bf16.gmra.mrb[0].mxu0 %v1993
        %v2200 = vpop.f32.mrb[0].mxu0
        %v2201 = vadd.f32 0.0, %v2200
        %v2202 = vpop.f32.mrb[0].mxu0
        %v2203 = vpop.f32.mrb[0].mxu0
        %v2204 = vadd.f32 0.0, %v2203
        %v2205 = vpop.f32.mrb[0].mxu0
        %2206 = vmatprep.mubr.bf16.mxu0 %v2116
        %2207 = vmatmul.mubr.bf16.gmra.mrb[0].mxu0 %v1995
        %v2208 = vpop.f32.mrb[0].mxu0
        %v2209 = vadd.f32 0.0, %v2208
        %v2210 = vpop.f32.mrb[0].mxu0
        %v2211 = vpop.f32.mrb[0].mxu0
        %v2212 = vadd.f32 0.0, %v2211
        %v2213 = vpop.f32.mrb[0].mxu0
        %2214 = vdwg.mxu0
        %v2215 = vadd.f32 %v1919, %v2153
        %v2216 = vadd.f32 %v1922, %v2156
        %v2217 = vadd.f32 %v1927, %v2161
        %v2218 = vadd.f32 %v1930, %v2164
        %v2219 = vadd.f32 %v1935, %v2169
        %v2220 = vadd.f32 %v1938, %v2172
        %v2221 = vadd.f32 %v1943, %v2177
        %v2222 = vadd.f32 %v1946, %v2180
        %v2223 = vadd.f32 %v1951, %v2185
        %v2224 = vadd.f32 %v1954, %v2188
        %v2225 = vadd.f32 %v1959, %v2193
        %v2226 = vadd.f32 %v1962, %v2196
        %v2227 = vadd.f32 %v1967, %v2201
        %v2228 = vadd.f32 %v1970, %v2204
        %v2229 = vadd.f32 %v1975, %v2209
        %v2230 = vadd.f32 %v1978, %v2212
        %v2231 = vld [vmem:[%s4] sm:$0x1]
        %v2233 = vlaneseq
        %v2234 = vshrl.u32 %v2233, 7
        %v2235 = vsub.s32 0, %v2234
        %v2236 = vrot.slane %v2231, %v2235
        %v2238 = vadd.f32 %v2215, %v2236
        %v2239 = vadd.f32 %v2216, %v2236
        %v2240 = vadd.f32 %v2217, %v2236
        %v2241 = vadd.f32 %v2218, %v2236
        %v2242 = vadd.f32 %v2219, %v2236
        %v2243 = vadd.f32 %v2220, %v2236
        %v2244 = vadd.f32 %v2221, %v2236
        %v2245 = vadd.f32 %v2222, %v2236
        %v2246 = vadd.f32 %v2223, %v2236
        %v2247 = vadd.f32 %v2224, %v2236
        %v2248 = vadd.f32 %v2225, %v2236
        %v2249 = vadd.f32 %v2226, %v2236
        %v2250 = vadd.f32 %v2227, %v2236
        %v2251 = vadd.f32 %v2228, %v2236
        %v2252 = vadd.f32 %v2229, %v2236
        %v2253 = vadd.f32 %v2230, %v2236
        %v2254 = vmax.f32 %v2238, 0.0
        %v2255 = vmax.f32 %v2239, 0.0
        %v2256 = vmax.f32 %v2240, 0.0
        %v2257 = vmax.f32 %v2241, 0.0
        %v2258 = vmax.f32 %v2242, 0.0
        %v2259 = vmax.f32 %v2243, 0.0
        %v2260 = vmax.f32 %v2244, 0.0
        %v2261 = vmax.f32 %v2245, 0.0
        %v2262 = vmax.f32 %v2246, 0.0
        %v2263 = vmax.f32 %v2247, 0.0
        %v2264 = vmax.f32 %v2248, 0.0
        %v2265 = vmax.f32 %v2249, 0.0
        %v2266 = vmax.f32 %v2250, 0.0
        %v2267 = vmax.f32 %v2251, 0.0
        %v2268 = vmax.f32 %v2252, 0.0
        %v2269 = vmax.f32 %v2253, 0.0
        %v2270 = vpack.c.bf16 %v2255, %v2254
        %v2271 = vpack.c.bf16 %v2257, %v2256
        %v2272 = vpack.c.bf16 %v2259, %v2258
        %v2273 = vpack.c.bf16 %v2261, %v2260
        %v2274 = vpack.c.bf16 %v2263, %v2262
        %v2275 = vpack.c.bf16 %v2265, %v2264
        %v2276 = vpack.c.bf16 %v2267, %v2266
        %v2277 = vpack.c.bf16 %v2269, %v2268
        %2278 = vst [vmem:[#allocation3] sm:$0xff] 0
        %vm2279 = vcmask 130048
        %2280 = vst.msk [vmem:[#allocation3 + $0x8] sm:$0xff] %vm2279, 0
        %2281 = vst [vmem:[#allocation3 + $0x90] sm:$0xff] 0
        %2282 = vst.msk [vmem:[#allocation3 + $0x98] sm:$0xff] %vm2279, 0
        %2291 = vrot.lane.b32.xlu0 %v2270, 16
        %v2292 = vpop.permute.xlu0 %2291
        %2293 = vrot.lane.b32.xlu0 %v2271, 16
        %v2294 = vpop.permute.xlu0 %2293
        %2295 = vrot.lane.b32.xlu0 %v2272, 16
        %v2296 = vpop.permute.xlu0 %2295
        %2297 = vrot.lane.b32.xlu0 %v2273, 16
        %v2298 = vpop.permute.xlu0 %2297
        %2299 = vrot.lane.b32.xlu0 %v2274, 16
        %v2300 = vpop.permute.xlu0 %2299
        %2301 = vrot.lane.b32.xlu0 %v2275, 16
        %v2302 = vpop.permute.xlu0 %2301
        %2303 = vrot.lane.b32.xlu0 %v2276, 16
        %v2304 = vpop.permute.xlu0 %2303
        %2305 = vrot.lane.b32.xlu0 %v2277, 16
        %v2306 = vpop.permute.xlu0 %2305
        %vm2315 = vcmask 785792
        %2316 = vst.msk [vmem:[#allocation3 + $0x10] sm:$0xff] %vm2315, %v2292
        %2317 = vst.msk [vmem:[#allocation3 + $0x20] sm:$0xff] %vm2315, %v2294
        %2318 = vst.msk [vmem:[#allocation3 + $0x30] sm:$0xff] %vm2315, %v2296
        %2319 = vst.msk [vmem:[#allocation3 + $0x40] sm:$0xff] %vm2315, %v2298
        %2320 = vst.msk [vmem:[#allocation3 + $0x50] sm:$0xff] %vm2315, %v2300
        %2321 = vst.msk [vmem:[#allocation3 + $0x60] sm:$0xff] %vm2315, %v2302
        %2322 = vst.msk [vmem:[#allocation3 + $0x70] sm:$0xff] %vm2315, %v2304
        %2323 = vst.msk [vmem:[#allocation3 + $0x80] sm:$0xff] %vm2315, %v2306
        %v2325 = vshrl.u32 %v2270, 16
        %v2327 = vrot.slane %v2325, 7
        %v2328 = vshll.u32 %v2270, 16
        %v2330 = vor.u32 %v2327, %v2328
        %v2332 = vshrl.u32 %v2271, 16
        %v2334 = vrot.slane %v2332, 7
        %v2335 = vshll.u32 %v2271, 16
        %v2337 = vor.u32 %v2334, %v2335
        %v2338 = vsel %vm1215, %v2327, %v2337
        %v2340 = vshrl.u32 %v2272, 16
        %v2342 = vrot.slane %v2340, 7
        %v2343 = vshll.u32 %v2272, 16
        %v2345 = vor.u32 %v2342, %v2343
        %v2346 = vsel %vm1215, %v2334, %v2345
        %v2348 = vshrl.u32 %v2273, 16
        %v2350 = vrot.slane %v2348, 7
        %v2351 = vshll.u32 %v2273, 16
        %v2353 = vor.u32 %v2350, %v2351
        %v2354 = vsel %vm1215, %v2342, %v2353
        %v2356 = vshrl.u32 %v2274, 16
        %v2358 = vrot.slane %v2356, 7
        %v2359 = vshll.u32 %v2274, 16
        %v2361 = vor.u32 %v2358, %v2359
        %v2362 = vsel %vm1215, %v2350, %v2361
        %v2364 = vshrl.u32 %v2275, 16
        %v2366 = vrot.slane %v2364, 7
        %v2367 = vshll.u32 %v2275, 16
        %v2369 = vor.u32 %v2366, %v2367
        %v2370 = vsel %vm1215, %v2358, %v2369
        %v2372 = vshrl.u32 %v2276, 16
        %v2374 = vrot.slane %v2372, 7
        %v2375 = vshll.u32 %v2276, 16
        %v2377 = vor.u32 %v2374, %v2375
        %v2378 = vsel %vm1215, %v2366, %v2377
        %v2380 = vshrl.u32 %v2277, 16
        %v2382 = vrot.slane %v2380, 7
        %v2383 = vshll.u32 %v2277, 16
        %v2385 = vor.u32 %v2382, %v2383
        %v2386 = vsel %vm1215, %v2374, %v2385
        %2387 = vrot.lane.b32.xlu0 %v2330, 96
        %v2388 = vpop.permute.xlu0 %2387
        %2389 = vrot.lane.b32.xlu0 %v2338, 96
        %v2390 = vpop.permute.xlu0 %2389
        %2391 = vrot.lane.b32.xlu0 %v2346, 96
        %v2392 = vpop.permute.xlu0 %2391
        %2393 = vrot.lane.b32.xlu0 %v2354, 96
        %v2394 = vpop.permute.xlu0 %2393
        %2395 = vrot.lane.b32.xlu0 %v2362, 96
        %v2396 = vpop.permute.xlu0 %2395
        %2397 = vrot.lane.b32.xlu0 %v2370, 96
        %v2398 = vpop.permute.xlu0 %2397
        %2399 = vrot.lane.b32.xlu0 %v2378, 96
        %v2400 = vpop.permute.xlu0 %2399
        %2401 = vrot.lane.b32.xlu0 %v2386, 96
        %v2402 = vpop.permute.xlu0 %2401
        %v2411 = vsel %vm1288, 0, %v2388
        %v2412 = vsel %vm1378, 0, %v2411
        %v2413 = vsel %vm1379, 0, %v2390
        %v2414 = vsel %vm1380, 0, %v2392
        %v2415 = vsel %vm1381, 0, %v2394
        %v2416 = vsel %vm1382, 0, %v2396
        %v2417 = vsel %vm1383, 0, %v2398
        %v2418 = vsel %vm1384, 0, %v2400
        %v2419 = vsel %vm1385, 0, %v2402
        %vm2420 = vcmask 392192
        %2421 = vst.msk [vmem:[#allocation3 + $0x10] sm:$0xff] %vm2420, %v2412
        %2422 = vst.msk [vmem:[#allocation3 + $0x20] sm:$0xff] %vm2420, %v2413
        %2423 = vst.msk [vmem:[#allocation3 + $0x30] sm:$0xff] %vm2420, %v2414
        %2424 = vst.msk [vmem:[#allocation3 + $0x40] sm:$0xff] %vm2420, %v2415
        %2425 = vst.msk [vmem:[#allocation3 + $0x50] sm:$0xff] %vm2420, %v2416
        %2426 = vst.msk [vmem:[#allocation3 + $0x60] sm:$0xff] %vm2420, %v2417
        %2427 = vst.msk [vmem:[#allocation3 + $0x70] sm:$0xff] %vm2420, %v2418
        %2428 = vst.msk [vmem:[#allocation3 + $0x80] sm:$0xff] %vm2420, %v2419
        %v2429 = vrot.slane %v2328, 1
        %v2430 = vor.u32 %v2325, %v2429
        %v2431 = vrot.slane %v2335, 1
        %v2432 = vsel %vm1402, %v2430, %v2431
        %v2433 = vor.u32 %v2332, %v2431
        %v2434 = vrot.slane %v2343, 1
        %v2435 = vsel %vm1402, %v2433, %v2434
        %v2436 = vor.u32 %v2340, %v2434
        %v2437 = vrot.slane %v2351, 1
        %v2438 = vsel %vm1402, %v2436, %v2437
        %v2439 = vor.u32 %v2348, %v2437
        %v2440 = vrot.slane %v2359, 1
        %v2441 = vsel %vm1402, %v2439, %v2440
        %v2442 = vor.u32 %v2356, %v2440
        %v2443 = vrot.slane %v2367, 1
        %v2444 = vsel %vm1402, %v2442, %v2443
        %v2445 = vor.u32 %v2364, %v2443
        %v2446 = vrot.slane %v2375, 1
        %v2447 = vsel %vm1402, %v2445, %v2446
        %v2448 = vor.u32 %v2372, %v2446
        %v2449 = vrot.slane %v2383, 1
        %v2450 = vsel %vm1402, %v2448, %v2449
        %v2451 = vor.u32 %v2380, %v2449
        %v2460 = vsel %vm1435, %v2451, 0
        %v2461 = vsel %vm1525, 0, %v2432
        %v2462 = vsel %vm1526, 0, %v2435
        %v2463 = vsel %vm1527, 0, %v2438
        %v2464 = vsel %vm1528, 0, %v2441
        %v2465 = vsel %vm1529, 0, %v2444
        %v2466 = vsel %vm1530, 0, %v2447
        %v2467 = vsel %vm1531, 0, %v2450
        %v2468 = vsel %vm1532, 0, %v2460
        %2477 = vrot.lane.b32.xlu0 %v2461, 64
        %v2478 = vpop.permute.xlu0 %2477
        %2479 = vrot.lane.b32.xlu0 %v2462, 64
        %v2480 = vpop.permute.xlu0 %2479
        %2481 = vrot.lane.b32.xlu0 %v2463, 64
        %v2482 = vpop.permute.xlu0 %2481
        %2483 = vrot.lane.b32.xlu0 %v2464, 64
        %v2484 = vpop.permute.xlu0 %2483
        %2485 = vrot.lane.b32.xlu0 %v2465, 64
        %v2486 = vpop.permute.xlu0 %2485
        %2487 = vrot.lane.b32.xlu0 %v2466, 64
        %v2488 = vpop.permute.xlu0 %2487
        %2489 = vrot.lane.b32.xlu0 %v2467, 64
        %v2490 = vpop.permute.xlu0 %2489
        %2491 = vrot.lane.b32.xlu0 %v2468, 64
        %v2492 = vpop.permute.xlu0 %2491
        %vm2501 = vcmask 1048320
        %2502 = vst.msk [vmem:[#allocation3 + $0x10] sm:$0xff] %vm2501, %v2478
        %2503 = vst.msk [vmem:[#allocation3 + $0x18] sm:$0xff] %vm2279, %v2478
        %2504 = vst.msk [vmem:[#allocation3 + $0x20] sm:$0xff] %vm2501, %v2480
        %2505 = vst.msk [vmem:[#allocation3 + $0x28] sm:$0xff] %vm2279, %v2480
        %2506 = vst.msk [vmem:[#allocation3 + $0x30] sm:$0xff] %vm2501, %v2482
        %2507 = vst.msk [vmem:[#allocation3 + $0x38] sm:$0xff] %vm2279, %v2482
        %2508 = vst.msk [vmem:[#allocation3 + $0x40] sm:$0xff] %vm2501, %v2484
        %2509 = vst.msk [vmem:[#allocation3 + $0x48] sm:$0xff] %vm2279, %v2484
        %2510 = vst.msk [vmem:[#allocation3 + $0x50] sm:$0xff] %vm2501, %v2486
        %2511 = vst.msk [vmem:[#allocation3 + $0x58] sm:$0xff] %vm2279, %v2486
        %2512 = vst.msk [vmem:[#allocation3 + $0x60] sm:$0xff] %vm2501, %v2488
        %2513 = vst.msk [vmem:[#allocation3 + $0x68] sm:$0xff] %vm2279, %v2488
        %2514 = vst.msk [vmem:[#allocation3 + $0x70] sm:$0xff] %vm2501, %v2490
        %2515 = vst.msk [vmem:[#allocation3 + $0x78] sm:$0xff] %vm2279, %v2490
        %2516 = vst.msk [vmem:[#allocation3 + $0x80] sm:$0xff] %vm2501, %v2492
        %2517 = vst.msk [vmem:[#allocation3 + $0x88] sm:$0xff] %vm2279, %v2492
        %v2518 = vld [vmem:[#allocation3] sm:$0xff]
        %v2519 = vld [vmem:[#allocation3 + $0x8] sm:$0xff]
        %v2520 = vld [vmem:[#allocation3 + $0x10] sm:$0xff]
        %v2521 = vld [vmem:[#allocation3 + $0x18] sm:$0xff]
        %v2522 = vld [vmem:[#allocation3 + $0x20] sm:$0xff]
        %v2523 = vld [vmem:[#allocation3 + $0x28] sm:$0xff]
        %v2524 = vld [vmem:[#allocation3 + $0x30] sm:$0xff]
        %v2525 = vld [vmem:[#allocation3 + $0x38] sm:$0xff]
        %v2526 = vld [vmem:[#allocation3 + $0x40] sm:$0xff]
        %v2527 = vld [vmem:[#allocation3 + $0x48] sm:$0xff]
        %v2528 = vld [vmem:[#allocation3 + $0x50] sm:$0xff]
        %v2529 = vld [vmem:[#allocation3 + $0x58] sm:$0xff]
        %v2530 = vld [vmem:[#allocation3 + $0x60] sm:$0xff]
        %v2531 = vld [vmem:[#allocation3 + $0x68] sm:$0xff]
        %v2532 = vld [vmem:[#allocation3 + $0x70] sm:$0xff]
        %v2533 = vld [vmem:[#allocation3 + $0x78] sm:$0xff]
        %v2534 = vld [vmem:[%s5] sm:$0xf]
        %v2535 = vld [vmem:[%s5 + $0x4] sm:$0xf]
        %v2536 = vld [vmem:[%s5 + $0x8] sm:$0xf]
        %v2537 = vld [vmem:[%s5 + $0xc] sm:$0xf]
        %v2538 = vld [vmem:[%s5 + $0x10] sm:$0xf]
        %v2539 = vld [vmem:[%s5 + $0x14] sm:$0xf]
        %v2540 = vld [vmem:[%s5 + $0x18] sm:$0xf]
        %v2541 = vld [vmem:[%s5 + $0x1c] sm:$0xf]
        %v2542 = vld [vmem:[%s5 + $0x20] sm:$0xf]
        %v2543 = vld [vmem:[%s5 + $0x24] sm:$0xf]
        %v2544 = vld [vmem:[%s5 + $0x28] sm:$0xf]
        %v2545 = vld [vmem:[%s5 + $0x2c] sm:$0xf]
        %v2546 = vld [vmem:[%s5 + $0x30] sm:$0xf]
        %v2547 = vld [vmem:[%s5 + $0x34] sm:$0xf]
        %v2548 = vld [vmem:[%s5 + $0x38] sm:$0xf]
        %v2549 = vld [vmem:[%s5 + $0x3c] sm:$0xf]
        %v2550 = vld [vmem:[%s5 + $0x40] sm:$0xf]
        %v2551 = vld [vmem:[%s5 + $0x44] sm:$0xf]
        %v2552 = vld [vmem:[#allocation3 + $0x80] sm:$0xff]
        %v2553 = vld [vmem:[#allocation3 + $0x88] sm:$0xff]
        %s2554 = scalar_lea.vmem %s5, 72
        %v2555 = vld [vmem:[%s2554] sm:$0xf]
        %v2556 = vld [vmem:[%s2554 + $0x4] sm:$0xf]
        %v2557 = vld [vmem:[%s2554 + $0x8] sm:$0xf]
        %v2558 = vld [vmem:[%s2554 + $0xc] sm:$0xf]
        %v2559 = vld [vmem:[%s2554 + $0x10] sm:$0xf]
        %v2560 = vld [vmem:[%s2554 + $0x14] sm:$0xf]
        %v2561 = vld [vmem:[%s2554 + $0x18] sm:$0xf]
        %v2562 = vld [vmem:[%s2554 + $0x1c] sm:$0xf]
        %v2563 = vld [vmem:[%s2554 + $0x20] sm:$0xf]
        %v2564 = vld [vmem:[%s2554 + $0x24] sm:$0xf]
        %v2565 = vld [vmem:[%s2554 + $0x28] sm:$0xf]
        %v2566 = vld [vmem:[%s2554 + $0x2c] sm:$0xf]
        %v2567 = vld [vmem:[%s2554 + $0x30] sm:$0xf]
        %v2568 = vld [vmem:[%s2554 + $0x34] sm:$0xf]
        %v2569 = vld [vmem:[%s2554 + $0x38] sm:$0xf]
        %v2570 = vld [vmem:[%s2554 + $0x3c] sm:$0xf]
        %v2571 = vld [vmem:[%s2554 + $0x40] sm:$0xf]
        %v2572 = vld [vmem:[%s2554 + $0x44] sm:$0xf]
        %v2591 = vunpack.c.l.b16 %v2555
        %v2592 = vunpack.c.l.b16 %v2556
        %v2593 = vunpack.c.l.b16 %v2557
        %v2594 = vunpack.c.l.b16 %v2558
        %v2595 = vunpack.c.l.b16 %v2559
        %v2596 = vunpack.c.l.b16 %v2560
        %v2597 = vunpack.c.l.b16 %v2561
        %v2598 = vunpack.c.l.b16 %v2562
        %v2599 = vunpack.c.l.b16 %v2563
        %v2600 = vunpack.c.l.b16 %v2564
        %v2601 = vunpack.c.l.b16 %v2565
        %v2602 = vunpack.c.l.b16 %v2566
        %v2603 = vunpack.c.l.b16 %v2567
        %v2604 = vunpack.c.l.b16 %v2568
        %v2605 = vunpack.c.l.b16 %v2569
        %v2606 = vunpack.c.l.b16 %v2570
        %v2607 = vunpack.c.l.b16 %v2571
        %v2608 = vunpack.c.l.b16 %v2572
        %v2609 = vpack.c.b16 %v2592, %v2591
        %v2610 = vpack.c.b16 %v2594, %v2593
        %v2611 = vpack.c.b16 %v2596, %v2595
        %v2612 = vpack.c.b16 %v2598, %v2597
        %v2613 = vpack.c.b16 %v2600, %v2599
        %v2614 = vpack.c.b16 %v2602, %v2601
        %v2615 = vpack.c.b16 %v2604, %v2603
        %v2616 = vpack.c.b16 %v2606, %v2605
        %v2617 = vpack.c.b16 %v2608, %v2607
        %v2628 = vsel %vm2279, %v2521, 0
        %v2631 = vsel %vm2279, %v2523, 0
        %v2634 = vsel %vm2279, %v2525, 0
        %v2637 = vsel %vm2279, %v2527, 0
        %v2640 = vsel %vm2279, %v2529, 0
        %v2643 = vsel %vm2279, %v2531, 0
        %v2646 = vsel %vm2279, %v2533, 0
        %v2649 = vsel %vm2279, %v2553, 0
        %2651 = vmatprep.subr.bf16.mxu0 0
        %2652 = vmatpush1.bf16.msra.mxu0 %v2609
        %2653 = vmatprep.subr.bf16.mxu0 0
        %2654 = vmatpush1.bf16.msra.mxu0 %v2610
        %2655 = vmatprep.subr.bf16.mxu0 0
        %2656 = vmatpush1.bf16.msra.mxu0 %v2611
        %2657 = vmatprep.subr.bf16.mxu0 0
        %2658 = vmatpush1.bf16.msra.mxu0 %v2612
        %2659 = vmatprep.subr.bf16.mxu0 0
        %2660 = vmatpush1.bf16.msra.mxu0 %v2613
        %2661 = vmatprep.subr.bf16.mxu0 0
        %2662 = vmatpush1.bf16.msra.mxu0 %v2614
        %2663 = vmatprep.subr.bf16.mxu0 0
        %2664 = vmatpush1.bf16.msra.mxu0 %v2615
        %2665 = vmatprep.subr.bf16.mxu0 0
        %2666 = vmatpush1.bf16.msra.mxu0 %v2616
        %2667 = vmatprep.subr.bf16.mxu0 0
        %2668 = vmatpush1.bf16.msra.mxu0 %v2617
        %2669 = vmatprep.subr.bf16.mxu0 0
        %2670 = vmatpush1.bf16.msra.mxu0 0
        %2671 = vmatprep.subr.bf16.mxu0 0
        %2672 = vmatpush1.bf16.msra.mxu0 0
        %2673 = vmatprep.subr.bf16.mxu0 0
        %2674 = vmatpush1.bf16.msra.mxu0 0
        %2675 = vmatprep.subr.bf16.mxu0 0
        %2676 = vmatpush1.bf16.msra.mxu0 0
        %2677 = vmatprep.subr.bf16.mxu0 0
        %2678 = vmatpush1.bf16.msra.mxu0 0
        %2679 = vmatprep.subr.bf16.mxu0 0
        %2680 = vmatpush1.bf16.msra.mxu0 0
        %2681 = vmatprep.subr.bf16.mxu0 0
        %2682 = vmatpush1.bf16.msra.mxu0 0
        %2683 = vmatprep.mubr.bf16.mxu0 %v2628
        %2684 = vmatmul.mubr.bf16.gmra.mrb[0].mxu0 %v2520
        %v2685 = vpop.f32.mrb[0].mxu0
        %v2686 = vadd.f32 0.0, %v2685
        %v2687 = vpop.f32.mrb[0].mxu0
        %v2688 = vpop.f32.mrb[0].mxu0
        %v2689 = vadd.f32 0.0, %v2688
        %v2690 = vpop.f32.mrb[0].mxu0
        %2691 = vmatprep.mubr.bf16.mxu0 %v2631
        %2692 = vmatmul.mubr.bf16.gmra.mrb[0].mxu0 %v2522
        %v2693 = vpop.f32.mrb[0].mxu0
        %v2694 = vadd.f32 0.0, %v2693
        %v2695 = vpop.f32.mrb[0].mxu0
        %v2696 = vpop.f32.mrb[0].mxu0
        %v2697 = vadd.f32 0.0, %v2696
        %v2698 = vpop.f32.mrb[0].mxu0
        %2699 = vmatprep.mubr.bf16.mxu0 %v2634
        %2700 = vmatmul.mubr.bf16.gmra.mrb[0].mxu0 %v2524
        %v2701 = vpop.f32.mrb[0].mxu0
        %v2702 = vadd.f32 0.0, %v2701
        %v2703 = vpop.f32.mrb[0].mxu0
        %v2704 = vpop.f32.mrb[0].mxu0
        %v2705 = vadd.f32 0.0, %v2704
        %v2706 = vpop.f32.mrb[0].mxu0
        %2707 = vmatprep.mubr.bf16.mxu0 %v2637
        %2708 = vmatmul.mubr.bf16.gmra.mrb[0].mxu0 %v2526
        %v2709 = vpop.f32.mrb[0].mxu0
        %v2710 = vadd.f32 0.0, %v2709
        %v2711 = vpop.f32.mrb[0].mxu0
        %v2712 = vpop.f32.mrb[0].mxu0
        %v2713 = vadd.f32 0.0, %v2712
        %v2714 = vpop.f32.mrb[0].mxu0
        %2715 = vmatprep.mubr.bf16.mxu0 %v2640
        %2716 = vmatmul.mubr.bf16.gmra.mrb[0].mxu0 %v2528
        %v2717 = vpop.f32.mrb[0].mxu0
        %v2718 = vadd.f32 0.0, %v2717
        %v2719 = vpop.f32.mrb[0].mxu0
        %v2720 = vpop.f32.mrb[0].mxu0
        %v2721 = vadd.f32 0.0, %v2720
        %v2722 = vpop.f32.mrb[0].mxu0
        %2723 = vmatprep.mubr.bf16.mxu0 %v2643
        %2724 = vmatmul.mubr.bf16.gmra.mrb[0].mxu0 %v2530
        %v2725 = vpop.f32.mrb[0].mxu0
        %v2726 = vadd.f32 0.0, %v2725
        %v2727 = vpop.f32.mrb[0].mxu0
        %v2728 = vpop.f32.mrb[0].mxu0
        %v2729 = vadd.f32 0.0, %v2728
        %v2730 = vpop.f32.mrb[0].mxu0
        %2731 = vmatprep.mubr.bf16.mxu0 %v2646
        %2732 = vmatmul.mubr.bf16.gmra.mrb[0].mxu0 %v2532
        %v2733 = vpop.f32.mrb[0].mxu0
        %v2734 = vadd.f32 0.0, %v2733
        %v2735 = vpop.f32.mrb[0].mxu0
        %v2736 = vpop.f32.mrb[0].mxu0
        %v2737 = vadd.f32 0.0, %v2736
        %v2738 = vpop.f32.mrb[0].mxu0
        %2739 = vmatprep.mubr.bf16.mxu0 %v2649
        %2740 = vmatmul.mubr.bf16.gmra.mrb[0].mxu0 %v2552
        %v2741 = vpop.f32.mrb[0].mxu0
        %v2742 = vadd.f32 0.0, %v2741
        %v2743 = vpop.f32.mrb[0].mxu0
        %v2744 = vpop.f32.mrb[0].mxu0
        %v2745 = vadd.f32 0.0, %v2744
        %v2746 = vpop.f32.mrb[0].mxu0
        %2747 = vdwg.mxu0
        %v2766 = vunpack.c.l.b16 %v2534
        %v2767 = vunpack.c.l.b16 %v2535
        %v2768 = vunpack.c.l.b16 %v2536
        %v2769 = vunpack.c.l.b16 %v2537
        %v2770 = vunpack.c.l.b16 %v2538
        %v2771 = vunpack.c.l.b16 %v2539
        %v2772 = vunpack.c.l.b16 %v2540
        %v2773 = vunpack.c.l.b16 %v2541
        %v2774 = vunpack.c.l.b16 %v2542
        %v2775 = vunpack.c.l.b16 %v2543
        %v2776 = vunpack.c.l.b16 %v2544
        %v2777 = vunpack.c.l.b16 %v2545
        %v2778 = vunpack.c.l.b16 %v2546
        %v2779 = vunpack.c.l.b16 %v2547
        %v2780 = vunpack.c.l.b16 %v2548
        %v2781 = vunpack.c.l.b16 %v2549
        %v2782 = vunpack.c.l.b16 %v2550
        %v2783 = vunpack.c.l.b16 %v2551
        %v2784 = vpack.c.b16 %v2767, %v2766
        %v2785 = vpack.c.b16 %v2769, %v2768
        %v2786 = vpack.c.b16 %v2771, %v2770
        %v2787 = vpack.c.b16 %v2773, %v2772
        %v2788 = vpack.c.b16 %v2775, %v2774
        %v2789 = vpack.c.b16 %v2777, %v2776
        %v2790 = vpack.c.b16 %v2779, %v2778
        %v2791 = vpack.c.b16 %v2781, %v2780
        %v2792 = vpack.c.b16 %v2783, %v2782
        %v2803 = vsel %vm2279, %v2519, 0
        %2805 = vmatprep.subr.bf16.mxu0 0
        %2806 = vmatpush1.bf16.msra.mxu0 %v2784
        %2807 = vmatprep.subr.bf16.mxu0 0
        %2808 = vmatpush1.bf16.msra.mxu0 %v2785
        %2809 = vmatprep.subr.bf16.mxu0 0
        %2810 = vmatpush1.bf16.msra.mxu0 %v2786
        %2811 = vmatprep.subr.bf16.mxu0 0
        %2812 = vmatpush1.bf16.msra.mxu0 %v2787
        %2813 = vmatprep.subr.bf16.mxu0 0
        %2814 = vmatpush1.bf16.msra.mxu0 %v2788
        %2815 = vmatprep.subr.bf16.mxu0 0
        %2816 = vmatpush1.bf16.msra.mxu0 %v2789
        %2817 = vmatprep.subr.bf16.mxu0 0
        %2818 = vmatpush1.bf16.msra.mxu0 %v2790
        %2819 = vmatprep.subr.bf16.mxu0 0
        %2820 = vmatpush1.bf16.msra.mxu0 %v2791
        %2821 = vmatprep.subr.bf16.mxu0 0
        %2822 = vmatpush1.bf16.msra.mxu0 %v2792
        %2823 = vmatprep.subr.bf16.mxu0 0
        %2824 = vmatpush1.bf16.msra.mxu0 0
        %2825 = vmatprep.subr.bf16.mxu0 0
        %2826 = vmatpush1.bf16.msra.mxu0 0
        %2827 = vmatprep.subr.bf16.mxu0 0
        %2828 = vmatpush1.bf16.msra.mxu0 0
        %2829 = vmatprep.subr.bf16.mxu0 0
        %2830 = vmatpush1.bf16.msra.mxu0 0
        %2831 = vmatprep.subr.bf16.mxu0 0
        %2832 = vmatpush1.bf16.msra.mxu0 0
        %2833 = vmatprep.subr.bf16.mxu0 0
        %2834 = vmatpush1.bf16.msra.mxu0 0
        %2835 = vmatprep.subr.bf16.mxu0 0
        %2836 = vmatpush1.bf16.msra.mxu0 0
        %2837 = vmatprep.mubr.bf16.mxu0 %v2803
        %2838 = vmatmul.mubr.bf16.gmra.mrb[0].mxu0 %v2518
        %v2839 = vpop.f32.mrb[0].mxu0
        %v2840 = vadd.f32 %v2686, %v2839
        %v2841 = vpop.f32.mrb[0].mxu0
        %v2842 = vpop.f32.mrb[0].mxu0
        %v2843 = vadd.f32 %v2689, %v2842
        %v2844 = vpop.f32.mrb[0].mxu0
        %2845 = vmatprep.mubr.bf16.mxu0 %v2628
        %2846 = vmatmul.mubr.bf16.gmra.mrb[0].mxu0 %v2520
        %v2847 = vpop.f32.mrb[0].mxu0
        %v2848 = vadd.f32 %v2694, %v2847
        %v2849 = vpop.f32.mrb[0].mxu0
        %v2850 = vpop.f32.mrb[0].mxu0
        %v2851 = vadd.f32 %v2697, %v2850
        %v2852 = vpop.f32.mrb[0].mxu0
        %2853 = vmatprep.mubr.bf16.mxu0 %v2631
        %2854 = vmatmul.mubr.bf16.gmra.mrb[0].mxu0 %v2522
        %v2855 = vpop.f32.mrb[0].mxu0
        %v2856 = vadd.f32 %v2702, %v2855
        %v2857 = vpop.f32.mrb[0].mxu0
        %v2858 = vpop.f32.mrb[0].mxu0
        %v2859 = vadd.f32 %v2705, %v2858
        %v2860 = vpop.f32.mrb[0].mxu0
        %2861 = vmatprep.mubr.bf16.mxu0 %v2634
        %2862 = vmatmul.mubr.bf16.gmra.mrb[0].mxu0 %v2524
        %v2863 = vpop.f32.mrb[0].mxu0
        %v2864 = vadd.f32 %v2710, %v2863
        %v2865 = vpop.f32.mrb[0].mxu0
        %v2866 = vpop.f32.mrb[0].mxu0
        %v2867 = vadd.f32 %v2713, %v2866
        %v2868 = vpop.f32.mrb[0].mxu0
        %2869 = vmatprep.mubr.bf16.mxu0 %v2637
        %2870 = vmatmul.mubr.bf16.gmra.mrb[0].mxu0 %v2526
        %v2871 = vpop.f32.mrb[0].mxu0
        %v2872 = vadd.f32 %v2718, %v2871
        %v2873 = vpop.f32.mrb[0].mxu0
        %v2874 = vpop.f32.mrb[0].mxu0
        %v2875 = vadd.f32 %v2721, %v2874
        %v2876 = vpop.f32.mrb[0].mxu0
        %2877 = vmatprep.mubr.bf16.mxu0 %v2640
        %2878 = vmatmul.mubr.bf16.gmra.mrb[0].mxu0 %v2528
        %v2879 = vpop.f32.mrb[0].mxu0
        %v2880 = vadd.f32 %v2726, %v2879
        %v2881 = vpop.f32.mrb[0].mxu0
        %v2882 = vpop.f32.mrb[0].mxu0
        %v2883 = vadd.f32 %v2729, %v2882
        %v2884 = vpop.f32.mrb[0].mxu0
        %2885 = vmatprep.mubr.bf16.mxu0 %v2643
        %2886 = vmatmul.mubr.bf16.gmra.mrb[0].mxu0 %v2530
        %v2887 = vpop.f32.mrb[0].mxu0
        %v2888 = vadd.f32 %v2734, %v2887
        %v2889 = vpop.f32.mrb[0].mxu0
        %v2890 = vpop.f32.mrb[0].mxu0
        %v2891 = vadd.f32 %v2737, %v2890
        %v2892 = vpop.f32.mrb[0].mxu0
        %2893 = vmatprep.mubr.bf16.mxu0 %v2646
        %2894 = vmatmul.mubr.bf16.gmra.mrb[0].mxu0 %v2532
        %v2895 = vpop.f32.mrb[0].mxu0
        %v2896 = vadd.f32 %v2742, %v2895
        %v2897 = vpop.f32.mrb[0].mxu0
        %v2898 = vpop.f32.mrb[0].mxu0
        %v2899 = vadd.f32 %v2745, %v2898
        %v2900 = vpop.f32.mrb[0].mxu0
        %2901 = vdwg.mxu0
        %v2902 = vld [vmem:[#allocation3 + $0x20] sm:$0xff]
        %v2903 = vld [vmem:[#allocation3 + $0x28] sm:$0xff]
        %v2904 = vld [vmem:[#allocation3 + $0x30] sm:$0xff]
        %v2905 = vld [vmem:[#allocation3 + $0x38] sm:$0xff]
        %v2906 = vld [vmem:[#allocation3 + $0x40] sm:$0xff]
        %v2907 = vld [vmem:[#allocation3 + $0x48] sm:$0xff]
        %v2908 = vld [vmem:[#allocation3 + $0x50] sm:$0xff]
        %v2909 = vld [vmem:[#allocation3 + $0x58] sm:$0xff]
        %v2910 = vld [vmem:[#allocation3 + $0x60] sm:$0xff]
        %v2911 = vld [vmem:[#allocation3 + $0x68] sm:$0xff]
        %v2912 = vld [vmem:[#allocation3 + $0x70] sm:$0xff]
        %v2913 = vld [vmem:[#allocation3 + $0x78] sm:$0xff]
        %v2914 = vld [vmem:[#allocation3 + $0x80] sm:$0xff]
        %v2915 = vld [vmem:[#allocation3 + $0x88] sm:$0xff]
        %v2916 = vld [vmem:[#allocation3 + $0x90] sm:$0xff]
        %v2917 = vld [vmem:[#allocation3 + $0x98] sm:$0xff]
        %s2918 = scalar_lea.vmem %s5, 144
        %v2919 = vld [vmem:[%s2918] sm:$0xf]
        %v2920 = vld [vmem:[%s2918 + $0x4] sm:$0xf]
        %v2921 = vld [vmem:[%s2918 + $0x8] sm:$0xf]
        %v2922 = vld [vmem:[%s2918 + $0xc] sm:$0xf]
        %v2923 = vld [vmem:[%s2918 + $0x10] sm:$0xf]
        %v2924 = vld [vmem:[%s2918 + $0x14] sm:$0xf]
        %v2925 = vld [vmem:[%s2918 + $0x18] sm:$0xf]
        %v2926 = vld [vmem:[%s2918 + $0x1c] sm:$0xf]
        %v2927 = vld [vmem:[%s2918 + $0x20] sm:$0xf]
        %v2928 = vld [vmem:[%s2918 + $0x24] sm:$0xf]
        %v2929 = vld [vmem:[%s2918 + $0x28] sm:$0xf]
        %v2930 = vld [vmem:[%s2918 + $0x2c] sm:$0xf]
        %v2931 = vld [vmem:[%s2918 + $0x30] sm:$0xf]
        %v2932 = vld [vmem:[%s2918 + $0x34] sm:$0xf]
        %v2933 = vld [vmem:[%s2918 + $0x38] sm:$0xf]
        %v2934 = vld [vmem:[%s2918 + $0x3c] sm:$0xf]
        %v2935 = vld [vmem:[%s2918 + $0x40] sm:$0xf]
        %v2936 = vld [vmem:[%s2918 + $0x44] sm:$0xf]
        %v2955 = vunpack.c.l.b16 %v2919
        %v2956 = vunpack.c.l.b16 %v2920
        %v2957 = vunpack.c.l.b16 %v2921
        %v2958 = vunpack.c.l.b16 %v2922
        %v2959 = vunpack.c.l.b16 %v2923
        %v2960 = vunpack.c.l.b16 %v2924
        %v2961 = vunpack.c.l.b16 %v2925
        %v2962 = vunpack.c.l.b16 %v2926
        %v2963 = vunpack.c.l.b16 %v2927
        %v2964 = vunpack.c.l.b16 %v2928
        %v2965 = vunpack.c.l.b16 %v2929
        %v2966 = vunpack.c.l.b16 %v2930
        %v2967 = vunpack.c.l.b16 %v2931
        %v2968 = vunpack.c.l.b16 %v2932
        %v2969 = vunpack.c.l.b16 %v2933
        %v2970 = vunpack.c.l.b16 %v2934
        %v2971 = vunpack.c.l.b16 %v2935
        %v2972 = vunpack.c.l.b16 %v2936
        %v2973 = vpack.c.b16 %v2956, %v2955
        %v2974 = vpack.c.b16 %v2958, %v2957
        %v2975 = vpack.c.b16 %v2960, %v2959
        %v2976 = vpack.c.b16 %v2962, %v2961
        %v2977 = vpack.c.b16 %v2964, %v2963
        %v2978 = vpack.c.b16 %v2966, %v2965
        %v2979 = vpack.c.b16 %v2968, %v2967
        %v2980 = vpack.c.b16 %v2970, %v2969
        %v2981 = vpack.c.b16 %v2972, %v2971
        %v2992 = vsel %vm2279, %v2903, 0
        %v2995 = vsel %vm2279, %v2905, 0
        %v2998 = vsel %vm2279, %v2907, 0
        %v3001 = vsel %vm2279, %v2909, 0
        %v3004 = vsel %vm2279, %v2911, 0
        %v3007 = vsel %vm2279, %v2913, 0
        %v3010 = vsel %vm2279, %v2915, 0
        %v3013 = vsel %vm2279, %v2917, 0
        %3015 = vmatprep.subr.bf16.mxu0 0
        %3016 = vmatpush1.bf16.msra.mxu0 %v2973
        %3017 = vmatprep.subr.bf16.mxu0 0
        %3018 = vmatpush1.bf16.msra.mxu0 %v2974
        %3019 = vmatprep.subr.bf16.mxu0 0
        %3020 = vmatpush1.bf16.msra.mxu0 %v2975
        %3021 = vmatprep.subr.bf16.mxu0 0
        %3022 = vmatpush1.bf16.msra.mxu0 %v2976
        %3023 = vmatprep.subr.bf16.mxu0 0
        %3024 = vmatpush1.bf16.msra.mxu0 %v2977
        %3025 = vmatprep.subr.bf16.mxu0 0
        %3026 = vmatpush1.bf16.msra.mxu0 %v2978
        %3027 = vmatprep.subr.bf16.mxu0 0
        %3028 = vmatpush1.bf16.msra.mxu0 %v2979
        %3029 = vmatprep.subr.bf16.mxu0 0
        %3030 = vmatpush1.bf16.msra.mxu0 %v2980
        %3031 = vmatprep.subr.bf16.mxu0 0
        %3032 = vmatpush1.bf16.msra.mxu0 %v2981
        %3033 = vmatprep.subr.bf16.mxu0 0
        %3034 = vmatpush1.bf16.msra.mxu0 0
        %3035 = vmatprep.subr.bf16.mxu0 0
        %3036 = vmatpush1.bf16.msra.mxu0 0
        %3037 = vmatprep.subr.bf16.mxu0 0
        %3038 = vmatpush1.bf16.msra.mxu0 0
        %3039 = vmatprep.subr.bf16.mxu0 0
        %3040 = vmatpush1.bf16.msra.mxu0 0
        %3041 = vmatprep.subr.bf16.mxu0 0
        %3042 = vmatpush1.bf16.msra.mxu0 0
        %3043 = vmatprep.subr.bf16.mxu0 0
        %3044 = vmatpush1.bf16.msra.mxu0 0
        %3045 = vmatprep.subr.bf16.mxu0 0
        %3046 = vmatpush1.bf16.msra.mxu0 0
        %3047 = vmatprep.mubr.bf16.mxu0 %v2992
        %3048 = vmatmul.mubr.bf16.gmra.mrb[0].mxu0 %v2902
        %v3049 = vpop.f32.mrb[0].mxu0
        %v3050 = vadd.f32 0.0, %v3049
        %v3051 = vpop.f32.mrb[0].mxu0
        %v3052 = vpop.f32.mrb[0].mxu0
        %v3053 = vadd.f32 0.0, %v3052
        %v3054 = vpop.f32.mrb[0].mxu0
        %3055 = vmatprep.mubr.bf16.mxu0 %v2995
        %3056 = vmatmul.mubr.bf16.gmra.mrb[0].mxu0 %v2904
        %v3057 = vpop.f32.mrb[0].mxu0
        %v3058 = vadd.f32 0.0, %v3057
        %v3059 = vpop.f32.mrb[0].mxu0
        %v3060 = vpop.f32.mrb[0].mxu0
        %v3061 = vadd.f32 0.0, %v3060
        %v3062 = vpop.f32.mrb[0].mxu0
        %3063 = vmatprep.mubr.bf16.mxu0 %v2998
        %3064 = vmatmul.mubr.bf16.gmra.mrb[0].mxu0 %v2906
        %v3065 = vpop.f32.mrb[0].mxu0
        %v3066 = vadd.f32 0.0, %v3065
        %v3067 = vpop.f32.mrb[0].mxu0
        %v3068 = vpop.f32.mrb[0].mxu0
        %v3069 = vadd.f32 0.0, %v3068
        %v3070 = vpop.f32.mrb[0].mxu0
        %3071 = vmatprep.mubr.bf16.mxu0 %v3001
        %3072 = vmatmul.mubr.bf16.gmra.mrb[0].mxu0 %v2908
        %v3073 = vpop.f32.mrb[0].mxu0
        %v3074 = vadd.f32 0.0, %v3073
        %v3075 = vpop.f32.mrb[0].mxu0
        %v3076 = vpop.f32.mrb[0].mxu0
        %v3077 = vadd.f32 0.0, %v3076
        %v3078 = vpop.f32.mrb[0].mxu0
        %3079 = vmatprep.mubr.bf16.mxu0 %v3004
        %3080 = vmatmul.mubr.bf16.gmra.mrb[0].mxu0 %v2910
        %v3081 = vpop.f32.mrb[0].mxu0
        %v3082 = vadd.f32 0.0, %v3081
        %v3083 = vpop.f32.mrb[0].mxu0
        %v3084 = vpop.f32.mrb[0].mxu0
        %v3085 = vadd.f32 0.0, %v3084
        %v3086 = vpop.f32.mrb[0].mxu0
        %3087 = vmatprep.mubr.bf16.mxu0 %v3007
        %3088 = vmatmul.mubr.bf16.gmra.mrb[0].mxu0 %v2912
        %v3089 = vpop.f32.mrb[0].mxu0
        %v3090 = vadd.f32 0.0, %v3089
        %v3091 = vpop.f32.mrb[0].mxu0
        %v3092 = vpop.f32.mrb[0].mxu0
        %v3093 = vadd.f32 0.0, %v3092
        %v3094 = vpop.f32.mrb[0].mxu0
        %3095 = vmatprep.mubr.bf16.mxu0 %v3010
        %3096 = vmatmul.mubr.bf16.gmra.mrb[0].mxu0 %v2914
        %v3097 = vpop.f32.mrb[0].mxu0
        %v3098 = vadd.f32 0.0, %v3097
        %v3099 = vpop.f32.mrb[0].mxu0
        %v3100 = vpop.f32.mrb[0].mxu0
        %v3101 = vadd.f32 0.0, %v3100
        %v3102 = vpop.f32.mrb[0].mxu0
        %3103 = vmatprep.mubr.bf16.mxu0 %v3013
        %3104 = vmatmul.mubr.bf16.gmra.mrb[0].mxu0 %v2916
        %v3105 = vpop.f32.mrb[0].mxu0
        %v3106 = vadd.f32 0.0, %v3105
        %v3107 = vpop.f32.mrb[0].mxu0
        %v3108 = vpop.f32.mrb[0].mxu0
        %v3109 = vadd.f32 0.0, %v3108
        %v3110 = vpop.f32.mrb[0].mxu0
        %3111 = vdwg.mxu0
        %v3112 = vadd.f32 %v2840, %v3050
        %v3113 = vadd.f32 %v2843, %v3053
        %v3114 = vadd.f32 %v2848, %v3058
        %v3115 = vadd.f32 %v2851, %v3061
        %v3116 = vadd.f32 %v2856, %v3066
        %v3117 = vadd.f32 %v2859, %v3069
        %v3118 = vadd.f32 %v2864, %v3074
        %v3119 = vadd.f32 %v2867, %v3077
        %v3120 = vadd.f32 %v2872, %v3082
        %v3121 = vadd.f32 %v2875, %v3085
        %v3122 = vadd.f32 %v2880, %v3090
        %v3123 = vadd.f32 %v2883, %v3093
        %v3124 = vadd.f32 %v2888, %v3098
        %v3125 = vadd.f32 %v2891, %v3101
        %v3126 = vadd.f32 %v2896, %v3106
        %v3127 = vadd.f32 %v2899, %v3109
        %v3128 = vld [vmem:[%s6] sm:$0x1]
        %v3130 = vlaneseq
        %v3131 = vshrl.u32 %v3130, 7
        %v3132 = vsub.s32 0, %v3131
        %v3133 = vrot.slane %v3128, %v3132
        %v3135 = vadd.f32 %v3112, %v3133
        %v3136 = vadd.f32 %v3113, %v3133
        %v3137 = vadd.f32 %v3114, %v3133
        %v3138 = vadd.f32 %v3115, %v3133
        %v3139 = vadd.f32 %v3116, %v3133
        %v3140 = vadd.f32 %v3117, %v3133
        %v3141 = vadd.f32 %v3118, %v3133
        %v3142 = vadd.f32 %v3119, %v3133
        %v3143 = vadd.f32 %v3120, %v3133
        %v3144 = vadd.f32 %v3121, %v3133
        %v3145 = vadd.f32 %v3122, %v3133
        %v3146 = vadd.f32 %v3123, %v3133
        %v3147 = vadd.f32 %v3124, %v3133
        %v3148 = vadd.f32 %v3125, %v3133
        %v3149 = vadd.f32 %v3126, %v3133
        %v3150 = vadd.f32 %v3127, %v3133
        %v3151 = vmax.f32 %v3135, 0.0
        %v3152 = vmax.f32 %v3136, 0.0
        %v3153 = vmax.f32 %v3137, 0.0
        %v3154 = vmax.f32 %v3138, 0.0
        %v3155 = vmax.f32 %v3139, 0.0
        %v3156 = vmax.f32 %v3140, 0.0
        %v3157 = vmax.f32 %v3141, 0.0
        %v3158 = vmax.f32 %v3142, 0.0
        %v3159 = vmax.f32 %v3143, 0.0
        %v3160 = vmax.f32 %v3144, 0.0
        %v3161 = vmax.f32 %v3145, 0.0
        %v3162 = vmax.f32 %v3146, 0.0
        %v3163 = vmax.f32 %v3147, 0.0
        %v3164 = vmax.f32 %v3148, 0.0
        %v3165 = vmax.f32 %v3149, 0.0
        %v3166 = vmax.f32 %v3150, 0.0
        %3183 = vrot.lane.b32.xlu0 %v1146, 64
        %v3184 = vpop.permute.xlu0 %3183
        %3185 = vrot.lane.b32.xlu0 %v1147, 64
        %v3186 = vpop.permute.xlu0 %3185
        %3187 = vrot.lane.b32.xlu0 %v1148, 64
        %v3188 = vpop.permute.xlu0 %3187
        %3189 = vrot.lane.b32.xlu0 %v1149, 64
        %v3190 = vpop.permute.xlu0 %3189
        %3191 = vrot.lane.b32.xlu0 %v1150, 64
        %v3192 = vpop.permute.xlu0 %3191
        %3193 = vrot.lane.b32.xlu0 %v1151, 64
        %v3194 = vpop.permute.xlu0 %3193
        %3195 = vrot.lane.b32.xlu0 %v1152, 64
        %v3196 = vpop.permute.xlu0 %3195
        %3197 = vrot.lane.b32.xlu0 %v1153, 64
        %v3198 = vpop.permute.xlu0 %3197
        %3199 = vrot.lane.b32.xlu0 %v1154, 64
        %v3200 = vpop.permute.xlu0 %3199
        %3201 = vrot.lane.b32.xlu0 %v1155, 64
        %v3202 = vpop.permute.xlu0 %3201
        %3203 = vrot.lane.b32.xlu0 %v1156, 64
        %v3204 = vpop.permute.xlu0 %3203
        %3205 = vrot.lane.b32.xlu0 %v1157, 64
        %v3206 = vpop.permute.xlu0 %3205
        %3207 = vrot.lane.b32.xlu0 %v1158, 64
        %v3208 = vpop.permute.xlu0 %3207
        %3209 = vrot.lane.b32.xlu0 %v1159, 64
        %v3210 = vpop.permute.xlu0 %3209
        %3211 = vrot.lane.b32.xlu0 %v1160, 64
        %v3212 = vpop.permute.xlu0 %3211
        %3213 = vrot.lane.b32.xlu0 %v1161, 64
        %v3214 = vpop.permute.xlu0 %3213
        %3247 = vrot.lane.b32.xlu0 %v2254, 32
        %v3248 = vpop.permute.xlu0 %3247
        %3249 = vrot.lane.b32.xlu0 %v2255, 32
        %v3250 = vpop.permute.xlu0 %3249
        %3251 = vrot.lane.b32.xlu0 %v2256, 32
        %v3252 = vpop.permute.xlu0 %3251
        %3253 = vrot.lane.b32.xlu0 %v2257, 32
        %v3254 = vpop.permute.xlu0 %3253
        %3255 = vrot.lane.b32.xlu0 %v2258, 32
        %v3256 = vpop.permute.xlu0 %3255
        %3257 = vrot.lane.b32.xlu0 %v2259, 32
        %v3258 = vpop.permute.xlu0 %3257
        %3259 = vrot.lane.b32.xlu0 %v2260, 32
        %v3260 = vpop.permute.xlu0 %3259
        %3261 = vrot.lane.b32.xlu0 %v2261, 32
        %v3262 = vpop.permute.xlu0 %3261
        %3263 = vrot.lane.b32.xlu0 %v2262, 32
        %v3264 = vpop.permute.xlu0 %3263
        %3265 = vrot.lane.b32.xlu0 %v2263, 32
        %v3266 = vpop.permute.xlu0 %3265
        %3267 = vrot.lane.b32.xlu0 %v2264, 32
        %v3268 = vpop.permute.xlu0 %3267
        %3269 = vrot.lane.b32.xlu0 %v2265, 32
        %v3270 = vpop.permute.xlu0 %3269
        %3271 = vrot.lane.b32.xlu0 %v2266, 32
        %v3272 = vpop.permute.xlu0 %3271
        %3273 = vrot.lane.b32.xlu0 %v2267, 32
        %v3274 = vpop.permute.xlu0 %3273
        %3275 = vrot.lane.b32.xlu0 %v2268, 32
        %v3276 = vpop.permute.xlu0 %3275
        %3277 = vrot.lane.b32.xlu0 %v2269, 32
        %v3278 = vpop.permute.xlu0 %3277
        %3311 = vrot.lane.b32.xlu0 %v3151, 64
        %v3312 = vpop.permute.xlu0 %3311
        %3313 = vrot.lane.b32.xlu0 %v3152, 64
        %v3314 = vpop.permute.xlu0 %3313
        %3315 = vrot.lane.b32.xlu0 %v3153, 64
        %v3316 = vpop.permute.xlu0 %3315
        %3317 = vrot.lane.b32.xlu0 %v3154, 64
        %v3318 = vpop.permute.xlu0 %3317
        %3319 = vrot.lane.b32.xlu0 %v3155, 64
        %v3320 = vpop.permute.xlu0 %3319
        %3321 = vrot.lane.b32.xlu0 %v3156, 64
        %v3322 = vpop.permute.xlu0 %3321
        %3323 = vrot.lane.b32.xlu0 %v3157, 64
        %v3324 = vpop.permute.xlu0 %3323
        %3325 = vrot.lane.b32.xlu0 %v3158, 64
        %v3326 = vpop.permute.xlu0 %3325
        %3327 = vrot.lane.b32.xlu0 %v3159, 64
        %v3328 = vpop.permute.xlu0 %3327
        %3329 = vrot.lane.b32.xlu0 %v3160, 64
        %v3330 = vpop.permute.xlu0 %3329
        %3331 = vrot.lane.b32.xlu0 %v3161, 64
        %v3332 = vpop.permute.xlu0 %3331
        %3333 = vrot.lane.b32.xlu0 %v3162, 64
        %v3334 = vpop.permute.xlu0 %3333
        %3335 = vrot.lane.b32.xlu0 %v3163, 64
        %v3336 = vpop.permute.xlu0 %3335
        %3337 = vrot.lane.b32.xlu0 %v3164, 64
        %v3338 = vpop.permute.xlu0 %3337
        %3339 = vrot.lane.b32.xlu0 %v3165, 64
        %v3340 = vpop.permute.xlu0 %3339
        %3341 = vrot.lane.b32.xlu0 %v3166, 64
        %v3342 = vpop.permute.xlu0 %3341
        %vm3359 = vcmask 261120
        %v3360 = vsel %vm3359, %v3184, %v3248
        %v3361 = vsel %vm3359, %v3186, %v3250
        %v3362 = vsel %vm3359, %v3188, %v3252
        %v3363 = vsel %vm3359, %v3190, %v3254
        %v3364 = vsel %vm3359, %v3192, %v3256
        %v3365 = vsel %vm3359, %v3194, %v3258
        %v3366 = vsel %vm3359, %v3196, %v3260
        %v3367 = vsel %vm3359, %v3198, %v3262
        %v3368 = vsel %vm3359, %v3200, %v3264
        %v3369 = vsel %vm3359, %v3202, %v3266
        %v3370 = vsel %vm3359, %v3204, %v3268
        %v3371 = vsel %vm3359, %v3206, %v3270
        %v3372 = vsel %vm3359, %v3208, %v3272
        %v3373 = vsel %vm3359, %v3210, %v3274
        %v3374 = vsel %vm3359, %v3212, %v3276
        %v3375 = vsel %vm3359, %v3214, %v3278
        %v3376 = vsel %vm927, %v3360, %v3312
        %v3377 = vsel %vm927, %v3361, %v3314
        %v3378 = vsel %vm927, %v3362, %v3316
        %v3379 = vsel %vm927, %v3363, %v3318
        %v3380 = vsel %vm927, %v3364, %v3320
        %v3381 = vsel %vm927, %v3365, %v3322
        %v3382 = vsel %vm927, %v3366, %v3324
        %v3383 = vsel %vm927, %v3367, %v3326
        %v3384 = vsel %vm927, %v3368, %v3328
        %v3385 = vsel %vm927, %v3369, %v3330
        %v3386 = vsel %vm927, %v3370, %v3332
        %v3387 = vsel %vm927, %v3371, %v3334
        %v3388 = vsel %vm927, %v3372, %v3336
        %v3389 = vsel %vm927, %v3373, %v3338
        %v3390 = vsel %vm927, %v3374, %v3340
        %v3391 = vsel %vm927, %v3375, %v3342
        %v3392 = vpack.c.bf16 %v3377, %v3376
        %v3393 = vpack.c.bf16 %v3379, %v3378
        %v3394 = vpack.c.bf16 %v3381, %v3380
        %v3395 = vpack.c.bf16 %v3383, %v3382
        %v3396 = vpack.c.bf16 %v3385, %v3384
        %v3397 = vpack.c.bf16 %v3387, %v3386
        %v3398 = vpack.c.bf16 %v3389, %v3388
        %v3399 = vpack.c.bf16 %v3391, %v3390
        %v3400 = vld [vmem:[%s7] sm:$0xff]
        %v3401 = vld [vmem:[%s7 + $0x8] sm:$0xf]
        %v3402 = vld [vmem:[%s7 + $0xc] sm:$0xff]
        %v3403 = vld [vmem:[%s7 + $0x14] sm:$0xf]
        %v3404 = vld [vmem:[%s7 + $0x18] sm:$0xff]
        %v3405 = vld [vmem:[%s7 + $0x20] sm:$0xf]
        %v3406 = vld [vmem:[%s7 + $0x24] sm:$0xff]
        %v3407 = vld [vmem:[%s7 + $0x2c] sm:$0xf]
        %v3408 = vld [vmem:[%s7 + $0x30] sm:$0xff]
        %v3409 = vld [vmem:[%s7 + $0x38] sm:$0xf]
        %v3410 = vld [vmem:[%s7 + $0x3c] sm:$0xff]
        %v3411 = vld [vmem:[%s7 + $0x44] sm:$0xf]
        %v3412 = vld [vmem:[%s7 + $0x48] sm:$0xff]
        %v3413 = vld [vmem:[%s7 + $0x50] sm:$0xf]
        %v3414 = vld [vmem:[%s7 + $0x54] sm:$0xff]
        %v3415 = vld [vmem:[%s7 + $0x5c] sm:$0xf]
        %v3416 = vld [vmem:[%s7 + $0x60] sm:$0xff]
        %v3417 = vld [vmem:[%s7 + $0x68] sm:$0xf]
        %v3418 = vld [vmem:[%s7 + $0x6c] sm:$0xff]
        %v3419 = vld [vmem:[%s7 + $0x74] sm:$0xf]
        %v3420 = vld [vmem:[%s7 + $0x78] sm:$0xff]
        %v3421 = vld [vmem:[%s7 + $0x80] sm:$0xf]
        %v3422 = vld [vmem:[%s7 + $0x84] sm:$0xff]
        %v3423 = vld [vmem:[%s7 + $0x8c] sm:$0xf]
        %v3424 = vld [vmem:[%s7 + $0x90] sm:$0xff]
        %v3425 = vld [vmem:[%s7 + $0x98] sm:$0xf]
        %v3426 = vld [vmem:[%s7 + $0x9c] sm:$0xff]
        %v3427 = vld [vmem:[%s7 + $0xa4] sm:$0xf]
        %v3428 = vld [vmem:[%s7 + $0xa8] sm:$0xff]
        %v3429 = vld [vmem:[%s7 + $0xb0] sm:$0xf]
        %v3430 = vld [vmem:[%s7 + $0xb4] sm:$0xff]
        %v3431 = vld [vmem:[%s7 + $0xbc] sm:$0xf]
        %v3432 = vld [vmem:[%s8] sm:$0x7]
        %v3434 = vlaneseq
        %v3435 = vshrl.u32 %v3434, 7
        %v3436 = vsub.s32 0, %v3435
        %v3437 = vrot.slane %v3432, %v3436
        %v3438 = vlaneseq
        %v3439 = vshrl.u32 %v3438, 7
        %v3440 = vsub.s32 1, %v3439
        %v3441 = vrot.slane %v3432, %v3440
        %v3442 = vlaneseq
        %v3443 = vshrl.u32 %v3442, 7
        %v3444 = vsub.s32 2, %v3443
        %v3445 = vrot.slane %v3432, %v3444
        %v3481 = vunpack.c.l.b16 %v3400
        %v3482 = vunpack.c.h.b16 %v3400
        %v3483 = vunpack.c.l.b16 %v3401
        %v3484 = vunpack.c.l.b16 %v3402
        %v3485 = vunpack.c.h.b16 %v3402
        %v3486 = vunpack.c.l.b16 %v3403
        %v3487 = vunpack.c.l.b16 %v3404
        %v3488 = vunpack.c.h.b16 %v3404
        %v3489 = vunpack.c.l.b16 %v3405
        %v3490 = vunpack.c.l.b16 %v3406
        %v3491 = vunpack.c.h.b16 %v3406
        %v3492 = vunpack.c.l.b16 %v3407
        %v3493 = vunpack.c.l.b16 %v3408
        %v3494 = vunpack.c.h.b16 %v3408
        %v3495 = vunpack.c.l.b16 %v3409
        %v3496 = vunpack.c.l.b16 %v3410
        %v3497 = vunpack.c.h.b16 %v3410
        %v3498 = vunpack.c.l.b16 %v3411
        %v3499 = vunpack.c.l.b16 %v3412
        %v3500 = vunpack.c.h.b16 %v3412
        %v3501 = vunpack.c.l.b16 %v3413
        %v3502 = vunpack.c.l.b16 %v3414
        %v3503 = vunpack.c.h.b16 %v3414
        %v3504 = vunpack.c.l.b16 %v3415
        %v3505 = vunpack.c.l.b16 %v3416
        %v3506 = vunpack.c.h.b16 %v3416
        %v3507 = vunpack.c.l.b16 %v3417
        %v3508 = vunpack.c.l.b16 %v3418
        %v3509 = vunpack.c.h.b16 %v3418
        %v3510 = vunpack.c.l.b16 %v3419
        %v3511 = vunpack.c.l.b16 %v3420
        %v3512 = vunpack.c.h.b16 %v3420
        %v3513 = vunpack.c.l.b16 %v3421
        %v3514 = vunpack.c.l.b16 %v3422
        %v3515 = vunpack.c.h.b16 %v3422
        %v3516 = vunpack.c.l.b16 %v3423
        %v3517 = vunpack.c.l.b16 %v3424
        %v3518 = vunpack.c.h.b16 %v3424
        %v3519 = vunpack.c.l.b16 %v3425
        %v3520 = vunpack.c.l.b16 %v3426
        %v3521 = vunpack.c.h.b16 %v3426
        %v3522 = vunpack.c.l.b16 %v3427
        %v3523 = vunpack.c.l.b16 %v3428
        %v3524 = vunpack.c.h.b16 %v3428
        %v3525 = vunpack.c.l.b16 %v3429
        %v3526 = vunpack.c.l.b16 %v3430
        %v3527 = vunpack.c.h.b16 %v3430
        %v3528 = vunpack.c.l.b16 %v3431
        %v3529 = vpack.c.b16 %v3484, %v3481
        %v3530 = vpack.c.b16 %v3485, %v3482
        %v3531 = vpack.c.b16 %v3486, %v3483
        %v3532 = vpack.c.b16 %v3490, %v3487
        %v3533 = vpack.c.b16 %v3491, %v3488
        %v3534 = vpack.c.b16 %v3492, %v3489
        %v3535 = vpack.c.b16 %v3496, %v3493
        %v3536 = vpack.c.b16 %v3497, %v3494
        %v3537 = vpack.c.b16 %v3498, %v3495
        %v3538 = vpack.c.b16 %v3502, %v3499
        %v3539 = vpack.c.b16 %v3503, %v3500
        %v3540 = vpack.c.b16 %v3504, %v3501
        %v3541 = vpack.c.b16 %v3508, %v3505
        %v3542 = vpack.c.b16 %v3509, %v3506
        %v3543 = vpack.c.b16 %v3510, %v3507
        %v3544 = vpack.c.b16 %v3514, %v3511
        %v3545 = vpack.c.b16 %v3515, %v3512
        %v3546 = vpack.c.b16 %v3516, %v3513
        %v3547 = vpack.c.b16 %v3520, %v3517
        %v3548 = vpack.c.b16 %v3521, %v3518
        %v3549 = vpack.c.b16 %v3522, %v3519
        %v3550 = vpack.c.b16 %v3526, %v3523
        %v3551 = vpack.c.b16 %v3527, %v3524
        %v3552 = vpack.c.b16 %v3528, %v3525
        %3577 = vmatprep.subr.bf16.mxu0 %v3530
        %3578 = vmatpush1.bf16.msra.mxu0 %v3529
        %3579 = vmatprep.subr.bf16.mxu0 %v3533
        %3580 = vmatpush1.bf16.msra.mxu0 %v3532
        %3581 = vmatprep.subr.bf16.mxu0 %v3536
        %3582 = vmatpush1.bf16.msra.mxu0 %v3535
        %3583 = vmatprep.subr.bf16.mxu0 %v3539
        %3584 = vmatpush1.bf16.msra.mxu0 %v3538
        %3585 = vmatprep.subr.bf16.mxu0 %v3542
        %3586 = vmatpush1.bf16.msra.mxu0 %v3541
        %3587 = vmatprep.subr.bf16.mxu0 %v3545
        %3588 = vmatpush1.bf16.msra.mxu0 %v3544
        %3589 = vmatprep.subr.bf16.mxu0 %v3548
        %3590 = vmatpush1.bf16.msra.mxu0 %v3547
        %3591 = vmatprep.subr.bf16.mxu0 %v3551
        %3592 = vmatpush1.bf16.msra.mxu0 %v3550
        %3593 = vmatprep.subr.bf16.mxu0 0
        %3594 = vmatpush1.bf16.msra.mxu0 0
        %3595 = vmatprep.subr.bf16.mxu0 0
        %3596 = vmatpush1.bf16.msra.mxu0 0
        %3597 = vmatprep.subr.bf16.mxu0 0
        %3598 = vmatpush1.bf16.msra.mxu0 0
        %3599 = vmatprep.subr.bf16.mxu0 0
        %3600 = vmatpush1.bf16.msra.mxu0 0
        %3601 = vmatprep.subr.bf16.mxu0 0
        %3602 = vmatpush1.bf16.msra.mxu0 0
        %3603 = vmatprep.subr.bf16.mxu0 0
        %3604 = vmatpush1.bf16.msra.mxu0 0
        %3605 = vmatprep.subr.bf16.mxu0 0
        %3606 = vmatpush1.bf16.msra.mxu0 0
        %3607 = vmatprep.subr.bf16.mxu0 0
        %3608 = vmatpush1.bf16.msra.mxu0 0
        %3609 = vmatprep.mubr.bf16.mxu0 0
        %3610 = vmatmul.mubr.bf16.gmra.mrb[0].mxu0 %v3392
        %v3611 = vpop.f32.mrb[0].mxu0
        %v3612 = vadd.f32 %v3437, %v3611
        %v3613 = vpop.f32.mrb[0].mxu0
        %v3614 = vadd.f32 %v3441, %v3613
        %v3615 = vpop.f32.mrb[0].mxu0
        %v3616 = vadd.f32 %v3437, %v3615
        %v3617 = vpop.f32.mrb[0].mxu0
        %v3618 = vadd.f32 %v3441, %v3617
        %3619 = vmatprep.mubr.bf16.mxu0 0
        %3620 = vmatmul.mubr.bf16.gmra.mrb[0].mxu0 %v3393
        %v3621 = vpop.f32.mrb[0].mxu0
        %v3622 = vadd.f32 %v3437, %v3621
        %v3623 = vpop.f32.mrb[0].mxu0
        %v3624 = vadd.f32 %v3441, %v3623
        %v3625 = vpop.f32.mrb[0].mxu0
        %v3626 = vadd.f32 %v3437, %v3625
        %v3627 = vpop.f32.mrb[0].mxu0
        %v3628 = vadd.f32 %v3441, %v3627
        %3629 = vmatprep.mubr.bf16.mxu0 0
        %3630 = vmatmul.mubr.bf16.gmra.mrb[0].mxu0 %v3394
        %v3631 = vpop.f32.mrb[0].mxu0
        %v3632 = vadd.f32 %v3437, %v3631
        %v3633 = vpop.f32.mrb[0].mxu0
        %v3634 = vadd.f32 %v3441, %v3633
        %v3635 = vpop.f32.mrb[0].mxu0
        %v3636 = vadd.f32 %v3437, %v3635
        %v3637 = vpop.f32.mrb[0].mxu0
        %v3638 = vadd.f32 %v3441, %v3637
        %3639 = vmatprep.mubr.bf16.mxu0 0
        %3640 = vmatmul.mubr.bf16.gmra.mrb[0].mxu0 %v3395
        %v3641 = vpop.f32.mrb[0].mxu0
        %v3642 = vadd.f32 %v3437, %v3641
        %v3643 = vpop.f32.mrb[0].mxu0
        %v3644 = vadd.f32 %v3441, %v3643
        %v3645 = vpop.f32.mrb[0].mxu0
        %v3646 = vadd.f32 %v3437, %v3645
        %v3647 = vpop.f32.mrb[0].mxu0
        %v3648 = vadd.f32 %v3441, %v3647
        %3649 = vmatprep.mubr.bf16.mxu0 0
        %3650 = vmatmul.mubr.bf16.gmra.mrb[0].mxu0 %v3396
        %v3651 = vpop.f32.mrb[0].mxu0
        %v3652 = vadd.f32 %v3437, %v3651
        %v3653 = vpop.f32.mrb[0].mxu0
        %v3654 = vadd.f32 %v3441, %v3653
        %v3655 = vpop.f32.mrb[0].mxu0
        %v3656 = vadd.f32 %v3437, %v3655
        %v3657 = vpop.f32.mrb[0].mxu0
        %v3658 = vadd.f32 %v3441, %v3657
        %3659 = vmatprep.mubr.bf16.mxu0 0
        %3660 = vmatmul.mubr.bf16.gmra.mrb[0].mxu0 %v3397
        %v3661 = vpop.f32.mrb[0].mxu0
        %v3662 = vadd.f32 %v3437, %v3661
        %v3663 = vpop.f32.mrb[0].mxu0
        %v3664 = vadd.f32 %v3441, %v3663
        %v3665 = vpop.f32.mrb[0].mxu0
        %v3666 = vadd.f32 %v3437, %v3665
        %v3667 = vpop.f32.mrb[0].mxu0
        %v3668 = vadd.f32 %v3441, %v3667
        %3669 = vmatprep.mubr.bf16.mxu0 0
        %3670 = vmatmul.mubr.bf16.gmra.mrb[0].mxu0 %v3398
        %v3671 = vpop.f32.mrb[0].mxu0
        %v3672 = vadd.f32 %v3437, %v3671
        %v3673 = vpop.f32.mrb[0].mxu0
        %v3674 = vadd.f32 %v3441, %v3673
        %v3675 = vpop.f32.mrb[0].mxu0
        %v3676 = vadd.f32 %v3437, %v3675
        %v3677 = vpop.f32.mrb[0].mxu0
        %v3678 = vadd.f32 %v3441, %v3677
        %3679 = vmatprep.mubr.bf16.mxu0 0
        %3680 = vmatmul.mubr.bf16.gmra.mrb[0].mxu0 %v3399
        %v3681 = vpop.f32.mrb[0].mxu0
        %v3682 = vadd.f32 %v3437, %v3681
        %v3683 = vpop.f32.mrb[0].mxu0
        %v3684 = vadd.f32 %v3441, %v3683
        %v3685 = vpop.f32.mrb[0].mxu0
        %v3686 = vadd.f32 %v3437, %v3685
        %v3687 = vpop.f32.mrb[0].mxu0
        %v3688 = vadd.f32 %v3441, %v3687
        %3689 = vdwg.mxu0
        %3690 = vmatprep.subr.bf16.mxu0 0
        %3691 = vmatpush1.bf16.msra.mxu0 %v3531
        %3692 = vmatprep.subr.bf16.mxu0 0
        %3693 = vmatpush1.bf16.msra.mxu0 %v3534
        %3694 = vmatprep.subr.bf16.mxu0 0
        %3695 = vmatpush1.bf16.msra.mxu0 %v3537
        %3696 = vmatprep.subr.bf16.mxu0 0
        %3697 = vmatpush1.bf16.msra.mxu0 %v3540
        %3698 = vmatprep.subr.bf16.mxu0 0
        %3699 = vmatpush1.bf16.msra.mxu0 %v3543
        %3700 = vmatprep.subr.bf16.mxu0 0
        %3701 = vmatpush1.bf16.msra.mxu0 %v3546
        %3702 = vmatprep.subr.bf16.mxu0 0
        %3703 = vmatpush1.bf16.msra.mxu0 %v3549
        %3704 = vmatprep.subr.bf16.mxu0 0
        %3705 = vmatpush1.bf16.msra.mxu0 %v3552
        %3706 = vmatprep.subr.bf16.mxu0 0
        %3707 = vmatpush1.bf16.msra.mxu0 0
        %3708 = vmatprep.subr.bf16.mxu0 0
        %3709 = vmatpush1.bf16.msra.mxu0 0
        %3710 = vmatprep.subr.bf16.mxu0 0
        %3711 = vmatpush1.bf16.msra.mxu0 0
        %3712 = vmatprep.subr.bf16.mxu0 0
        %3713 = vmatpush1.bf16.msra.mxu0 0
        %3714 = vmatprep.subr.bf16.mxu0 0
        %3715 = vmatpush1.bf16.msra.mxu0 0
        %3716 = vmatprep.subr.bf16.mxu0 0
        %3717 = vmatpush1.bf16.msra.mxu0 0
        %3718 = vmatprep.subr.bf16.mxu0 0
        %3719 = vmatpush1.bf16.msra.mxu0 0
        %3720 = vmatprep.subr.bf16.mxu0 0
        %3721 = vmatpush1.bf16.msra.mxu0 0
        %3722 = vmatprep.mubr.bf16.mxu0 0
        %3723 = vmatmul.mubr.bf16.gmra.mrb[0].mxu0 %v3392
        %v3724 = vpop.f32.mrb[0].mxu0
        %v3725 = vadd.f32 %v3445, %v3724
        %v3726 = vpop.f32.mrb[0].mxu0
        %v3727 = vpop.f32.mrb[0].mxu0
        %v3728 = vadd.f32 %v3445, %v3727
        %v3729 = vpop.f32.mrb[0].mxu0
        %3730 = vmatprep.mubr.bf16.mxu0 0
        %3731 = vmatmul.mubr.bf16.gmra.mrb[0].mxu0 %v3393
        %v3732 = vpop.f32.mrb[0].mxu0
        %v3733 = vadd.f32 %v3445, %v3732
        %v3734 = vpop.f32.mrb[0].mxu0
        %v3735 = vpop.f32.mrb[0].mxu0
        %v3736 = vadd.f32 %v3445, %v3735
        %v3737 = vpop.f32.mrb[0].mxu0
        %3738 = vmatprep.mubr.bf16.mxu0 0
        %3739 = vmatmul.mubr.bf16.gmra.mrb[0].mxu0 %v3394
        %v3740 = vpop.f32.mrb[0].mxu0
        %v3741 = vadd.f32 %v3445, %v3740
        %v3742 = vpop.f32.mrb[0].mxu0
        %v3743 = vpop.f32.mrb[0].mxu0
        %v3744 = vadd.f32 %v3445, %v3743
        %v3745 = vpop.f32.mrb[0].mxu0
        %3746 = vmatprep.mubr.bf16.mxu0 0
        %3747 = vmatmul.mubr.bf16.gmra.mrb[0].mxu0 %v3395
        %v3748 = vpop.f32.mrb[0].mxu0
        %v3749 = vadd.f32 %v3445, %v3748
        %v3750 = vpop.f32.mrb[0].mxu0
        %v3751 = vpop.f32.mrb[0].mxu0
        %v3752 = vadd.f32 %v3445, %v3751
        %v3753 = vpop.f32.mrb[0].mxu0
        %3754 = vmatprep.mubr.bf16.mxu0 0
        %3755 = vmatmul.mubr.bf16.gmra.mrb[0].mxu0 %v3396
        %v3756 = vpop.f32.mrb[0].mxu0
        %v3757 = vadd.f32 %v3445, %v3756
        %v3758 = vpop.f32.mrb[0].mxu0
        %v3759 = vpop.f32.mrb[0].mxu0
        %v3760 = vadd.f32 %v3445, %v3759
        %v3761 = vpop.f32.mrb[0].mxu0
        %3762 = vmatprep.mubr.bf16.mxu0 0
        %3763 = vmatmul.mubr.bf16.gmra.mrb[0].mxu0 %v3397
        %v3764 = vpop.f32.mrb[0].mxu0
        %v3765 = vadd.f32 %v3445, %v3764
        %v3766 = vpop.f32.mrb[0].mxu0
        %v3767 = vpop.f32.mrb[0].mxu0
        %v3768 = vadd.f32 %v3445, %v3767
        %v3769 = vpop.f32.mrb[0].mxu0
        %3770 = vmatprep.mubr.bf16.mxu0 0
        %3771 = vmatmul.mubr.bf16.gmra.mrb[0].mxu0 %v3398
        %v3772 = vpop.f32.mrb[0].mxu0
        %v3773 = vadd.f32 %v3445, %v3772
        %v3774 = vpop.f32.mrb[0].mxu0
        %v3775 = vpop.f32.mrb[0].mxu0
        %v3776 = vadd.f32 %v3445, %v3775
        %v3777 = vpop.f32.mrb[0].mxu0
        %3778 = vmatprep.mubr.bf16.mxu0 0
        %3779 = vmatmul.mubr.bf16.gmra.mrb[0].mxu0 %v3399
        %v3780 = vpop.f32.mrb[0].mxu0
        %v3781 = vadd.f32 %v3445, %v3780
        %v3782 = vpop.f32.mrb[0].mxu0
        %v3783 = vpop.f32.mrb[0].mxu0
        %v3784 = vadd.f32 %v3445, %v3783
        %v3785 = vpop.f32.mrb[0].mxu0
        %3786 = vdwg.mxu0
        %v3787 = vmul.f32 %v3612, 0.17
        %v3788 = vmul.f32 %v3614, 0.17
        %v3789 = vmul.f32 %v3725, 0.17
        %v3790 = vmul.f32 %v3616, 0.17
        %v3791 = vmul.f32 %v3618, 0.17
        %v3792 = vmul.f32 %v3728, 0.17
        %v3793 = vmul.f32 %v3622, 0.17
        %v3794 = vmul.f32 %v3624, 0.17
        %v3795 = vmul.f32 %v3733, 0.17
        %v3796 = vmul.f32 %v3626, 0.17
        %v3797 = vmul.f32 %v3628, 0.17
        %v3798 = vmul.f32 %v3736, 0.17
        %v3799 = vmul.f32 %v3632, 0.17
        %v3800 = vmul.f32 %v3634, 0.17
        %v3801 = vmul.f32 %v3741, 0.17
        %v3802 = vmul.f32 %v3636, 0.17
        %v3803 = vmul.f32 %v3638, 0.17
        %v3804 = vmul.f32 %v3744, 0.17
        %v3805 = vmul.f32 %v3642, 0.17
        %v3806 = vmul.f32 %v3644, 0.17
        %v3807 = vmul.f32 %v3749, 0.17
        %v3808 = vmul.f32 %v3646, 0.17
        %v3809 = vmul.f32 %v3648, 0.17
        %v3810 = vmul.f32 %v3752, 0.17
        %v3811 = vmul.f32 %v3652, 0.17
        %v3812 = vmul.f32 %v3654, 0.17
        %v3813 = vmul.f32 %v3757, 0.17
        %v3814 = vmul.f32 %v3656, 0.17
        %v3815 = vmul.f32 %v3658, 0.17
        %v3816 = vmul.f32 %v3760, 0.17
        %v3817 = vmul.f32 %v3662, 0.17
        %v3818 = vmul.f32 %v3664, 0.17
        %v3819 = vmul.f32 %v3765, 0.17
        %v3820 = vmul.f32 %v3666, 0.17
        %v3821 = vmul.f32 %v3668, 0.17
        %v3822 = vmul.f32 %v3768, 0.17
        %v3823 = vmul.f32 %v3672, 0.17
        %v3824 = vmul.f32 %v3674, 0.17
        %v3825 = vmul.f32 %v3773, 0.17
        %v3826 = vmul.f32 %v3676, 0.17
        %v3827 = vmul.f32 %v3678, 0.17
        %v3828 = vmul.f32 %v3776, 0.17
        %v3829 = vmul.f32 %v3682, 0.17
        %v3830 = vmul.f32 %v3684, 0.17
        %v3831 = vmul.f32 %v3781, 0.17
        %v3832 = vmul.f32 %v3686, 0.17
        %v3833 = vmul.f32 %v3688, 0.17
        %v3834 = vmul.f32 %v3784, 0.17
        %v3835 = vld [vmem:[%s410] sm:$0xff]
        %v3836 = vld [vmem:[%s410 + $0x8] sm:$0xff]
        %v3837 = vld [vmem:[%s410 + $0x10] sm:$0xff]
        %v3838 = vld [vmem:[%s410 + $0x18] sm:$0xff]
        %v3839 = vld [vmem:[%s410 + $0x20] sm:$0xff]
        %v3840 = vld [vmem:[%s410 + $0x28] sm:$0xff]
        %v3841 = vld [vmem:[%s410 + $0x30] sm:$0xff]
        %v3842 = vld [vmem:[%s410 + $0x38] sm:$0xff]
        %v3843 = vld [vmem:[%s410 + $0x40] sm:$0xff]
        %v3844 = vld [vmem:[%s410 + $0x48] sm:$0xff]
        %v3845 = vld [vmem:[%s410 + $0x50] sm:$0xff]
        %v3846 = vld [vmem:[%s410 + $0x58] sm:$0xff]
        %v3847 = vld [vmem:[%s410 + $0x60] sm:$0xff]
        %v3848 = vld [vmem:[%s410 + $0x68] sm:$0xff]
        %v3849 = vld [vmem:[%s410 + $0x70] sm:$0xff]
        %v3850 = vld [vmem:[%s410 + $0x78] sm:$0xff]
        %v3851 = vld [vmem:[%s410 + $0x80] sm:$0xff]
        %v3852 = vld [vmem:[%s410 + $0x88] sm:$0xff]
        %v3853 = vld [vmem:[%s410 + $0x90] sm:$0xff]
        %v3854 = vld [vmem:[%s410 + $0x98] sm:$0xff]
        %v3855 = vld [vmem:[%s410 + $0xa0] sm:$0xff]
        %v3856 = vld [vmem:[%s410 + $0xa8] sm:$0xff]
        %v3857 = vld [vmem:[%s410 + $0xb0] sm:$0xff]
        %v3858 = vld [vmem:[%s410 + $0xb8] sm:$0xff]
        %v3859 = vld [vmem:[%s410 + $0xc0] sm:$0xff]
        %v3860 = vld [vmem:[%s410 + $0xc8] sm:$0xff]
        %v3861 = vld [vmem:[%s410 + $0xd0] sm:$0xff]
        %v3862 = vld [vmem:[%s410 + $0xd8] sm:$0xff]
        %v3863 = vld [vmem:[%s410 + $0xe0] sm:$0xff]
        %v3864 = vld [vmem:[%s410 + $0xe8] sm:$0xff]
        %v3865 = vld [vmem:[%s410 + $0xf0] sm:$0xff]
        %v3866 = vld [vmem:[%s410 + $0xf8] sm:$0xff]
        %v3867 = vld [vmem:[%s410 + $0x100] sm:$0xff]
        %v3868 = vld [vmem:[%s410 + $0x108] sm:$0xff]
        %v3869 = vld [vmem:[%s410 + $0x110] sm:$0xff]
        %v3870 = vld [vmem:[%s410 + $0x118] sm:$0xff]
        %v3871 = vld [vmem:[%s410 + $0x120] sm:$0xff]
        %v3872 = vld [vmem:[%s410 + $0x128] sm:$0xff]
        %v3873 = vld [vmem:[%s410 + $0x130] sm:$0xff]
        %v3874 = vld [vmem:[%s410 + $0x138] sm:$0xff]
        %v3875 = vld [vmem:[%s410 + $0x140] sm:$0xff]
        %v3876 = vld [vmem:[%s410 + $0x148] sm:$0xff]
        %v3877 = vld [vmem:[%s410 + $0x150] sm:$0xff]
        %v3878 = vld [vmem:[%s410 + $0x158] sm:$0xff]
        %v3879 = vld [vmem:[%s410 + $0x160] sm:$0xff]
        %v3880 = vld [vmem:[%s410 + $0x168] sm:$0xff]
        %v3881 = vld [vmem:[%s410 + $0x170] sm:$0xff]
        %v3882 = vld [vmem:[%s410 + $0x178] sm:$0xff]
        %v3883 = vadd.f32 %v3787, %v3835
        %v3884 = vadd.f32 %v3788, %v3836
        %v3885 = vadd.f32 %v3789, %v3837
        %v3886 = vadd.f32 %v3790, %v3838
        %v3887 = vadd.f32 %v3791, %v3839
        %v3888 = vadd.f32 %v3792, %v3840
        %v3889 = vadd.f32 %v3793, %v3841
        %v3890 = vadd.f32 %v3794, %v3842
        %v3891 = vadd.f32 %v3795, %v3843
        %v3892 = vadd.f32 %v3796, %v3844
        %v3893 = vadd.f32 %v3797, %v3845
        %v3894 = vadd.f32 %v3798, %v3846
        %v3895 = vadd.f32 %v3799, %v3847
        %v3896 = vadd.f32 %v3800, %v3848
        %v3897 = vadd.f32 %v3801, %v3849
        %v3898 = vadd.f32 %v3802, %v3850
        %v3899 = vadd.f32 %v3803, %v3851
        %v3900 = vadd.f32 %v3804, %v3852
        %v3901 = vadd.f32 %v3805, %v3853
        %v3902 = vadd.f32 %v3806, %v3854
        %v3903 = vadd.f32 %v3807, %v3855
        %v3904 = vadd.f32 %v3808, %v3856
        %v3905 = vadd.f32 %v3809, %v3857
        %v3906 = vadd.f32 %v3810, %v3858
        %v3907 = vadd.f32 %v3811, %v3859
        %v3908 = vadd.f32 %v3812, %v3860
        %v3909 = vadd.f32 %v3813, %v3861
        %v3910 = vadd.f32 %v3814, %v3862
        %v3911 = vadd.f32 %v3815, %v3863
        %v3912 = vadd.f32 %v3816, %v3864
        %v3913 = vadd.f32 %v3817, %v3865
        %v3914 = vadd.f32 %v3818, %v3866
        %v3915 = vadd.f32 %v3819, %v3867
        %v3916 = vadd.f32 %v3820, %v3868
        %v3917 = vadd.f32 %v3821, %v3869
        %v3918 = vadd.f32 %v3822, %v3870
        %v3919 = vadd.f32 %v3823, %v3871
        %v3920 = vadd.f32 %v3824, %v3872
        %v3921 = vadd.f32 %v3825, %v3873
        %v3922 = vadd.f32 %v3826, %v3874
        %v3923 = vadd.f32 %v3827, %v3875
        %v3924 = vadd.f32 %v3828, %v3876
        %v3925 = vadd.f32 %v3829, %v3877
        %v3926 = vadd.f32 %v3830, %v3878
        %v3927 = vadd.f32 %v3831, %v3879
        %v3928 = vadd.f32 %v3832, %v3880
        %v3929 = vadd.f32 %v3833, %v3881
        %v3930 = vadd.f32 %v3834, %v3882
        %v3931 = vmax.f32 %v3883, 0.0
        %v3932 = vmax.f32 %v3884, 0.0
        %v3933 = vmax.f32 %v3885, 0.0
        %v3934 = vmax.f32 %v3886, 0.0
        %v3935 = vmax.f32 %v3887, 0.0
        %v3936 = vmax.f32 %v3888, 0.0
        %v3937 = vmax.f32 %v3889, 0.0
        %v3938 = vmax.f32 %v3890, 0.0
        %v3939 = vmax.f32 %v3891, 0.0
        %v3940 = vmax.f32 %v3892, 0.0
        %v3941 = vmax.f32 %v3893, 0.0
        %v3942 = vmax.f32 %v3894, 0.0
        %v3943 = vmax.f32 %v3895, 0.0
        %v3944 = vmax.f32 %v3896, 0.0
        %v3945 = vmax.f32 %v3897, 0.0
        %v3946 = vmax.f32 %v3898, 0.0
        %v3947 = vmax.f32 %v3899, 0.0
        %v3948 = vmax.f32 %v3900, 0.0
        %v3949 = vmax.f32 %v3901, 0.0
        %v3950 = vmax.f32 %v3902, 0.0
        %v3951 = vmax.f32 %v3903, 0.0
        %v3952 = vmax.f32 %v3904, 0.0
        %v3953 = vmax.f32 %v3905, 0.0
        %v3954 = vmax.f32 %v3906, 0.0
        %v3955 = vmax.f32 %v3907, 0.0
        %v3956 = vmax.f32 %v3908, 0.0
        %v3957 = vmax.f32 %v3909, 0.0
        %v3958 = vmax.f32 %v3910, 0.0
        %v3959 = vmax.f32 %v3911, 0.0
        %v3960 = vmax.f32 %v3912, 0.0
        %v3961 = vmax.f32 %v3913, 0.0
        %v3962 = vmax.f32 %v3914, 0.0
        %v3963 = vmax.f32 %v3915, 0.0
        %v3964 = vmax.f32 %v3916, 0.0
        %v3965 = vmax.f32 %v3917, 0.0
        %v3966 = vmax.f32 %v3918, 0.0
        %v3967 = vmax.f32 %v3919, 0.0
        %v3968 = vmax.f32 %v3920, 0.0
        %v3969 = vmax.f32 %v3921, 0.0
        %v3970 = vmax.f32 %v3922, 0.0
        %v3971 = vmax.f32 %v3923, 0.0
        %v3972 = vmax.f32 %v3924, 0.0
        %v3973 = vmax.f32 %v3925, 0.0
        %v3974 = vmax.f32 %v3926, 0.0
        %v3975 = vmax.f32 %v3927, 0.0
        %v3976 = vmax.f32 %v3928, 0.0
        %v3977 = vmax.f32 %v3929, 0.0
        %v3978 = vmax.f32 %v3930, 0.0
        %3979 = vst [vmem:[%s441] sm:$0xff] %v3931
        %3980 = vst [vmem:[%s441 + $0x8] sm:$0xff] %v3932
        %3981 = vst.msk [vmem:[%s441 + $0x10] sm:$0xff] %vm927, %v3933
        %3982 = vst [vmem:[%s441 + $0x18] sm:$0xff] %v3934
        %3983 = vst [vmem:[%s441 + $0x20] sm:$0xff] %v3935
        %3984 = vst.msk [vmem:[%s441 + $0x28] sm:$0xff] %vm927, %v3936
        %3985 = vst [vmem:[%s441 + $0x30] sm:$0xff] %v3937
        %3986 = vst [vmem:[%s441 + $0x38] sm:$0xff] %v3938
        %3987 = vst.msk [vmem:[%s441 + $0x40] sm:$0xff] %vm927, %v3939
        %3988 = vst [vmem:[%s441 + $0x48] sm:$0xff] %v3940
        %3989 = vst [vmem:[%s441 + $0x50] sm:$0xff] %v3941
        %3990 = vst.msk [vmem:[%s441 + $0x58] sm:$0xff] %vm927, %v3942
        %3991 = vst [vmem:[%s441 + $0x60] sm:$0xff] %v3943
        %3992 = vst [vmem:[%s441 + $0x68] sm:$0xff] %v3944
        %3993 = vst.msk [vmem:[%s441 + $0x70] sm:$0xff] %vm927, %v3945
        %3994 = vst [vmem:[%s441 + $0x78] sm:$0xff] %v3946
        %3995 = vst [vmem:[%s441 + $0x80] sm:$0xff] %v3947
        %3996 = vst.msk [vmem:[%s441 + $0x88] sm:$0xff] %vm927, %v3948
        %3997 = vst [vmem:[%s441 + $0x90] sm:$0xff] %v3949
        %3998 = vst [vmem:[%s441 + $0x98] sm:$0xff] %v3950
        %3999 = vst.msk [vmem:[%s441 + $0xa0] sm:$0xff] %vm927, %v3951
        %4000 = vst [vmem:[%s441 + $0xa8] sm:$0xff] %v3952
        %4001 = vst [vmem:[%s441 + $0xb0] sm:$0xff] %v3953
        %4002 = vst.msk [vmem:[%s441 + $0xb8] sm:$0xff] %vm927, %v3954
        %4003 = vst [vmem:[%s441 + $0xc0] sm:$0xff] %v3955
        %4004 = vst [vmem:[%s441 + $0xc8] sm:$0xff] %v3956
        %4005 = vst.msk [vmem:[%s441 + $0xd0] sm:$0xff] %vm927, %v3957
        %4006 = vst [vmem:[%s441 + $0xd8] sm:$0xff] %v3958
        %4007 = vst [vmem:[%s441 + $0xe0] sm:$0xff] %v3959
        %4008 = vst.msk [vmem:[%s441 + $0xe8] sm:$0xff] %vm927, %v3960
        %4009 = vst [vmem:[%s441 + $0xf0] sm:$0xff] %v3961
        %4010 = vst [vmem:[%s441 + $0xf8] sm:$0xff] %v3962
        %4011 = vst.msk [vmem:[%s441 + $0x100] sm:$0xff] %vm927, %v3963
        %4012 = vst [vmem:[%s441 + $0x108] sm:$0xff] %v3964
        %4013 = vst [vmem:[%s441 + $0x110] sm:$0xff] %v3965
        %4014 = vst.msk [vmem:[%s441 + $0x118] sm:$0xff] %vm927, %v3966
        %4015 = vst [vmem:[%s441 + $0x120] sm:$0xff] %v3967
        %4016 = vst [vmem:[%s441 + $0x128] sm:$0xff] %v3968
        %4017 = vst.msk [vmem:[%s441 + $0x130] sm:$0xff] %vm927, %v3969
        %4018 = vst [vmem:[%s441 + $0x138] sm:$0xff] %v3970
        %4019 = vst [vmem:[%s441 + $0x140] sm:$0xff] %v3971
        %4020 = vst.msk [vmem:[%s441 + $0x148] sm:$0xff] %vm927, %v3972
        %4021 = vst [vmem:[%s441 + $0x150] sm:$0xff] %v3973
        %4022 = vst [vmem:[%s441 + $0x158] sm:$0xff] %v3974
        %4023 = vst.msk [vmem:[%s441 + $0x160] sm:$0xff] %vm927, %v3975
        %4024 = vst [vmem:[%s441 + $0x168] sm:$0xff] %v3976
        %4025 = vst [vmem:[%s441 + $0x170] sm:$0xff] %v3977
        %4026 = vst.msk [vmem:[%s441 + $0x178] sm:$0xff] %vm927, %v3978
        %s4027 = sand.u32 %s222, 1
        %s4028 = sand.u32 %s222, 1
        %s4029 = smul.addr %s4028, 384
        %s4030 = scalar_lea.vmem [#allocation5], %s4029
        // Predicated region
        $region80: #{_lambda_.1} parent=74 // pred_check
          %p4031 = pneg %p232
        $region81: #{_lambda_.1} parent=74 // pred_check_branch
          %4033 = sbr.rel (%p4031) target = $region83
        $region82: #{_lambda_.1} parent=74 // pred_region
          %s4034 = smul.u32 2, %s20
          %s4035 = smul.addr %s4034, 3
          %s4036 = smul.addr %s4035, 8
          %s4037 = scalar_lea.vmem %s9, %s4036
          // Predicated region
          $region84: #{_lambda_.1} parent=82 // pred_check
            _
          $region85: #{_lambda_.1} parent=82 // pred_check_branch
            %4039 = sbr.rel (0) target = $region87
          $region86: #{_lambda_.1} parent=82 // pred_region
            // Predicated region
            $region88: #{_lambda_.1} parent=86 // pred_check
              _
            $region89: #{_lambda_.1} parent=86 // pred_check_branch
              %4041 = sbr.rel (0) target = $region91
            $region90: #{_lambda_.1} parent=86 // pred_region
              loop: start=0, step=1, limit=1
              $region92: #{_lambda_.1} parent=90 // loop_pre_header
                _
              $region93: #{_lambda_.1} parent=90 // loop_header
                %s4043 = sphi 0, %s4047
                %p4044 = scmp.ge.s32.totalorder %s4043, 1
                %s4048 = sphi %s4030, %s4030
                %s4049 = sphi %s4037, %s4037
              $region94: #{_lambda_.1} parent=90 // loop_header_branch
                %4046 = sbr.rel (%p4044) target = $region98
              $region95: #{_lambda_.1} parent=90 // loop_body
                %v4050 = vld [vmem:[%s4048] sm:$0xff]
                %4051 = vst [vmem:[%s4049] sm:$0xff] %v4050
                %v4052 = vld [vmem:[%s4048 + $0x8] sm:$0xff]
                %4053 = vst [vmem:[%s4049 + $0x8] sm:$0xff] %v4052
                %v4054 = vld [vmem:[%s4048 + $0x10] sm:$0xff]
                %4055 = vst [vmem:[%s4049 + $0x10] sm:$0xff] %v4054
                %v4056 = vld [vmem:[%s4048 + $0x18] sm:$0xff]
                %4057 = vst [vmem:[%s4049 + $0x18] sm:$0xff] %v4056
                %v4058 = vld [vmem:[%s4048 + $0x20] sm:$0xff]
                %4059 = vst [vmem:[%s4049 + $0x20] sm:$0xff] %v4058
                %v4060 = vld [vmem:[%s4048 + $0x28] sm:$0xff]
                %4061 = vst [vmem:[%s4049 + $0x28] sm:$0xff] %v4060
                %v4062 = vld [vmem:[%s4048 + $0x30] sm:$0xff]
                %4063 = vst [vmem:[%s4049 + $0x60] sm:$0xff] %v4062
                %v4064 = vld [vmem:[%s4048 + $0x38] sm:$0xff]
                %4065 = vst [vmem:[%s4049 + $0x68] sm:$0xff] %v4064
                %v4066 = vld [vmem:[%s4048 + $0x40] sm:$0xff]
                %4067 = vst [vmem:[%s4049 + $0x70] sm:$0xff] %v4066
                %v4068 = vld [vmem:[%s4048 + $0x48] sm:$0xff]
                %4069 = vst [vmem:[%s4049 + $0x78] sm:$0xff] %v4068
                %v4070 = vld [vmem:[%s4048 + $0x50] sm:$0xff]
                %4071 = vst [vmem:[%s4049 + $0x80] sm:$0xff] %v4070
                %v4072 = vld [vmem:[%s4048 + $0x58] sm:$0xff]
                %4073 = vst [vmem:[%s4049 + $0x88] sm:$0xff] %v4072
                %v4074 = vld [vmem:[%s4048 + $0x60] sm:$0xff]
                %4075 = vst [vmem:[%s4049 + $0xc0] sm:$0xff] %v4074
                %v4076 = vld [vmem:[%s4048 + $0x68] sm:$0xff]
                %4077 = vst [vmem:[%s4049 + $0xc8] sm:$0xff] %v4076
                %v4078 = vld [vmem:[%s4048 + $0x70] sm:$0xff]
                %4079 = vst [vmem:[%s4049 + $0xd0] sm:$0xff] %v4078
                %v4080 = vld [vmem:[%s4048 + $0x78] sm:$0xff]
                %4081 = vst [vmem:[%s4049 + $0xd8] sm:$0xff] %v4080
                %v4082 = vld [vmem:[%s4048 + $0x80] sm:$0xff]
                %4083 = vst [vmem:[%s4049 + $0xe0] sm:$0xff] %v4082
                %v4084 = vld [vmem:[%s4048 + $0x88] sm:$0xff]
                %4085 = vst [vmem:[%s4049 + $0xe8] sm:$0xff] %v4084
                %v4086 = vld [vmem:[%s4048 + $0x90] sm:$0xff]
                %4087 = vst [vmem:[%s4049 + $0x120] sm:$0xff] %v4086
                %v4088 = vld [vmem:[%s4048 + $0x98] sm:$0xff]
                %4089 = vst [vmem:[%s4049 + $0x128] sm:$0xff] %v4088
                %v4090 = vld [vmem:[%s4048 + $0xa0] sm:$0xff]
                %4091 = vst [vmem:[%s4049 + $0x130] sm:$0xff] %v4090
                %v4092 = vld [vmem:[%s4048 + $0xa8] sm:$0xff]
                %4093 = vst [vmem:[%s4049 + $0x138] sm:$0xff] %v4092
                %v4094 = vld [vmem:[%s4048 + $0xb0] sm:$0xff]
                %4095 = vst [vmem:[%s4049 + $0x140] sm:$0xff] %v4094
                %v4096 = vld [vmem:[%s4048 + $0xb8] sm:$0xff]
                %4097 = vst [vmem:[%s4049 + $0x148] sm:$0xff] %v4096
                %v4098 = vld [vmem:[%s4048 + $0xc0] sm:$0xff]
                %4099 = vst [vmem:[%s4049 + $0x180] sm:$0xff] %v4098
                %v4100 = vld [vmem:[%s4048 + $0xc8] sm:$0xff]
                %4101 = vst [vmem:[%s4049 + $0x188] sm:$0xff] %v4100
                %v4102 = vld [vmem:[%s4048 + $0xd0] sm:$0xff]
                %4103 = vst [vmem:[%s4049 + $0x190] sm:$0xff] %v4102
                %v4104 = vld [vmem:[%s4048 + $0xd8] sm:$0xff]
                %4105 = vst [vmem:[%s4049 + $0x198] sm:$0xff] %v4104
                %v4106 = vld [vmem:[%s4048 + $0xe0] sm:$0xff]
                %4107 = vst [vmem:[%s4049 + $0x1a0] sm:$0xff] %v4106
                %v4108 = vld [vmem:[%s4048 + $0xe8] sm:$0xff]
                %4109 = vst [vmem:[%s4049 + $0x1a8] sm:$0xff] %v4108
                %v4110 = vld [vmem:[%s4048 + $0xf0] sm:$0xff]
                %4111 = vst [vmem:[%s4049 + $0x1e0] sm:$0xff] %v4110
                %v4112 = vld [vmem:[%s4048 + $0xf8] sm:$0xff]
                %4113 = vst [vmem:[%s4049 + $0x1e8] sm:$0xff] %v4112
                %v4114 = vld [vmem:[%s4048 + $0x100] sm:$0xff]
                %4115 = vst [vmem:[%s4049 + $0x1f0] sm:$0xff] %v4114
                %v4116 = vld [vmem:[%s4048 + $0x108] sm:$0xff]
                %4117 = vst [vmem:[%s4049 + $0x1f8] sm:$0xff] %v4116
                %v4118 = vld [vmem:[%s4048 + $0x110] sm:$0xff]
                %4119 = vst [vmem:[%s4049 + $0x200] sm:$0xff] %v4118
                %v4120 = vld [vmem:[%s4048 + $0x118] sm:$0xff]
                %4121 = vst [vmem:[%s4049 + $0x208] sm:$0xff] %v4120
                %v4122 = vld [vmem:[%s4048 + $0x120] sm:$0xff]
                %4123 = vst [vmem:[%s4049 + $0x240] sm:$0xff] %v4122
                %v4124 = vld [vmem:[%s4048 + $0x128] sm:$0xff]
                %4125 = vst [vmem:[%s4049 + $0x248] sm:$0xff] %v4124
                %v4126 = vld [vmem:[%s4048 + $0x130] sm:$0xff]
                %4127 = vst [vmem:[%s4049 + $0x250] sm:$0xff] %v4126
                %v4128 = vld [vmem:[%s4048 + $0x138] sm:$0xff]
                %4129 = vst [vmem:[%s4049 + $0x258] sm:$0xff] %v4128
                %v4130 = vld [vmem:[%s4048 + $0x140] sm:$0xff]
                %4131 = vst [vmem:[%s4049 + $0x260] sm:$0xff] %v4130
                %v4132 = vld [vmem:[%s4048 + $0x148] sm:$0xff]
                %4133 = vst [vmem:[%s4049 + $0x268] sm:$0xff] %v4132
                %v4134 = vld [vmem:[%s4048 + $0x150] sm:$0xff]
                %4135 = vst [vmem:[%s4049 + $0x2a0] sm:$0xff] %v4134
                %v4136 = vld [vmem:[%s4048 + $0x158] sm:$0xff]
                %4137 = vst [vmem:[%s4049 + $0x2a8] sm:$0xff] %v4136
                %v4138 = vld [vmem:[%s4048 + $0x160] sm:$0xff]
                %4139 = vst [vmem:[%s4049 + $0x2b0] sm:$0xff] %v4138
                %v4140 = vld [vmem:[%s4048 + $0x168] sm:$0xff]
                %4141 = vst [vmem:[%s4049 + $0x2b8] sm:$0xff] %v4140
                %v4142 = vld [vmem:[%s4048 + $0x170] sm:$0xff]
                %4143 = vst [vmem:[%s4049 + $0x2c0] sm:$0xff] %v4142
                %v4144 = vld [vmem:[%s4048 + $0x178] sm:$0xff]
                %4145 = vst [vmem:[%s4049 + $0x2c8] sm:$0xff] %v4144
              $region96: #{_lambda_.1} parent=90 // loop_footer
                %s4047 = sadd.s32 1, %s4043
              $region97: #{_lambda_.1} parent=90 // loop_footer_branch
                %4042 = sbr.rel target = $region93
              $region98: #{_lambda_.1} parent=90 // loop_exit
                _
            $region91: #{_lambda_.1} parent=86 // pred_fallthru
              _
            // Predicated region
            $region99: #{_lambda_.1} parent=86 // pred_check
              _
            $region100: #{_lambda_.1} parent=86 // pred_check_branch
              %4147 = sbr.rel target = $region102
            $region101: #{_lambda_.1} parent=86 // pred_region
              _
            $region102: #{_lambda_.1} parent=86 // pred_fallthru
              _
          $region87: #{_lambda_.1} parent=82 // pred_fallthru
            _
          %4148 = vnop
        $region83: #{_lambda_.1} parent=74 // pred_fallthru
          _
      $region75: #{_lambda_.1} parent=5 // pred_fallthru
        _
      %p4149 = scmp.le.s32.totalorder 2, %s15
      // Predicated region
      $region103: #{_lambda_.1} parent=5 // pred_check
        %p4150 = pneg %p4149
      $region104: #{_lambda_.1} parent=5 // pred_check_branch
        %4152 = sbr.rel (%p4150) target = $region106
      $region105: #{_lambda_.1} parent=5 // pred_region
        %s4153 = ssub.s32 %s15, 2
        // Predicated region
        $region107: #{_lambda_.1} parent=105 // pred_check
          %p4154 = pneg %p238
        $region108: #{_lambda_.1} parent=105 // pred_check_branch
          %4156 = sbr.rel (%p4154) target = $region110
        $region109: #{_lambda_.1} parent=105 // pred_region
          %s4157 = sand.u32 %s223, 1
          %s4158 = sand.u32 %s223, 1
          %s4159 = smul.addr %s4158, 384
          %s4160 = scalar_lea.vmem [#allocation5], %s4159
        $region110: #{_lambda_.1} parent=105 // pred_fallthru
          _
      $region106: #{_lambda_.1} parent=5 // pred_fallthru
        _
    $region6: #{_lambda_.1} parent=1 // loop_footer
      %s19 = sadd.s32 1, %s15
    $region7: #{_lambda_.1} parent=1 // loop_footer_branch
      %14 = sbr.rel target = $region3
    $region8: #{_lambda_.1} parent=1 // loop_exit
      _

</llo_original>
